<compile_context>
chip_gen: v7x
topology: tpu7x:2x2x1
jax: 0.10.0
libtpu: 0.0.40
codegen_flags: <defaults>
</compile_context>

<pallas_src>
import jax
import jax.numpy as jnp
from jax.experimental import pallas as pl
from jax.experimental.pallas import tpu as pltpu


def _round_up(v, m):
    return ((v + m - 1) // m) * m


def discriminator_kernel(x_ref, w1_ref, b1_ref, w2_ref, b2_ref, w3_ref, b3_ref, o_ref):
    # Layer 1: Linear(E, 512) + ReLU  (bf16 MXU inputs, f32 accumulation).
    h1 = jnp.dot(x_ref[...], w1_ref[...], preferred_element_type=jnp.float32)
    # Fused ReLU + bf16 cast: only the bf16 (tb, 512) h1 is materialized for the second matmul.
    h1 = jnp.maximum(h1 + b1_ref[...], 0.0).astype(jnp.bfloat16)

    # Layer 2: Linear(512, 256) + ReLU  (carries ~90% of the FLOPs).
    h2 = jnp.dot(h1, w2_ref[...], preferred_element_type=jnp.float32)
    h2 = jnp.maximum(h2 + b2_ref[...], 0.0)

    # Layer 3: Linear(256, 1) + Sigmoid. N=1 on the MXU would use 1/128 of its columns, so do it
    # as a VPU multiply + cross-lane reduction. Broadcasting the (1,1) bias against the (tb,) sum
    # yields a lane-dense (1, tb) logits row -> the output store is a full unmasked vst instead of
    # tb/8 masked (tb,1) partial stores.
    logit = jnp.sum(h2 * w3_ref[...], axis=-1) + b3_ref[...]          # (1, tb)
    prob = pl.reciprocal(1.0 + jnp.exp(-logit), approx=True)          # EUP exp + EUP reciprocal
    o_ref[...] = prob[None].astype(o_ref.dtype)                       # (1, 1, tb)


def discriminator_forward(x, params, *, tb=None):
    """x: (B, E) float32. params: w1 (E,512), b1 (512,), w2 (512,256), b2 (256,), w3 (256,1), b3 (1,)."""
    B, E = x.shape
    w1, b1 = params["w1"], params["b1"]
    w2, b2 = params["w2"], params["b2"]
    w3, b3 = params["w3"], params["b3"]
    H1, H2 = w1.shape[1], w2.shape[1]

    # --- batch tiling: big tiles amortize the ~0.35us/step pipeline overhead; keep >= 2 steps
    #     once B allows it so the "parallel" axis shards across v7x's two TensorCores. ----------
    if tb is None:
        tb = 256 if B <= 256 else min(2048, _round_up((B + 1) // 2, 256))
    tb = min(_round_up(max(int(tb), 1), 256), 2048)   # multiple of 256 (MXU M-dim, bf16 sublanes)
    Bp = _round_up(B, tb)
    if Bp != B:
        x = jnp.pad(x, ((0, Bp - B), (0, 0)))
    num_tiles = Bp // tb

    # --- dtype plumbing: bf16 MXU inputs, f32 biases / accumulation / output -------------------
    x_bf = x.astype(jnp.bfloat16)
    w1_bf = w1.astype(jnp.bfloat16)
    w2_bf = w2.astype(jnp.bfloat16)
    b1_2d = b1.reshape(1, H1).astype(jnp.float32)
    b2_2d = b2.reshape(1, H2).astype(jnp.float32)
    w3_row = w3.reshape(1, H2).astype(jnp.float32)    # (256,1) -> (1,256) row for lane reduction
    b3_2d = b3.reshape(1, 1).astype(jnp.float32)

    # --- per-generation scoped-VMEM budget: resident weights (x2 buffering), double-buffered
    #     x/out tiles, f32/bf16 intermediates, + slack; keep ~8 MiB headroom below physical. ----
    weight_bytes = (E * H1 + H1 * H2) * 2 + (H1 + 2 * H2 + 1) * 4
    io_bytes = 2 * (tb * E * 2) + 2 * (tb * 4)
    interm_bytes = tb * (H1 * 4 + H1 * 2 + 2 * H2 * 4)
    vmem_needed = 2 * weight_bytes + io_bytes + interm_bytes + (4 << 20)
    try:
        vmem_cap = int(pltpu.get_tpu_info().vmem_capacity_bytes)
    except Exception:  # pragma: no cover - conservative fallback (v7x has the smallest VMEM)
        vmem_cap = 64 << 20
    vmem_limit = int(min(max(vmem_needed, 32 << 20), vmem_cap - (8 << 20)))

    # TODO(synk): single-buffering the resident weight BlockSpecs (pipeline_mode=pl.Buffered(1))
    # would halve their VMEM for very large E; skipped here since it is negligible at these sizes.
    out = pl.pallas_call(
        discriminator_kernel,
        out_shape=jax.ShapeDtypeStruct((num_tiles, 1, tb), jnp.float32),
        grid_spec=pltpu.PrefetchScalarGridSpec(
            num_scalar_prefetch=0,
            grid=(num_tiles,),
            in_specs=[
                pl.BlockSpec((tb, E), lambda i: (i, 0)),      # x tile (bf16)
                pl.BlockSpec((E, H1), lambda i: (0, 0)),      # w1 (resident, bf16)
                pl.BlockSpec((1, H1), lambda i: (0, 0)),      # b1 (f32)
                pl.BlockSpec((H1, H2), lambda i: (0, 0)),     # w2 (resident, bf16)
                pl.BlockSpec((1, H2), lambda i: (0, 0)),      # b2 (f32)
                pl.BlockSpec((1, H2), lambda i: (0, 0)),      # w3 row (f32)
                pl.BlockSpec((1, 1), lambda i: (0, 0)),       # b3 (f32)
            ],
            out_specs=pl.BlockSpec((1, 1, tb), lambda i: (i, 0, 0)),   # lane-dense logits row
        ),
        compiler_params=pltpu.CompilerParams(
            dimension_semantics=("parallel",),
            vmem_limit_bytes=vmem_limit,
        ),
    )(x_bf, w1_bf, b1_2d, w2_bf, b2_2d, w3_row, b3_2d)

    return out.reshape(Bp, 1)[:B]


def init_discriminator_params(key, embedding_dim):
    """Deterministic init mirroring PyTorch nn.Linear default (uniform +/- 1/sqrt(fan_in))."""
    dims = [(embedding_dim, 512), (512, 256), (256, 1)]
    params = {}
    keys = jax.random.split(key, 2 * len(dims))
    for idx, (fan_in, fan_out) in enumerate(dims):
        bound = 1.0 / jnp.sqrt(fan_in)
        w = jax.random.uniform(keys[2 * idx], (fan_in, fan_out),
                               minval=-bound, maxval=bound, dtype=jnp.float32)
        b = jax.random.uniform(keys[2 * idx + 1], (fan_out,),
                               minval=-bound, maxval=bound, dtype=jnp.float32)
        params[f"w{idx + 1}"] = w
        params[f"b{idx + 1}"] = b
    return params


def reference_forward(x, p, *, match_kernel_rounding=True):
    """Pure-JAX reference. With match_kernel_rounding it applies the same bf16 input rounding as
    the kernel (matmuls still accumulate in f32), so comparisons can use tight tolerances."""
    if match_kernel_rounding:
        x = x.astype(jnp.bfloat16).astype(jnp.float32)
        w1 = p["w1"].astype(jnp.bfloat16).astype(jnp.float32)
        w2 = p["w2"].astype(jnp.bfloat16).astype(jnp.float32)
    else:
        w1, w2 = p["w1"], p["w2"]
    h1 = jnp.maximum(x @ w1 + p["b1"], 0.0)
    if match_kernel_rounding:
        h1 = h1.astype(jnp.bfloat16).astype(jnp.float32)
    h2 = jnp.maximum(h1 @ w2 + p["b2"], 0.0)
    logit = h2 @ p["w3"] + p["b3"]
    return 1.0 / (1.0 + jnp.exp(-logit))


if __name__ == "__main__":
    key = jax.random.PRNGKey(0)
    k_x, k_p = jax.random.split(key)

    B = 8               # small batch for the smoke test (padded to one 256-row tile)
    embedding_dim = 32  # small embedding dim consistent with the module's __init__ arg

    x = jax.random.normal(k_x, (B, embedding_dim), dtype=jnp.float32)
    params = init_discriminator_params(k_p, embedding_dim)

    out = discriminator_forward(x, params)
    out = jax.block_until_ready(out)

    ref_bf = jax.block_until_ready(reference_forward(x, params, match_kernel_rounding=True))
    ref_f32 = jax.block_until_ready(reference_forward(x, params, match_kernel_rounding=False))

    assert out.shape == (B, 1)
    assert bool(jnp.all((out >= 0.0) & (out <= 1.0))), "sigmoid output out of range"
    assert jnp.allclose(out, ref_bf, atol=5e-3, rtol=5e-3), "mismatch vs bf16-rounded JAX reference"
    assert jnp.allclose(out, ref_f32, atol=3e-2, rtol=3e-2), "mismatch vs full-f32 JAX reference"

    print("KERNEL_OK")
</pallas_src>

<mosaic_0001>
module attributes {stable_mosaic.version = 11 : i64} {
  func.func @discriminator_kernel(%arg0: i32, %arg1: memref<256x32xbf16, #tpu.memory_space<vmem>>, %arg2: memref<32x512xbf16, #tpu.memory_space<vmem>>, %arg3: memref<1x512xf32, #tpu.memory_space<vmem>>, %arg4: memref<512x256xbf16, #tpu.memory_space<vmem>>, %arg5: memref<1x256xf32, #tpu.memory_space<vmem>>, %arg6: memref<1x256xf32, #tpu.memory_space<vmem>>, %arg7: memref<1x1xf32, #tpu.memory_space<vmem>>, %arg8: memref<1x1x256xf32, #tpu.memory_space<vmem>>) attributes {dimension_semantics = [#tpu.dimension_semantics<parallel>], iteration_bounds = array<i64: 1>, scalar_prefetch = 0 : i64, scratch_operands = 0 : i64, tpu.core_type = #tpu.core_type<tc>, window_params = [{transform_indices = @transform_0, window_bounds = array<i64: 256, 32>}, {pipeline_mode = #tpu.pipeline_mode<synchronous>, transform_indices = @transform_1, window_bounds = array<i64: 32, 512>}, {pipeline_mode = #tpu.pipeline_mode<synchronous>, transform_indices = @transform_2, window_bounds = array<i64: 1, 512>}, {pipeline_mode = #tpu.pipeline_mode<synchronous>, transform_indices = @transform_3, window_bounds = array<i64: 512, 256>}, {pipeline_mode = #tpu.pipeline_mode<synchronous>, transform_indices = @transform_4, window_bounds = array<i64: 1, 256>}, {pipeline_mode = #tpu.pipeline_mode<synchronous>, transform_indices = @transform_5, window_bounds = array<i64: 1, 256>}, {pipeline_mode = #tpu.pipeline_mode<synchronous>, transform_indices = @transform_6, window_bounds = array<i64: 1, 1>}, {transform_indices = @transform_7, window_bounds = array<i64: 1, 1, 256>}]} {
    %c0 = arith.constant 0 : index
    %c0_0 = arith.constant 0 : index
    %0 = vector.load %arg1[%c0, %c0_0] : memref<256x32xbf16, #tpu.memory_space<vmem>>, vector<256x32xbf16>
    %c0_1 = arith.constant 0 : index
    %c0_2 = arith.constant 0 : index
    %1 = vector.load %arg2[%c0_1, %c0_2] : memref<32x512xbf16, #tpu.memory_space<vmem>>, vector<32x512xbf16>
    %cst = arith.constant dense<0.000000e+00> : vector<256x512xf32>
    %2 = tpu.matmul %0, %1, %cst {dimension_numbers = #tpu.dot_dimension_numbers<[1], [0], [0], [1], [0, 0, 1, 1], [], []>} : vector<256x32xbf16>, vector<32x512xbf16>, vector<256x512xf32> -> vector<256x512xf32>
    %c0_3 = arith.constant 0 : index
    %c0_4 = arith.constant 0 : index
    %3 = vector.load %arg3[%c0_3, %c0_4] : memref<1x512xf32, #tpu.memory_space<vmem>>, vector<1x512xf32>
    %4 = vector.broadcast %3 : vector<1x512xf32> to vector<256x512xf32>
    %5 = arith.addf %2, %4 : vector<256x512xf32>
    %cst_5 = arith.constant 0.000000e+00 : f32
    %6 = vector.broadcast %cst_5 : f32 to vector<256x512xf32>
    %7 = arith.maximumf %5, %6 : vector<256x512xf32>
    %8 = arith.truncf %7 : vector<256x512xf32> to vector<256x512xbf16>
    %c0_6 = arith.constant 0 : index
    %c0_7 = arith.constant 0 : index
    %9 = vector.load %arg4[%c0_6, %c0_7] : memref<512x256xbf16, #tpu.memory_space<vmem>>, vector<512x256xbf16>
    %cst_8 = arith.constant dense<0.000000e+00> : vector<256x256xf32>
    %10 = tpu.matmul %8, %9, %cst_8 {dimension_numbers = #tpu.dot_dimension_numbers<[1], [0], [0], [1], [0, 0, 1, 1], [], []>} : vector<256x512xbf16>, vector<512x256xbf16>, vector<256x256xf32> -> vector<256x256xf32>
    %c0_9 = arith.constant 0 : index
    %c0_10 = arith.constant 0 : index
    %11 = vector.load %arg5[%c0_9, %c0_10] : memref<1x256xf32, #tpu.memory_space<vmem>>, vector<1x256xf32>
    %12 = vector.broadcast %11 : vector<1x256xf32> to vector<256x256xf32>
    %13 = arith.addf %10, %12 : vector<256x256xf32>
    %cst_11 = arith.constant 0.000000e+00 : f32
    %14 = vector.broadcast %cst_11 : f32 to vector<256x256xf32>
    %15 = arith.maximumf %13, %14 : vector<256x256xf32>
    %c0_12 = arith.constant 0 : index
    %c0_13 = arith.constant 0 : index
    %16 = vector.load %arg6[%c0_12, %c0_13] : memref<1x256xf32, #tpu.memory_space<vmem>>, vector<1x256xf32>
    %17 = vector.broadcast %16 : vector<1x256xf32> to vector<256x256xf32>
    %18 = arith.mulf %15, %17 : vector<256x256xf32>
    %cst_14 = arith.constant dense<0.000000e+00> : vector<256xf32>
    %19 = vector.multi_reduction <add>, %18, %cst_14 [1] : vector<256x256xf32> to vector<256xf32>
    %c0_15 = arith.constant 0 : index
    %c0_16 = arith.constant 0 : index
    %20 = vector.load %arg7[%c0_15, %c0_16] : memref<1x1xf32, #tpu.memory_space<vmem>>, vector<1x1xf32>
    %21 = vector.shape_cast %19 : vector<256xf32> to vector<1x256xf32>
    %22 = vector.broadcast %20 : vector<1x1xf32> to vector<1x256xf32>
    %23 = arith.addf %21, %22 : vector<1x256xf32>
    %cst_17 = arith.constant 0.000000e+00 : f32
    %24 = vector.broadcast %cst_17 : f32 to vector<1x256xf32>
    %25 = arith.subf %24, %23 : vector<1x256xf32>
    %26 = math.exp %25 : vector<1x256xf32>
    %cst_18 = arith.constant 1.000000e+00 : f32
    %27 = vector.broadcast %cst_18 : f32 to vector<1x256xf32>
    %28 = arith.addf %27, %26 : vector<1x256xf32>
    %29 = tpu.reciprocal %28 {approx = true} : vector<1x256xf32> -> vector<1x256xf32>
    %30 = vector.shape_cast %29 : vector<1x256xf32> to vector<1x1x256xf32>
    %c0_19 = arith.constant 0 : index
    %c0_20 = arith.constant 0 : index
    %c0_21 = arith.constant 0 : index
    %31 = vector.load %arg8[%c0_19, %c0_20, %c0_21] : memref<1x1x256xf32, #tpu.memory_space<vmem>>, vector<1x1x256xf32>
    tpu.vector_store %arg8[%c0_19, %c0_20, %c0_21], %30 {strides = array<i32>} : memref<1x1x256xf32, #tpu.memory_space<vmem>>, vector<1x1x256xf32>,
    return
  }
  func.func @transform_0(%arg0: i32) -> (i32, i32) {
    %c0_i32 = arith.constant 0 : i32
    %c0_i32_0 = arith.constant 0 : i32
    return %arg0, %c0_i32 : i32, i32
  }
  func.func @transform_1(%arg0: i32) -> (i32, i32) {
    %c0_i32 = arith.constant 0 : i32
    %c0_i32_0 = arith.constant 0 : i32
    %c0_i32_1 = arith.constant 0 : i32
    return %c0_i32, %c0_i32_0 : i32, i32
  }
  func.func @transform_2(%arg0: i32) -> (i32, i32) {
    %c0_i32 = arith.constant 0 : i32
    %c0_i32_0 = arith.constant 0 : i32
    %c0_i32_1 = arith.constant 0 : i32
    return %c0_i32, %c0_i32_0 : i32, i32
  }
  func.func @transform_3(%arg0: i32) -> (i32, i32) {
    %c0_i32 = arith.constant 0 : i32
    %c0_i32_0 = arith.constant 0 : i32
    %c0_i32_1 = arith.constant 0 : i32
    return %c0_i32, %c0_i32_0 : i32, i32
  }
  func.func @transform_4(%arg0: i32) -> (i32, i32) {
    %c0_i32 = arith.constant 0 : i32
    %c0_i32_0 = arith.constant 0 : i32
    %c0_i32_1 = arith.constant 0 : i32
    return %c0_i32, %c0_i32_0 : i32, i32
  }
  func.func @transform_5(%arg0: i32) -> (i32, i32) {
    %c0_i32 = arith.constant 0 : i32
    %c0_i32_0 = arith.constant 0 : i32
    %c0_i32_1 = arith.constant 0 : i32
    return %c0_i32, %c0_i32_0 : i32, i32
  }
  func.func @transform_6(%arg0: i32) -> (i32, i32) {
    %c0_i32 = arith.constant 0 : i32
    %c0_i32_0 = arith.constant 0 : i32
    %c0_i32_1 = arith.constant 0 : i32
    return %c0_i32, %c0_i32_0 : i32, i32
  }
  func.func @transform_7(%arg0: i32) -> (i32, i32, i32) {
    %c0_i32 = arith.constant 0 : i32
    %c0_i32_0 = arith.constant 0 : i32
    %c0_i32_1 = arith.constant 0 : i32
    return %arg0, %c0_i32, %c0_i32_0 : i32, i32, i32
  }
}

</mosaic_0001>

<llo_original>
// kernel: tpu_custom_call.1
$region0: #{tpu_custom_call.1}
  #allocation0 [shape = 'u32[]', space=smem, size = 0x4, offset = 0x4, fixed_abs, tag = 'smem constant byte address 0x4 - core index']
  #allocation1 [shape = 'u32[144,128]{1,0:T(1,128)}', space=vmem, size = 0x12000, scoped, tag = 'internal scratch']
  #allocation2 [shape = 'f32[1,1]{1,0:T(1,128)S(1)}', space=vmem, size = 0x200, scoped, tag = 'scoped memory for tpu_custom_call.1']
  %s0 = inlined_call_operand.vmem [shape: bf16[256,32], index: 0, kind: input, shape index: {}]
  %s1 = inlined_call_operand.vmem [shape: bf16[32,512], index: 1, kind: input, shape index: {}]
  %s2 = inlined_call_operand.vmem [shape: f32[1,512], index: 2, kind: input, shape index: {}]
  %s3 = inlined_call_operand.hbm [shape: bf16[512,256], index: 3, kind: input, shape index: {}]
  %s4 = inlined_call_operand.vmem [shape: f32[1,256], index: 4, kind: input, shape index: {}]
  %s5 = inlined_call_operand.vmem [shape: f32[1,256], index: 5, kind: input, shape index: {}]
  %s6 = inlined_call_operand.<no memory space> [shape: f32[1,1], index: 6, kind: input, shape index: {}]
  %s7 = inlined_call_operand.hbm [shape: f32[1,1,256], index: 7, kind: output, shape index: {}]
  %s8 = sld [smem:[#allocation0]]
  $region42: #{tpu_custom_call.1} parent=0
    _
  %s10 = ssub.s32 1, %s8
  %s11 = scalar_select 0, %s10, %s8
  %v12 = vstv %s6
  %13 = vst [vmem:[#allocation2] sm:$0x1] %v12
  $region1: #{tpu_custom_call.1} parent=0
    #allocation3 [shape = 'u8[262144]{0}', space=vmem, size = 0x40000, scoped, tag = 'input window, operand 3, single buffered']
    #allocation4 [shape = 's32[1]{0}', space=sflag, size = 0x4, scoped, tag = 'scoped memory for tpu_custom_call.1']
    #allocation5 [shape = 's32[1]{0}', space=sflag, size = 0x4, scoped, tag = 'scoped memory for tpu_custom_call.1']
    #allocation6 [shape = 'u8[1024]{0}', space=vmem, size = 0x400, scoped, tag = 'output window, operand 0, single buffered']
    %14 = vsyncpa [#allocation4], 0
    %15 = vsyncpa [#allocation5], 0
    // Predicated region
    $region2: #{tpu_custom_call.1} parent=1 // pred_check
      _
    $region3: #{tpu_custom_call.1} parent=1 // pred_check_branch
      %17 = sbr.rel (0) target = $region5
    $region4: #{tpu_custom_call.1} parent=1 // pred_region
      _
    $region5: #{tpu_custom_call.1} parent=1 // pred_fallthru
      _
    // Predicated region
    $region6: #{tpu_custom_call.1} parent=1 // pred_check
      _
    $region7: #{tpu_custom_call.1} parent=1 // pred_check_branch
      %19 = sbr.rel (0) target = $region9
    $region8: #{tpu_custom_call.1} parent=1 // pred_region
      _
    $region9: #{tpu_custom_call.1} parent=1 // pred_fallthru
      _
    // Predicated region
    $region10: #{tpu_custom_call.1} parent=1 // pred_check
      _
    $region11: #{tpu_custom_call.1} parent=1 // pred_check_branch
      %21 = sbr.rel (0) target = $region13
    $region12: #{tpu_custom_call.1} parent=1 // pred_region
      _
    $region13: #{tpu_custom_call.1} parent=1 // pred_fallthru
      _
    // Predicated region
    $region14: #{tpu_custom_call.1} parent=1 // pred_check
      _
    $region15: #{tpu_custom_call.1} parent=1 // pred_check_branch
      %23 = sbr.rel (0) target = $region17
    $region16: #{tpu_custom_call.1} parent=1 // pred_region
      %s25 = ssub.s32 8192, 8192
      %26 = vsyncadd [#allocation4], %s25
      %s27 = sshll.u32 [#allocation3], 4
      %s28 = int_to_ptr.vmem [resolvable:$true] %s27
      %33 = dma.hbm_to_vmem [thread:$0]  %s3, 8192, %s28, [#allocation4], 128, 128, 8
    $region17: #{tpu_custom_call.1} parent=1 // pred_fallthru
      _
    // Predicated region
    $region18: #{tpu_custom_call.1} parent=1 // pred_check
      _
    $region19: #{tpu_custom_call.1} parent=1 // pred_check_branch
      %35 = sbr.rel (0) target = $region21
    $region20: #{tpu_custom_call.1} parent=1 // pred_region
      _
    $region21: #{tpu_custom_call.1} parent=1 // pred_fallthru
      _
    // Predicated region
    $region22: #{tpu_custom_call.1} parent=1 // pred_check
      _
    $region23: #{tpu_custom_call.1} parent=1 // pred_check_branch
      %37 = sbr.rel (0) target = $region25
    $region24: #{tpu_custom_call.1} parent=1 // pred_region
      _
    $region25: #{tpu_custom_call.1} parent=1 // pred_fallthru
      _
    // Predicated region
    $region26: #{tpu_custom_call.1} parent=1 // pred_check
      _
    $region27: #{tpu_custom_call.1} parent=1 // pred_check_branch
      %39 = sbr.rel (0) target = $region29
    $region28: #{tpu_custom_call.1} parent=1 // pred_region
      _
    $region29: #{tpu_custom_call.1} parent=1 // pred_fallthru
      _
    // Predicated region
    $region30: #{tpu_custom_call.1} parent=1 // pred_check
      _
    $region31: #{tpu_custom_call.1} parent=1 // pred_check_branch
      %41 = sbr.rel (0) target = $region33
    $region32: #{tpu_custom_call.1} parent=1 // pred_region
      %42 = dma.done [#allocation4], 8192
    $region33: #{tpu_custom_call.1} parent=1 // pred_fallthru
      _
    %v44 = vld [vmem:[%s0] sm:$0xf]
    %v45 = vld [vmem:[%s0 + $0x4] sm:$0xf]
    %v46 = vld [vmem:[%s0 + $0x8] sm:$0xf]
    %v47 = vld [vmem:[%s0 + $0xc] sm:$0xf]
    %v48 = vld [vmem:[%s0 + $0x10] sm:$0xf]
    %v49 = vld [vmem:[%s0 + $0x14] sm:$0xf]
    %v50 = vld [vmem:[%s0 + $0x18] sm:$0xf]
    %v51 = vld [vmem:[%s0 + $0x1c] sm:$0xf]
    %v52 = vld [vmem:[%s0 + $0x20] sm:$0xf]
    %v53 = vld [vmem:[%s0 + $0x24] sm:$0xf]
    %v54 = vld [vmem:[%s0 + $0x28] sm:$0xf]
    %v55 = vld [vmem:[%s0 + $0x2c] sm:$0xf]
    %v56 = vld [vmem:[%s0 + $0x30] sm:$0xf]
    %v57 = vld [vmem:[%s0 + $0x34] sm:$0xf]
    %v58 = vld [vmem:[%s0 + $0x38] sm:$0xf]
    %v59 = vld [vmem:[%s0 + $0x3c] sm:$0xf]
    %v60 = vld [vmem:[%s0 + $0x40] sm:$0xf]
    %v61 = vld [vmem:[%s0 + $0x44] sm:$0xf]
    %v62 = vld [vmem:[%s0 + $0x48] sm:$0xf]
    %v63 = vld [vmem:[%s0 + $0x4c] sm:$0xf]
    %v64 = vld [vmem:[%s0 + $0x50] sm:$0xf]
    %v65 = vld [vmem:[%s0 + $0x54] sm:$0xf]
    %v66 = vld [vmem:[%s0 + $0x58] sm:$0xf]
    %v67 = vld [vmem:[%s0 + $0x5c] sm:$0xf]
    %v68 = vld [vmem:[%s0 + $0x60] sm:$0xf]
    %v69 = vld [vmem:[%s0 + $0x64] sm:$0xf]
    %v70 = vld [vmem:[%s0 + $0x68] sm:$0xf]
    %v71 = vld [vmem:[%s0 + $0x6c] sm:$0xf]
    %v72 = vld [vmem:[%s0 + $0x70] sm:$0xf]
    %v73 = vld [vmem:[%s0 + $0x74] sm:$0xf]
    %v74 = vld [vmem:[%s0 + $0x78] sm:$0xf]
    %v75 = vld [vmem:[%s0 + $0x7c] sm:$0xf]
    %v76 = vld [vmem:[%s1] sm:$0xff]
    %v77 = vld [vmem:[%s1 + $0x8] sm:$0xff]
    %v78 = vld [vmem:[%s1 + $0x10] sm:$0xff]
    %v79 = vld [vmem:[%s1 + $0x18] sm:$0xff]
    %v80 = vld [vmem:[%s1 + $0x20] sm:$0xff]
    %v81 = vld [vmem:[%s1 + $0x28] sm:$0xff]
    %v82 = vld [vmem:[%s1 + $0x30] sm:$0xff]
    %v83 = vld [vmem:[%s1 + $0x38] sm:$0xff]
    %v84 = vld [vmem:[%s2] sm:$0xf]
    %v86 = vlaneseq
    %v87 = vshrl.u32 %v86, 7
    %v88 = vsub.s32 0, %v87
    %v89 = vrot.slane %v84, %v88
    %v90 = vlaneseq
    %v91 = vshrl.u32 %v90, 7
    %v92 = vsub.s32 1, %v91
    %v93 = vrot.slane %v84, %v92
    %v94 = vlaneseq
    %v95 = vshrl.u32 %v94, 7
    %v96 = vsub.s32 2, %v95
    %v97 = vrot.slane %v84, %v96
    %v98 = vlaneseq
    %v99 = vshrl.u32 %v98, 7
    %v100 = vsub.s32 3, %v99
    %v101 = vrot.slane %v84, %v100
    %v138 = vunpack.c.l.b16 %v44
    %v139 = vunpack.c.l.b16 %v45
    %v140 = vunpack.c.l.b16 %v46
    %v141 = vunpack.c.l.b16 %v47
    %v142 = vunpack.c.l.b16 %v48
    %v143 = vunpack.c.l.b16 %v49
    %v144 = vunpack.c.l.b16 %v50
    %v145 = vunpack.c.l.b16 %v51
    %v146 = vunpack.c.l.b16 %v52
    %v147 = vunpack.c.l.b16 %v53
    %v148 = vunpack.c.l.b16 %v54
    %v149 = vunpack.c.l.b16 %v55
    %v150 = vunpack.c.l.b16 %v56
    %v151 = vunpack.c.l.b16 %v57
    %v152 = vunpack.c.l.b16 %v58
    %v153 = vunpack.c.l.b16 %v59
    %v154 = vunpack.c.l.b16 %v60
    %v155 = vunpack.c.l.b16 %v61
    %v156 = vunpack.c.l.b16 %v62
    %v157 = vunpack.c.l.b16 %v63
    %v158 = vunpack.c.l.b16 %v64
    %v159 = vunpack.c.l.b16 %v65
    %v160 = vunpack.c.l.b16 %v66
    %v161 = vunpack.c.l.b16 %v67
    %v162 = vunpack.c.l.b16 %v68
    %v163 = vunpack.c.l.b16 %v69
    %v164 = vunpack.c.l.b16 %v70
    %v165 = vunpack.c.l.b16 %v71
    %v166 = vunpack.c.l.b16 %v72
    %v167 = vunpack.c.l.b16 %v73
    %v168 = vunpack.c.l.b16 %v74
    %v169 = vunpack.c.l.b16 %v75
    %v170 = vpack.c.b16 %v139, %v138
    %v171 = vpack.c.b16 %v141, %v140
    %v172 = vpack.c.b16 %v143, %v142
    %v173 = vpack.c.b16 %v145, %v144
    %v174 = vpack.c.b16 %v147, %v146
    %v175 = vpack.c.b16 %v149, %v148
    %v176 = vpack.c.b16 %v151, %v150
    %v177 = vpack.c.b16 %v153, %v152
    %v178 = vpack.c.b16 %v155, %v154
    %v179 = vpack.c.b16 %v157, %v156
    %v180 = vpack.c.b16 %v159, %v158
    %v181 = vpack.c.b16 %v161, %v160
    %v182 = vpack.c.b16 %v163, %v162
    %v183 = vpack.c.b16 %v165, %v164
    %v184 = vpack.c.b16 %v167, %v166
    %v185 = vpack.c.b16 %v169, %v168
    %v194 = vunpack.c.l.b16 %v76
    %v195 = vunpack.c.h.b16 %v76
    %v196 = vunpack.c.l.b16 %v77
    %v197 = vunpack.c.h.b16 %v77
    %v198 = vunpack.c.l.b16 %v78
    %v199 = vunpack.c.h.b16 %v78
    %v200 = vunpack.c.l.b16 %v79
    %v201 = vunpack.c.h.b16 %v79
    %v202 = vunpack.c.l.b16 %v80
    %v203 = vunpack.c.h.b16 %v80
    %v204 = vunpack.c.l.b16 %v81
    %v205 = vunpack.c.h.b16 %v81
    %v206 = vunpack.c.l.b16 %v82
    %v207 = vunpack.c.h.b16 %v82
    %v208 = vunpack.c.l.b16 %v83
    %v209 = vunpack.c.h.b16 %v83
    %v210 = vpack.c.b16 %v198, %v194
    %v211 = vpack.c.b16 %v199, %v195
    %v212 = vpack.c.b16 %v200, %v196
    %v213 = vpack.c.b16 %v201, %v197
    %v214 = vpack.c.b16 %v206, %v202
    %v215 = vpack.c.b16 %v207, %v203
    %v216 = vpack.c.b16 %v208, %v204
    %v217 = vpack.c.b16 %v209, %v205
    %vm226 = vcmask 261120
    %v228 = vsel %vm226, %v170, 0
    %v231 = vsel %vm226, %v171, 0
    %v234 = vsel %vm226, %v172, 0
    %v237 = vsel %vm226, %v173, 0
    %v240 = vsel %vm226, %v174, 0
    %v243 = vsel %vm226, %v175, 0
    %v246 = vsel %vm226, %v176, 0
    %v249 = vsel %vm226, %v177, 0
    %v252 = vsel %vm226, %v178, 0
    %v255 = vsel %vm226, %v179, 0
    %v258 = vsel %vm226, %v180, 0
    %v261 = vsel %vm226, %v181, 0
    %v264 = vsel %vm226, %v182, 0
    %v267 = vsel %vm226, %v183, 0
    %v270 = vsel %vm226, %v184, 0
    %v273 = vsel %vm226, %v185, 0
    %275 = vmatprep.subr.bf16.mxu0 %v211
    %276 = vmatpush1.bf16.msra.mxu0 %v210
    %277 = vmatprep.subr.bf16.mxu0 %v215
    %278 = vmatpush1.bf16.msra.mxu0 %v214
    %279 = vmatprep.subr.bf16.mxu0 0
    %280 = vmatpush1.bf16.msra.mxu0 0
    %281 = vmatprep.subr.bf16.mxu0 0
    %282 = vmatpush1.bf16.msra.mxu0 0
    %283 = vmatprep.subr.bf16.mxu0 0
    %284 = vmatpush1.bf16.msra.mxu0 0
    %285 = vmatprep.subr.bf16.mxu0 0
    %286 = vmatpush1.bf16.msra.mxu0 0
    %287 = vmatprep.subr.bf16.mxu0 0
    %288 = vmatpush1.bf16.msra.mxu0 0
    %289 = vmatprep.subr.bf16.mxu0 0
    %290 = vmatpush1.bf16.msra.mxu0 0
    %291 = vmatprep.subr.bf16.mxu0 0
    %292 = vmatpush1.bf16.msra.mxu0 0
    %293 = vmatprep.subr.bf16.mxu0 0
    %294 = vmatpush1.bf16.msra.mxu0 0
    %295 = vmatprep.subr.bf16.mxu0 0
    %296 = vmatpush1.bf16.msra.mxu0 0
    %297 = vmatprep.subr.bf16.mxu0 0
    %298 = vmatpush1.bf16.msra.mxu0 0
    %299 = vmatprep.subr.bf16.mxu0 0
    %300 = vmatpush1.bf16.msra.mxu0 0
    %301 = vmatprep.subr.bf16.mxu0 0
    %302 = vmatpush1.bf16.msra.mxu0 0
    %303 = vmatprep.subr.bf16.mxu0 0
    %304 = vmatpush1.bf16.msra.mxu0 0
    %305 = vmatprep.subr.bf16.mxu0 0
    %306 = vmatpush1.bf16.msra.mxu0 0
    %307 = vmatprep.mubr.bf16.mxu0 0
    %308 = vmatmul.mubr.bf16.gmra.mrb[0].mxu0 %v228
    %v309 = vpop.f32.mrb[0].mxu0
    %v310 = vadd.f32 %v89, %v309
    %v311 = vpop.f32.mrb[0].mxu0
    %v312 = vadd.f32 %v93, %v311
    %v313 = vpop.f32.mrb[0].mxu0
    %v314 = vadd.f32 %v89, %v313
    %v315 = vpop.f32.mrb[0].mxu0
    %v316 = vadd.f32 %v93, %v315
    %317 = vmatprep.mubr.bf16.mxu0 0
    %318 = vmatmul.mubr.bf16.gmra.mrb[0].mxu0 %v231
    %v319 = vpop.f32.mrb[0].mxu0
    %v320 = vadd.f32 %v89, %v319
    %v321 = vpop.f32.mrb[0].mxu0
    %v322 = vadd.f32 %v93, %v321
    %v323 = vpop.f32.mrb[0].mxu0
    %v324 = vadd.f32 %v89, %v323
    %v325 = vpop.f32.mrb[0].mxu0
    %v326 = vadd.f32 %v93, %v325
    %327 = vmatprep.mubr.bf16.mxu0 0
    %328 = vmatmul.mubr.bf16.gmra.mrb[0].mxu0 %v234
    %v329 = vpop.f32.mrb[0].mxu0
    %v330 = vadd.f32 %v89, %v329
    %v331 = vpop.f32.mrb[0].mxu0
    %v332 = vadd.f32 %v93, %v331
    %v333 = vpop.f32.mrb[0].mxu0
    %v334 = vadd.f32 %v89, %v333
    %v335 = vpop.f32.mrb[0].mxu0
    %v336 = vadd.f32 %v93, %v335
    %337 = vmatprep.mubr.bf16.mxu0 0
    %338 = vmatmul.mubr.bf16.gmra.mrb[0].mxu0 %v237
    %v339 = vpop.f32.mrb[0].mxu0
    %v340 = vadd.f32 %v89, %v339
    %v341 = vpop.f32.mrb[0].mxu0
    %v342 = vadd.f32 %v93, %v341
    %v343 = vpop.f32.mrb[0].mxu0
    %v344 = vadd.f32 %v89, %v343
    %v345 = vpop.f32.mrb[0].mxu0
    %v346 = vadd.f32 %v93, %v345
    %347 = vmatprep.mubr.bf16.mxu0 0
    %348 = vmatmul.mubr.bf16.gmra.mrb[0].mxu0 %v240
    %v349 = vpop.f32.mrb[0].mxu0
    %v350 = vadd.f32 %v89, %v349
    %v351 = vpop.f32.mrb[0].mxu0
    %v352 = vadd.f32 %v93, %v351
    %v353 = vpop.f32.mrb[0].mxu0
    %v354 = vadd.f32 %v89, %v353
    %v355 = vpop.f32.mrb[0].mxu0
    %v356 = vadd.f32 %v93, %v355
    %357 = vmatprep.mubr.bf16.mxu0 0
    %358 = vmatmul.mubr.bf16.gmra.mrb[0].mxu0 %v243
    %v359 = vpop.f32.mrb[0].mxu0
    %v360 = vadd.f32 %v89, %v359
    %v361 = vpop.f32.mrb[0].mxu0
    %v362 = vadd.f32 %v93, %v361
    %v363 = vpop.f32.mrb[0].mxu0
    %v364 = vadd.f32 %v89, %v363
    %v365 = vpop.f32.mrb[0].mxu0
    %v366 = vadd.f32 %v93, %v365
    %367 = vmatprep.mubr.bf16.mxu0 0
    %368 = vmatmul.mubr.bf16.gmra.mrb[0].mxu0 %v246
    %v369 = vpop.f32.mrb[0].mxu0
    %v370 = vadd.f32 %v89, %v369
    %v371 = vpop.f32.mrb[0].mxu0
    %v372 = vadd.f32 %v93, %v371
    %v373 = vpop.f32.mrb[0].mxu0
    %v374 = vadd.f32 %v89, %v373
    %v375 = vpop.f32.mrb[0].mxu0
    %v376 = vadd.f32 %v93, %v375
    %377 = vmatprep.mubr.bf16.mxu0 0
    %378 = vmatmul.mubr.bf16.gmra.mrb[0].mxu0 %v249
    %v379 = vpop.f32.mrb[0].mxu0
    %v380 = vadd.f32 %v89, %v379
    %v381 = vpop.f32.mrb[0].mxu0
    %v382 = vadd.f32 %v93, %v381
    %v383 = vpop.f32.mrb[0].mxu0
    %v384 = vadd.f32 %v89, %v383
    %v385 = vpop.f32.mrb[0].mxu0
    %v386 = vadd.f32 %v93, %v385
    %387 = vmatprep.mubr.bf16.mxu0 0
    %388 = vmatmul.mubr.bf16.gmra.mrb[0].mxu0 %v252
    %v389 = vpop.f32.mrb[0].mxu0
    %v390 = vadd.f32 %v89, %v389
    %v391 = vpop.f32.mrb[0].mxu0
    %v392 = vadd.f32 %v93, %v391
    %v393 = vpop.f32.mrb[0].mxu0
    %v394 = vadd.f32 %v89, %v393
    %v395 = vpop.f32.mrb[0].mxu0
    %v396 = vadd.f32 %v93, %v395
    %397 = vmatprep.mubr.bf16.mxu0 0
    %398 = vmatmul.mubr.bf16.gmra.mrb[0].mxu0 %v255
    %v399 = vpop.f32.mrb[0].mxu0
    %v400 = vadd.f32 %v89, %v399
    %v401 = vpop.f32.mrb[0].mxu0
    %v402 = vadd.f32 %v93, %v401
    %v403 = vpop.f32.mrb[0].mxu0
    %v404 = vadd.f32 %v89, %v403
    %v405 = vpop.f32.mrb[0].mxu0
    %v406 = vadd.f32 %v93, %v405
    %407 = vmatprep.mubr.bf16.mxu0 0
    %408 = vmatmul.mubr.bf16.gmra.mrb[0].mxu0 %v258
    %v409 = vpop.f32.mrb[0].mxu0
    %v410 = vadd.f32 %v89, %v409
    %v411 = vpop.f32.mrb[0].mxu0
    %v412 = vadd.f32 %v93, %v411
    %v413 = vpop.f32.mrb[0].mxu0
    %v414 = vadd.f32 %v89, %v413
    %v415 = vpop.f32.mrb[0].mxu0
    %v416 = vadd.f32 %v93, %v415
    %417 = vmatprep.mubr.bf16.mxu0 0
    %418 = vmatmul.mubr.bf16.gmra.mrb[0].mxu0 %v261
    %v419 = vpop.f32.mrb[0].mxu0
    %v420 = vadd.f32 %v89, %v419
    %v421 = vpop.f32.mrb[0].mxu0
    %v422 = vadd.f32 %v93, %v421
    %v423 = vpop.f32.mrb[0].mxu0
    %v424 = vadd.f32 %v89, %v423
    %v425 = vpop.f32.mrb[0].mxu0
    %v426 = vadd.f32 %v93, %v425
    %427 = vmatprep.mubr.bf16.mxu0 0
    %428 = vmatmul.mubr.bf16.gmra.mrb[0].mxu0 %v264
    %v429 = vpop.f32.mrb[0].mxu0
    %v430 = vadd.f32 %v89, %v429
    %v431 = vpop.f32.mrb[0].mxu0
    %v432 = vadd.f32 %v93, %v431
    %v433 = vpop.f32.mrb[0].mxu0
    %v434 = vadd.f32 %v89, %v433
    %v435 = vpop.f32.mrb[0].mxu0
    %v436 = vadd.f32 %v93, %v435
    %437 = vmatprep.mubr.bf16.mxu0 0
    %438 = vmatmul.mubr.bf16.gmra.mrb[0].mxu0 %v267
    %v439 = vpop.f32.mrb[0].mxu0
    %v440 = vadd.f32 %v89, %v439
    %v441 = vpop.f32.mrb[0].mxu0
    %v442 = vadd.f32 %v93, %v441
    %v443 = vpop.f32.mrb[0].mxu0
    %v444 = vadd.f32 %v89, %v443
    %v445 = vpop.f32.mrb[0].mxu0
    %v446 = vadd.f32 %v93, %v445
    %447 = vmatprep.mubr.bf16.mxu0 0
    %448 = vmatmul.mubr.bf16.gmra.mrb[0].mxu0 %v270
    %v449 = vpop.f32.mrb[0].mxu0
    %v450 = vadd.f32 %v89, %v449
    %v451 = vpop.f32.mrb[0].mxu0
    %v452 = vadd.f32 %v93, %v451
    %v453 = vpop.f32.mrb[0].mxu0
    %v454 = vadd.f32 %v89, %v453
    %v455 = vpop.f32.mrb[0].mxu0
    %v456 = vadd.f32 %v93, %v455
    %457 = vmatprep.mubr.bf16.mxu0 0
    %458 = vmatmul.mubr.bf16.gmra.mrb[0].mxu0 %v273
    %v459 = vpop.f32.mrb[0].mxu0
    %v460 = vadd.f32 %v89, %v459
    %v461 = vpop.f32.mrb[0].mxu0
    %v462 = vadd.f32 %v93, %v461
    %v463 = vpop.f32.mrb[0].mxu0
    %v464 = vadd.f32 %v89, %v463
    %v465 = vpop.f32.mrb[0].mxu0
    %v466 = vadd.f32 %v93, %v465
    %467 = vdwg.mxu0
    %468 = vmatprep.subr.bf16.mxu0 %v213
    %469 = vmatpush1.bf16.msra.mxu0 %v212
    %470 = vmatprep.subr.bf16.mxu0 %v217
    %471 = vmatpush1.bf16.msra.mxu0 %v216
    %472 = vmatprep.subr.bf16.mxu0 0
    %473 = vmatpush1.bf16.msra.mxu0 0
    %474 = vmatprep.subr.bf16.mxu0 0
    %475 = vmatpush1.bf16.msra.mxu0 0
    %476 = vmatprep.subr.bf16.mxu0 0
    %477 = vmatpush1.bf16.msra.mxu0 0
    %478 = vmatprep.subr.bf16.mxu0 0
    %479 = vmatpush1.bf16.msra.mxu0 0
    %480 = vmatprep.subr.bf16.mxu0 0
    %481 = vmatpush1.bf16.msra.mxu0 0
    %482 = vmatprep.subr.bf16.mxu0 0
    %483 = vmatpush1.bf16.msra.mxu0 0
    %484 = vmatprep.subr.bf16.mxu0 0
    %485 = vmatpush1.bf16.msra.mxu0 0
    %486 = vmatprep.subr.bf16.mxu0 0
    %487 = vmatpush1.bf16.msra.mxu0 0
    %488 = vmatprep.subr.bf16.mxu0 0
    %489 = vmatpush1.bf16.msra.mxu0 0
    %490 = vmatprep.subr.bf16.mxu0 0
    %491 = vmatpush1.bf16.msra.mxu0 0
    %492 = vmatprep.subr.bf16.mxu0 0
    %493 = vmatpush1.bf16.msra.mxu0 0
    %494 = vmatprep.subr.bf16.mxu0 0
    %495 = vmatpush1.bf16.msra.mxu0 0
    %496 = vmatprep.subr.bf16.mxu0 0
    %497 = vmatpush1.bf16.msra.mxu0 0
    %498 = vmatprep.subr.bf16.mxu0 0
    %499 = vmatpush1.bf16.msra.mxu0 0
    %500 = vmatprep.mubr.bf16.mxu0 0
    %501 = vmatmul.mubr.bf16.gmra.mrb[0].mxu0 %v228
    %v502 = vpop.f32.mrb[0].mxu0
    %v503 = vadd.f32 %v97, %v502
    %v504 = vpop.f32.mrb[0].mxu0
    %v505 = vadd.f32 %v101, %v504
    %v506 = vpop.f32.mrb[0].mxu0
    %v507 = vadd.f32 %v97, %v506
    %v508 = vpop.f32.mrb[0].mxu0
    %v509 = vadd.f32 %v101, %v508
    %510 = vmatprep.mubr.bf16.mxu0 0
    %511 = vmatmul.mubr.bf16.gmra.mrb[0].mxu0 %v231
    %v512 = vpop.f32.mrb[0].mxu0
    %v513 = vadd.f32 %v97, %v512
    %v514 = vpop.f32.mrb[0].mxu0
    %v515 = vadd.f32 %v101, %v514
    %v516 = vpop.f32.mrb[0].mxu0
    %v517 = vadd.f32 %v97, %v516
    %v518 = vpop.f32.mrb[0].mxu0
    %v519 = vadd.f32 %v101, %v518
    %520 = vmatprep.mubr.bf16.mxu0 0
    %521 = vmatmul.mubr.bf16.gmra.mrb[0].mxu0 %v234
    %v522 = vpop.f32.mrb[0].mxu0
    %v523 = vadd.f32 %v97, %v522
    %v524 = vpop.f32.mrb[0].mxu0
    %v525 = vadd.f32 %v101, %v524
    %v526 = vpop.f32.mrb[0].mxu0
    %v527 = vadd.f32 %v97, %v526
    %v528 = vpop.f32.mrb[0].mxu0
    %v529 = vadd.f32 %v101, %v528
    %530 = vmatprep.mubr.bf16.mxu0 0
    %531 = vmatmul.mubr.bf16.gmra.mrb[0].mxu0 %v237
    %v532 = vpop.f32.mrb[0].mxu0
    %v533 = vadd.f32 %v97, %v532
    %v534 = vpop.f32.mrb[0].mxu0
    %v535 = vadd.f32 %v101, %v534
    %v536 = vpop.f32.mrb[0].mxu0
    %v537 = vadd.f32 %v97, %v536
    %v538 = vpop.f32.mrb[0].mxu0
    %v539 = vadd.f32 %v101, %v538
    %540 = vmatprep.mubr.bf16.mxu0 0
    %541 = vmatmul.mubr.bf16.gmra.mrb[0].mxu0 %v240
    %v542 = vpop.f32.mrb[0].mxu0
    %v543 = vadd.f32 %v97, %v542
    %v544 = vpop.f32.mrb[0].mxu0
    %v545 = vadd.f32 %v101, %v544
    %v546 = vpop.f32.mrb[0].mxu0
    %v547 = vadd.f32 %v97, %v546
    %v548 = vpop.f32.mrb[0].mxu0
    %v549 = vadd.f32 %v101, %v548
    %550 = vmatprep.mubr.bf16.mxu0 0
    %551 = vmatmul.mubr.bf16.gmra.mrb[0].mxu0 %v243
    %v552 = vpop.f32.mrb[0].mxu0
    %v553 = vadd.f32 %v97, %v552
    %v554 = vpop.f32.mrb[0].mxu0
    %v555 = vadd.f32 %v101, %v554
    %v556 = vpop.f32.mrb[0].mxu0
    %v557 = vadd.f32 %v97, %v556
    %v558 = vpop.f32.mrb[0].mxu0
    %v559 = vadd.f32 %v101, %v558
    %560 = vmatprep.mubr.bf16.mxu0 0
    %561 = vmatmul.mubr.bf16.gmra.mrb[0].mxu0 %v246
    %v562 = vpop.f32.mrb[0].mxu0
    %v563 = vadd.f32 %v97, %v562
    %v564 = vpop.f32.mrb[0].mxu0
    %v565 = vadd.f32 %v101, %v564
    %v566 = vpop.f32.mrb[0].mxu0
    %v567 = vadd.f32 %v97, %v566
    %v568 = vpop.f32.mrb[0].mxu0
    %v569 = vadd.f32 %v101, %v568
    %570 = vmatprep.mubr.bf16.mxu0 0
    %571 = vmatmul.mubr.bf16.gmra.mrb[0].mxu0 %v249
    %v572 = vpop.f32.mrb[0].mxu0
    %v573 = vadd.f32 %v97, %v572
    %v574 = vpop.f32.mrb[0].mxu0
    %v575 = vadd.f32 %v101, %v574
    %v576 = vpop.f32.mrb[0].mxu0
    %v577 = vadd.f32 %v97, %v576
    %v578 = vpop.f32.mrb[0].mxu0
    %v579 = vadd.f32 %v101, %v578
    %580 = vmatprep.mubr.bf16.mxu0 0
    %581 = vmatmul.mubr.bf16.gmra.mrb[0].mxu0 %v252
    %v582 = vpop.f32.mrb[0].mxu0
    %v583 = vadd.f32 %v97, %v582
    %v584 = vpop.f32.mrb[0].mxu0
    %v585 = vadd.f32 %v101, %v584
    %v586 = vpop.f32.mrb[0].mxu0
    %v587 = vadd.f32 %v97, %v586
    %v588 = vpop.f32.mrb[0].mxu0
    %v589 = vadd.f32 %v101, %v588
    %590 = vmatprep.mubr.bf16.mxu0 0
    %591 = vmatmul.mubr.bf16.gmra.mrb[0].mxu0 %v255
    %v592 = vpop.f32.mrb[0].mxu0
    %v593 = vadd.f32 %v97, %v592
    %v594 = vpop.f32.mrb[0].mxu0
    %v595 = vadd.f32 %v101, %v594
    %v596 = vpop.f32.mrb[0].mxu0
    %v597 = vadd.f32 %v97, %v596
    %v598 = vpop.f32.mrb[0].mxu0
    %v599 = vadd.f32 %v101, %v598
    %600 = vmatprep.mubr.bf16.mxu0 0
    %601 = vmatmul.mubr.bf16.gmra.mrb[0].mxu0 %v258
    %v602 = vpop.f32.mrb[0].mxu0
    %v603 = vadd.f32 %v97, %v602
    %v604 = vpop.f32.mrb[0].mxu0
    %v605 = vadd.f32 %v101, %v604
    %v606 = vpop.f32.mrb[0].mxu0
    %v607 = vadd.f32 %v97, %v606
    %v608 = vpop.f32.mrb[0].mxu0
    %v609 = vadd.f32 %v101, %v608
    %610 = vmatprep.mubr.bf16.mxu0 0
    %611 = vmatmul.mubr.bf16.gmra.mrb[0].mxu0 %v261
    %v612 = vpop.f32.mrb[0].mxu0
    %v613 = vadd.f32 %v97, %v612
    %v614 = vpop.f32.mrb[0].mxu0
    %v615 = vadd.f32 %v101, %v614
    %v616 = vpop.f32.mrb[0].mxu0
    %v617 = vadd.f32 %v97, %v616
    %v618 = vpop.f32.mrb[0].mxu0
    %v619 = vadd.f32 %v101, %v618
    %620 = vmatprep.mubr.bf16.mxu0 0
    %621 = vmatmul.mubr.bf16.gmra.mrb[0].mxu0 %v264
    %v622 = vpop.f32.mrb[0].mxu0
    %v623 = vadd.f32 %v97, %v622
    %v624 = vpop.f32.mrb[0].mxu0
    %v625 = vadd.f32 %v101, %v624
    %v626 = vpop.f32.mrb[0].mxu0
    %v627 = vadd.f32 %v97, %v626
    %v628 = vpop.f32.mrb[0].mxu0
    %v629 = vadd.f32 %v101, %v628
    %630 = vmatprep.mubr.bf16.mxu0 0
    %631 = vmatmul.mubr.bf16.gmra.mrb[0].mxu0 %v267
    %v632 = vpop.f32.mrb[0].mxu0
    %v633 = vadd.f32 %v97, %v632
    %v634 = vpop.f32.mrb[0].mxu0
    %v635 = vadd.f32 %v101, %v634
    %v636 = vpop.f32.mrb[0].mxu0
    %v637 = vadd.f32 %v97, %v636
    %v638 = vpop.f32.mrb[0].mxu0
    %v639 = vadd.f32 %v101, %v638
    %640 = vmatprep.mubr.bf16.mxu0 0
    %641 = vmatmul.mubr.bf16.gmra.mrb[0].mxu0 %v270
    %v642 = vpop.f32.mrb[0].mxu0
    %v643 = vadd.f32 %v97, %v642
    %v644 = vpop.f32.mrb[0].mxu0
    %v645 = vadd.f32 %v101, %v644
    %v646 = vpop.f32.mrb[0].mxu0
    %v647 = vadd.f32 %v97, %v646
    %v648 = vpop.f32.mrb[0].mxu0
    %v649 = vadd.f32 %v101, %v648
    %650 = vmatprep.mubr.bf16.mxu0 0
    %651 = vmatmul.mubr.bf16.gmra.mrb[0].mxu0 %v273
    %v652 = vpop.f32.mrb[0].mxu0
    %v653 = vadd.f32 %v97, %v652
    %v654 = vpop.f32.mrb[0].mxu0
    %v655 = vadd.f32 %v101, %v654
    %v656 = vpop.f32.mrb[0].mxu0
    %v657 = vadd.f32 %v97, %v656
    %v658 = vpop.f32.mrb[0].mxu0
    %v659 = vadd.f32 %v101, %v658
    %660 = vdwg.mxu0
    %v661 = vmax.f32 %v310, 0.0
    %v662 = vmax.f32 %v312, 0.0
    %v663 = vmax.f32 %v503, 0.0
    %v664 = vmax.f32 %v505, 0.0
    %v665 = vmax.f32 %v314, 0.0
    %v666 = vmax.f32 %v316, 0.0
    %v667 = vmax.f32 %v507, 0.0
    %v668 = vmax.f32 %v509, 0.0
    %v669 = vmax.f32 %v320, 0.0
    %v670 = vmax.f32 %v322, 0.0
    %v671 = vmax.f32 %v513, 0.0
    %v672 = vmax.f32 %v515, 0.0
    %v673 = vmax.f32 %v324, 0.0
    %v674 = vmax.f32 %v326, 0.0
    %v675 = vmax.f32 %v517, 0.0
    %v676 = vmax.f32 %v519, 0.0
    %v677 = vmax.f32 %v330, 0.0
    %v678 = vmax.f32 %v332, 0.0
    %v679 = vmax.f32 %v523, 0.0
    %v680 = vmax.f32 %v525, 0.0
    %v681 = vmax.f32 %v334, 0.0
    %v682 = vmax.f32 %v336, 0.0
    %v683 = vmax.f32 %v527, 0.0
    %v684 = vmax.f32 %v529, 0.0
    %v685 = vmax.f32 %v340, 0.0
    %v686 = vmax.f32 %v342, 0.0
    %v687 = vmax.f32 %v533, 0.0
    %v688 = vmax.f32 %v535, 0.0
    %v689 = vmax.f32 %v344, 0.0
    %v690 = vmax.f32 %v346, 0.0
    %v691 = vmax.f32 %v537, 0.0
    %v692 = vmax.f32 %v539, 0.0
    %v693 = vmax.f32 %v350, 0.0
    %v694 = vmax.f32 %v352, 0.0
    %v695 = vmax.f32 %v543, 0.0
    %v696 = vmax.f32 %v545, 0.0
    %v697 = vmax.f32 %v354, 0.0
    %v698 = vmax.f32 %v356, 0.0
    %v699 = vmax.f32 %v547, 0.0
    %v700 = vmax.f32 %v549, 0.0
    %v701 = vmax.f32 %v360, 0.0
    %v702 = vmax.f32 %v362, 0.0
    %v703 = vmax.f32 %v553, 0.0
    %v704 = vmax.f32 %v555, 0.0
    %v705 = vmax.f32 %v364, 0.0
    %v706 = vmax.f32 %v366, 0.0
    %v707 = vmax.f32 %v557, 0.0
    %v708 = vmax.f32 %v559, 0.0
    %v709 = vmax.f32 %v370, 0.0
    %v710 = vmax.f32 %v372, 0.0
    %v711 = vmax.f32 %v563, 0.0
    %v712 = vmax.f32 %v565, 0.0
    %v713 = vmax.f32 %v374, 0.0
    %v714 = vmax.f32 %v376, 0.0
    %v715 = vmax.f32 %v567, 0.0
    %v716 = vmax.f32 %v569, 0.0
    %v717 = vmax.f32 %v380, 0.0
    %v718 = vmax.f32 %v382, 0.0
    %v719 = vmax.f32 %v573, 0.0
    %v720 = vmax.f32 %v575, 0.0
    %v721 = vmax.f32 %v384, 0.0
    %v722 = vmax.f32 %v386, 0.0
    %v723 = vmax.f32 %v577, 0.0
    %v724 = vmax.f32 %v579, 0.0
    %v725 = vmax.f32 %v390, 0.0
    %v726 = vmax.f32 %v392, 0.0
    %v727 = vmax.f32 %v583, 0.0
    %v728 = vmax.f32 %v585, 0.0
    %v729 = vmax.f32 %v394, 0.0
    %v730 = vmax.f32 %v396, 0.0
    %v731 = vmax.f32 %v587, 0.0
    %v732 = vmax.f32 %v589, 0.0
    %v733 = vmax.f32 %v400, 0.0
    %v734 = vmax.f32 %v402, 0.0
    %v735 = vmax.f32 %v593, 0.0
    %v736 = vmax.f32 %v595, 0.0
    %v737 = vmax.f32 %v404, 0.0
    %v738 = vmax.f32 %v406, 0.0
    %v739 = vmax.f32 %v597, 0.0
    %v740 = vmax.f32 %v599, 0.0
    %v741 = vmax.f32 %v410, 0.0
    %v742 = vmax.f32 %v412, 0.0
    %v743 = vmax.f32 %v603, 0.0
    %v744 = vmax.f32 %v605, 0.0
    %v745 = vmax.f32 %v414, 0.0
    %v746 = vmax.f32 %v416, 0.0
    %v747 = vmax.f32 %v607, 0.0
    %v748 = vmax.f32 %v609, 0.0
    %v749 = vmax.f32 %v420, 0.0
    %v750 = vmax.f32 %v422, 0.0
    %v751 = vmax.f32 %v613, 0.0
    %v752 = vmax.f32 %v615, 0.0
    %v753 = vmax.f32 %v424, 0.0
    %v754 = vmax.f32 %v426, 0.0
    %v755 = vmax.f32 %v617, 0.0
    %v756 = vmax.f32 %v619, 0.0
    %v757 = vmax.f32 %v430, 0.0
    %v758 = vmax.f32 %v432, 0.0
    %v759 = vmax.f32 %v623, 0.0
    %v760 = vmax.f32 %v625, 0.0
    %v761 = vmax.f32 %v434, 0.0
    %v762 = vmax.f32 %v436, 0.0
    %v763 = vmax.f32 %v627, 0.0
    %v764 = vmax.f32 %v629, 0.0
    %v765 = vmax.f32 %v440, 0.0
    %v766 = vmax.f32 %v442, 0.0
    %v767 = vmax.f32 %v633, 0.0
    %v768 = vmax.f32 %v635, 0.0
    %v769 = vmax.f32 %v444, 0.0
    %v770 = vmax.f32 %v446, 0.0
    %v771 = vmax.f32 %v637, 0.0
    %v772 = vmax.f32 %v639, 0.0
    %v773 = vmax.f32 %v450, 0.0
    %v774 = vmax.f32 %v452, 0.0
    %v775 = vmax.f32 %v643, 0.0
    %v776 = vmax.f32 %v645, 0.0
    %v777 = vmax.f32 %v454, 0.0
    %v778 = vmax.f32 %v456, 0.0
    %v779 = vmax.f32 %v647, 0.0
    %v780 = vmax.f32 %v649, 0.0
    %v781 = vmax.f32 %v460, 0.0
    %v782 = vmax.f32 %v462, 0.0
    %v783 = vmax.f32 %v653, 0.0
    %v784 = vmax.f32 %v655, 0.0
    %v785 = vmax.f32 %v464, 0.0
    %v786 = vmax.f32 %v466, 0.0
    %v787 = vmax.f32 %v657, 0.0
    %v788 = vmax.f32 %v659, 0.0
    %v789 = vpack.c.bf16 %v665, %v661
    %v790 = vpack.c.bf16 %v666, %v662
    %v791 = vpack.c.bf16 %v667, %v663
    %v792 = vpack.c.bf16 %v668, %v664
    %v793 = vpack.c.bf16 %v673, %v669
    %v794 = vpack.c.bf16 %v674, %v670
    %v795 = vpack.c.bf16 %v675, %v671
    %v796 = vpack.c.bf16 %v676, %v672
    %v797 = vpack.c.bf16 %v681, %v677
    %v798 = vpack.c.bf16 %v682, %v678
    %v799 = vpack.c.bf16 %v683, %v679
    %v800 = vpack.c.bf16 %v684, %v680
    %v801 = vpack.c.bf16 %v689, %v685
    %v802 = vpack.c.bf16 %v690, %v686
    %v803 = vpack.c.bf16 %v691, %v687
    %v804 = vpack.c.bf16 %v692, %v688
    %v805 = vpack.c.bf16 %v697, %v693
    %v806 = vpack.c.bf16 %v698, %v694
    %v807 = vpack.c.bf16 %v699, %v695
    %v808 = vpack.c.bf16 %v700, %v696
    %v809 = vpack.c.bf16 %v705, %v701
    %v810 = vpack.c.bf16 %v706, %v702
    %v811 = vpack.c.bf16 %v707, %v703
    %v812 = vpack.c.bf16 %v708, %v704
    %v813 = vpack.c.bf16 %v713, %v709
    %v814 = vpack.c.bf16 %v714, %v710
    %v815 = vpack.c.bf16 %v715, %v711
    %v816 = vpack.c.bf16 %v716, %v712
    %v817 = vpack.c.bf16 %v721, %v717
    %v818 = vpack.c.bf16 %v722, %v718
    %v819 = vpack.c.bf16 %v723, %v719
    %v820 = vpack.c.bf16 %v724, %v720
    %v821 = vpack.c.bf16 %v729, %v725
    %v822 = vpack.c.bf16 %v730, %v726
    %v823 = vpack.c.bf16 %v731, %v727
    %v824 = vpack.c.bf16 %v732, %v728
    %v825 = vpack.c.bf16 %v737, %v733
    %v826 = vpack.c.bf16 %v738, %v734
    %v827 = vpack.c.bf16 %v739, %v735
    %v828 = vpack.c.bf16 %v740, %v736
    %v829 = vpack.c.bf16 %v745, %v741
    %v830 = vpack.c.bf16 %v746, %v742
    %v831 = vpack.c.bf16 %v747, %v743
    %v832 = vpack.c.bf16 %v748, %v744
    %v833 = vpack.c.bf16 %v753, %v749
    %v834 = vpack.c.bf16 %v754, %v750
    %v835 = vpack.c.bf16 %v755, %v751
    %v836 = vpack.c.bf16 %v756, %v752
    %v837 = vpack.c.bf16 %v761, %v757
    %v838 = vpack.c.bf16 %v762, %v758
    %v839 = vpack.c.bf16 %v763, %v759
    %v840 = vpack.c.bf16 %v764, %v760
    %v841 = vpack.c.bf16 %v769, %v765
    %v842 = vpack.c.bf16 %v770, %v766
    %v843 = vpack.c.bf16 %v771, %v767
    %v844 = vpack.c.bf16 %v772, %v768
    %v845 = vpack.c.bf16 %v777, %v773
    %v846 = vpack.c.bf16 %v778, %v774
    %v847 = vpack.c.bf16 %v779, %v775
    %v848 = vpack.c.bf16 %v780, %v776
    %v849 = vpack.c.bf16 %v785, %v781
    %v850 = vpack.c.bf16 %v786, %v782
    %v851 = vpack.c.bf16 %v787, %v783
    %v852 = vpack.c.bf16 %v788, %v784
    %v853 = vld [vmem:[#allocation3] sm:$0xff]
    %v854 = vld [vmem:[#allocation3 + $0x8] sm:$0xff]
    %v855 = vld [vmem:[#allocation3 + $0x10] sm:$0xff]
    %v856 = vld [vmem:[#allocation3 + $0x18] sm:$0xff]
    %v857 = vld [vmem:[#allocation3 + $0x20] sm:$0xff]
    %v858 = vld [vmem:[#allocation3 + $0x28] sm:$0xff]
    %v859 = vld [vmem:[#allocation3 + $0x30] sm:$0xff]
    %v860 = vld [vmem:[#allocation3 + $0x38] sm:$0xff]
    %v861 = vld [vmem:[#allocation3 + $0x40] sm:$0xff]
    %v862 = vld [vmem:[#allocation3 + $0x48] sm:$0xff]
    %v863 = vld [vmem:[#allocation3 + $0x50] sm:$0xff]
    %v864 = vld [vmem:[#allocation3 + $0x58] sm:$0xff]
    %v865 = vld [vmem:[#allocation3 + $0x60] sm:$0xff]
    %v866 = vld [vmem:[#allocation3 + $0x68] sm:$0xff]
    %v867 = vld [vmem:[#allocation3 + $0x70] sm:$0xff]
    %v868 = vld [vmem:[#allocation3 + $0x78] sm:$0xff]
    %v869 = vld [vmem:[#allocation3 + $0x80] sm:$0xff]
    %v870 = vld [vmem:[#allocation3 + $0x88] sm:$0xff]
    %v871 = vld [vmem:[#allocation3 + $0x90] sm:$0xff]
    %v872 = vld [vmem:[#allocation3 + $0x98] sm:$0xff]
    %v873 = vld [vmem:[#allocation3 + $0xa0] sm:$0xff]
    %v874 = vld [vmem:[#allocation3 + $0xa8] sm:$0xff]
    %v875 = vld [vmem:[#allocation3 + $0xb0] sm:$0xff]
    %v876 = vld [vmem:[#allocation3 + $0xb8] sm:$0xff]
    %v877 = vld [vmem:[#allocation3 + $0xc0] sm:$0xff]
    %v878 = vld [vmem:[#allocation3 + $0xc8] sm:$0xff]
    %v879 = vld [vmem:[#allocation3 + $0xd0] sm:$0xff]
    %v880 = vld [vmem:[#allocation3 + $0xd8] sm:$0xff]
    %v881 = vld [vmem:[#allocation3 + $0xe0] sm:$0xff]
    %v882 = vld [vmem:[#allocation3 + $0xe8] sm:$0xff]
    %v883 = vld [vmem:[#allocation3 + $0xf0] sm:$0xff]
    %v884 = vld [vmem:[#allocation3 + $0xf8] sm:$0xff]
    %v885 = vld [vmem:[#allocation3 + $0x100] sm:$0xff]
    %v886 = vld [vmem:[#allocation3 + $0x108] sm:$0xff]
    %v887 = vld [vmem:[#allocation3 + $0x110] sm:$0xff]
    %v888 = vld [vmem:[#allocation3 + $0x118] sm:$0xff]
    %v889 = vld [vmem:[#allocation3 + $0x120] sm:$0xff]
    %v890 = vld [vmem:[#allocation3 + $0x128] sm:$0xff]
    %v891 = vld [vmem:[#allocation3 + $0x130] sm:$0xff]
    %v892 = vld [vmem:[#allocation3 + $0x138] sm:$0xff]
    %v893 = vld [vmem:[#allocation3 + $0x140] sm:$0xff]
    %v894 = vld [vmem:[#allocation3 + $0x148] sm:$0xff]
    %v895 = vld [vmem:[#allocation3 + $0x150] sm:$0xff]
    %v896 = vld [vmem:[#allocation3 + $0x158] sm:$0xff]
    %v897 = vld [vmem:[#allocation3 + $0x160] sm:$0xff]
    %v898 = vld [vmem:[#allocation3 + $0x168] sm:$0xff]
    %v899 = vld [vmem:[#allocation3 + $0x170] sm:$0xff]
    %v900 = vld [vmem:[#allocation3 + $0x178] sm:$0xff]
    %v901 = vld [vmem:[#allocation3 + $0x180] sm:$0xff]
    %v902 = vld [vmem:[#allocation3 + $0x188] sm:$0xff]
    %v903 = vld [vmem:[#allocation3 + $0x190] sm:$0xff]
    %v904 = vld [vmem:[#allocation3 + $0x198] sm:$0xff]
    %v905 = vld [vmem:[#allocation3 + $0x1a0] sm:$0xff]
    %v906 = vld [vmem:[#allocation3 + $0x1a8] sm:$0xff]
    %v907 = vld [vmem:[#allocation3 + $0x1b0] sm:$0xff]
    %v908 = vld [vmem:[#allocation3 + $0x1b8] sm:$0xff]
    %v909 = vld [vmem:[#allocation3 + $0x1c0] sm:$0xff]
    %v910 = vld [vmem:[#allocation3 + $0x1c8] sm:$0xff]
    %v911 = vld [vmem:[#allocation3 + $0x1d0] sm:$0xff]
    %v912 = vld [vmem:[#allocation3 + $0x1d8] sm:$0xff]
    %v913 = vld [vmem:[#allocation3 + $0x1e0] sm:$0xff]
    %v914 = vld [vmem:[#allocation3 + $0x1e8] sm:$0xff]
    %v915 = vld [vmem:[#allocation3 + $0x1f0] sm:$0xff]
    %v916 = vld [vmem:[#allocation3 + $0x1f8] sm:$0xff]
    %v917 = vld [vmem:[%s4] sm:$0x3]
    %v919 = vlaneseq
    %v920 = vshrl.u32 %v919, 7
    %v921 = vsub.s32 0, %v920
    %v922 = vrot.slane %v917, %v921
    %v923 = vlaneseq
    %v924 = vshrl.u32 %v923, 7
    %v925 = vsub.s32 1, %v924
    %v926 = vrot.slane %v917, %v925
    %v993 = vunpack.c.l.b16 %v853
    %v994 = vunpack.c.h.b16 %v853
    %v995 = vunpack.c.l.b16 %v854
    %v996 = vunpack.c.h.b16 %v854
    %v997 = vunpack.c.l.b16 %v855
    %v998 = vunpack.c.h.b16 %v855
    %v999 = vunpack.c.l.b16 %v856
    %v1000 = vunpack.c.h.b16 %v856
    %v1001 = vunpack.c.l.b16 %v857
    %v1002 = vunpack.c.h.b16 %v857
    %v1003 = vunpack.c.l.b16 %v858
    %v1004 = vunpack.c.h.b16 %v858
    %v1005 = vunpack.c.l.b16 %v859
    %v1006 = vunpack.c.h.b16 %v859
    %v1007 = vunpack.c.l.b16 %v860
    %v1008 = vunpack.c.h.b16 %v860
    %v1009 = vunpack.c.l.b16 %v861
    %v1010 = vunpack.c.h.b16 %v861
    %v1011 = vunpack.c.l.b16 %v862
    %v1012 = vunpack.c.h.b16 %v862
    %v1013 = vunpack.c.l.b16 %v863
    %v1014 = vunpack.c.h.b16 %v863
    %v1015 = vunpack.c.l.b16 %v864
    %v1016 = vunpack.c.h.b16 %v864
    %v1017 = vunpack.c.l.b16 %v865
    %v1018 = vunpack.c.h.b16 %v865
    %v1019 = vunpack.c.l.b16 %v866
    %v1020 = vunpack.c.h.b16 %v866
    %v1021 = vunpack.c.l.b16 %v867
    %v1022 = vunpack.c.h.b16 %v867
    %v1023 = vunpack.c.l.b16 %v868
    %v1024 = vunpack.c.h.b16 %v868
    %v1025 = vunpack.c.l.b16 %v869
    %v1026 = vunpack.c.h.b16 %v869
    %v1027 = vunpack.c.l.b16 %v870
    %v1028 = vunpack.c.h.b16 %v870
    %v1029 = vunpack.c.l.b16 %v871
    %v1030 = vunpack.c.h.b16 %v871
    %v1031 = vunpack.c.l.b16 %v872
    %v1032 = vunpack.c.h.b16 %v872
    %v1033 = vunpack.c.l.b16 %v873
    %v1034 = vunpack.c.h.b16 %v873
    %v1035 = vunpack.c.l.b16 %v874
    %v1036 = vunpack.c.h.b16 %v874
    %v1037 = vunpack.c.l.b16 %v875
    %v1038 = vunpack.c.h.b16 %v875
    %v1039 = vunpack.c.l.b16 %v876
    %v1040 = vunpack.c.h.b16 %v876
    %v1041 = vunpack.c.l.b16 %v877
    %v1042 = vunpack.c.h.b16 %v877
    %v1043 = vunpack.c.l.b16 %v878
    %v1044 = vunpack.c.h.b16 %v878
    %v1045 = vunpack.c.l.b16 %v879
    %v1046 = vunpack.c.h.b16 %v879
    %v1047 = vunpack.c.l.b16 %v880
    %v1048 = vunpack.c.h.b16 %v880
    %v1049 = vunpack.c.l.b16 %v881
    %v1050 = vunpack.c.h.b16 %v881
    %v1051 = vunpack.c.l.b16 %v882
    %v1052 = vunpack.c.h.b16 %v882
    %v1053 = vunpack.c.l.b16 %v883
    %v1054 = vunpack.c.h.b16 %v883
    %v1055 = vunpack.c.l.b16 %v884
    %v1056 = vunpack.c.h.b16 %v884
    %v1057 = vunpack.c.l.b16 %v885
    %v1058 = vunpack.c.h.b16 %v885
    %v1059 = vunpack.c.l.b16 %v886
    %v1060 = vunpack.c.h.b16 %v886
    %v1061 = vunpack.c.l.b16 %v887
    %v1062 = vunpack.c.h.b16 %v887
    %v1063 = vunpack.c.l.b16 %v888
    %v1064 = vunpack.c.h.b16 %v888
    %v1065 = vunpack.c.l.b16 %v889
    %v1066 = vunpack.c.h.b16 %v889
    %v1067 = vunpack.c.l.b16 %v890
    %v1068 = vunpack.c.h.b16 %v890
    %v1069 = vunpack.c.l.b16 %v891
    %v1070 = vunpack.c.h.b16 %v891
    %v1071 = vunpack.c.l.b16 %v892
    %v1072 = vunpack.c.h.b16 %v892
    %v1073 = vunpack.c.l.b16 %v893
    %v1074 = vunpack.c.h.b16 %v893
    %v1075 = vunpack.c.l.b16 %v894
    %v1076 = vunpack.c.h.b16 %v894
    %v1077 = vunpack.c.l.b16 %v895
    %v1078 = vunpack.c.h.b16 %v895
    %v1079 = vunpack.c.l.b16 %v896
    %v1080 = vunpack.c.h.b16 %v896
    %v1081 = vunpack.c.l.b16 %v897
    %v1082 = vunpack.c.h.b16 %v897
    %v1083 = vunpack.c.l.b16 %v898
    %v1084 = vunpack.c.h.b16 %v898
    %v1085 = vunpack.c.l.b16 %v899
    %v1086 = vunpack.c.h.b16 %v899
    %v1087 = vunpack.c.l.b16 %v900
    %v1088 = vunpack.c.h.b16 %v900
    %v1089 = vunpack.c.l.b16 %v901
    %v1090 = vunpack.c.h.b16 %v901
    %v1091 = vunpack.c.l.b16 %v902
    %v1092 = vunpack.c.h.b16 %v902
    %v1093 = vunpack.c.l.b16 %v903
    %v1094 = vunpack.c.h.b16 %v903
    %v1095 = vunpack.c.l.b16 %v904
    %v1096 = vunpack.c.h.b16 %v904
    %v1097 = vunpack.c.l.b16 %v905
    %v1098 = vunpack.c.h.b16 %v905
    %v1099 = vunpack.c.l.b16 %v906
    %v1100 = vunpack.c.h.b16 %v906
    %v1101 = vunpack.c.l.b16 %v907
    %v1102 = vunpack.c.h.b16 %v907
    %v1103 = vunpack.c.l.b16 %v908
    %v1104 = vunpack.c.h.b16 %v908
    %v1105 = vunpack.c.l.b16 %v909
    %v1106 = vunpack.c.h.b16 %v909
    %v1107 = vunpack.c.l.b16 %v910
    %v1108 = vunpack.c.h.b16 %v910
    %v1109 = vunpack.c.l.b16 %v911
    %v1110 = vunpack.c.h.b16 %v911
    %v1111 = vunpack.c.l.b16 %v912
    %v1112 = vunpack.c.h.b16 %v912
    %v1113 = vunpack.c.l.b16 %v913
    %v1114 = vunpack.c.h.b16 %v913
    %v1115 = vunpack.c.l.b16 %v914
    %v1116 = vunpack.c.h.b16 %v914
    %v1117 = vunpack.c.l.b16 %v915
    %v1118 = vunpack.c.h.b16 %v915
    %v1119 = vunpack.c.l.b16 %v916
    %v1120 = vunpack.c.h.b16 %v916
    %v1121 = vpack.c.b16 %v995, %v993
    %v1122 = vpack.c.b16 %v996, %v994
    %v1123 = vpack.c.b16 %v999, %v997
    %v1124 = vpack.c.b16 %v1000, %v998
    %v1125 = vpack.c.b16 %v1003, %v1001
    %v1126 = vpack.c.b16 %v1004, %v1002
    %v1127 = vpack.c.b16 %v1007, %v1005
    %v1128 = vpack.c.b16 %v1008, %v1006
    %v1129 = vpack.c.b16 %v1011, %v1009
    %v1130 = vpack.c.b16 %v1012, %v1010
    %v1131 = vpack.c.b16 %v1015, %v1013
    %v1132 = vpack.c.b16 %v1016, %v1014
    %v1133 = vpack.c.b16 %v1019, %v1017
    %v1134 = vpack.c.b16 %v1020, %v1018
    %v1135 = vpack.c.b16 %v1023, %v1021
    %v1136 = vpack.c.b16 %v1024, %v1022
    %v1137 = vpack.c.b16 %v1027, %v1025
    %v1138 = vpack.c.b16 %v1028, %v1026
    %v1139 = vpack.c.b16 %v1031, %v1029
    %v1140 = vpack.c.b16 %v1032, %v1030
    %v1141 = vpack.c.b16 %v1035, %v1033
    %v1142 = vpack.c.b16 %v1036, %v1034
    %v1143 = vpack.c.b16 %v1039, %v1037
    %v1144 = vpack.c.b16 %v1040, %v1038
    %v1145 = vpack.c.b16 %v1043, %v1041
    %v1146 = vpack.c.b16 %v1044, %v1042
    %v1147 = vpack.c.b16 %v1047, %v1045
    %v1148 = vpack.c.b16 %v1048, %v1046
    %v1149 = vpack.c.b16 %v1051, %v1049
    %v1150 = vpack.c.b16 %v1052, %v1050
    %v1151 = vpack.c.b16 %v1055, %v1053
    %v1152 = vpack.c.b16 %v1056, %v1054
    %v1153 = vpack.c.b16 %v1059, %v1057
    %v1154 = vpack.c.b16 %v1060, %v1058
    %v1155 = vpack.c.b16 %v1063, %v1061
    %v1156 = vpack.c.b16 %v1064, %v1062
    %v1157 = vpack.c.b16 %v1067, %v1065
    %v1158 = vpack.c.b16 %v1068, %v1066
    %v1159 = vpack.c.b16 %v1071, %v1069
    %v1160 = vpack.c.b16 %v1072, %v1070
    %v1161 = vpack.c.b16 %v1075, %v1073
    %v1162 = vpack.c.b16 %v1076, %v1074
    %v1163 = vpack.c.b16 %v1079, %v1077
    %v1164 = vpack.c.b16 %v1080, %v1078
    %v1165 = vpack.c.b16 %v1083, %v1081
    %v1166 = vpack.c.b16 %v1084, %v1082
    %v1167 = vpack.c.b16 %v1087, %v1085
    %v1168 = vpack.c.b16 %v1088, %v1086
    %v1169 = vpack.c.b16 %v1091, %v1089
    %v1170 = vpack.c.b16 %v1092, %v1090
    %v1171 = vpack.c.b16 %v1095, %v1093
    %v1172 = vpack.c.b16 %v1096, %v1094
    %v1173 = vpack.c.b16 %v1099, %v1097
    %v1174 = vpack.c.b16 %v1100, %v1098
    %v1175 = vpack.c.b16 %v1103, %v1101
    %v1176 = vpack.c.b16 %v1104, %v1102
    %v1177 = vpack.c.b16 %v1107, %v1105
    %v1178 = vpack.c.b16 %v1108, %v1106
    %v1179 = vpack.c.b16 %v1111, %v1109
    %v1180 = vpack.c.b16 %v1112, %v1110
    %v1181 = vpack.c.b16 %v1115, %v1113
    %v1182 = vpack.c.b16 %v1116, %v1114
    %v1183 = vpack.c.b16 %v1119, %v1117
    %v1184 = vpack.c.b16 %v1120, %v1118
    %1249 = vmatprep.subr.bf16.mxu0 %v1122
    %1250 = vmatpush1.bf16.msra.mxu0 %v1121
    %1251 = vmatprep.subr.bf16.mxu0 %v1124
    %1252 = vmatpush1.bf16.msra.mxu0 %v1123
    %1253 = vmatprep.subr.bf16.mxu0 %v1126
    %1254 = vmatpush1.bf16.msra.mxu0 %v1125
    %1255 = vmatprep.subr.bf16.mxu0 %v1128
    %1256 = vmatpush1.bf16.msra.mxu0 %v1127
    %1257 = vmatprep.subr.bf16.mxu0 %v1130
    %1258 = vmatpush1.bf16.msra.mxu0 %v1129
    %1259 = vmatprep.subr.bf16.mxu0 %v1132
    %1260 = vmatpush1.bf16.msra.mxu0 %v1131
    %1261 = vmatprep.subr.bf16.mxu0 %v1134
    %1262 = vmatpush1.bf16.msra.mxu0 %v1133
    %1263 = vmatprep.subr.bf16.mxu0 %v1136
    %1264 = vmatpush1.bf16.msra.mxu0 %v1135
    %1265 = vmatprep.subr.bf16.mxu0 %v1138
    %1266 = vmatpush1.bf16.msra.mxu0 %v1137
    %1267 = vmatprep.subr.bf16.mxu0 %v1140
    %1268 = vmatpush1.bf16.msra.mxu0 %v1139
    %1269 = vmatprep.subr.bf16.mxu0 %v1142
    %1270 = vmatpush1.bf16.msra.mxu0 %v1141
    %1271 = vmatprep.subr.bf16.mxu0 %v1144
    %1272 = vmatpush1.bf16.msra.mxu0 %v1143
    %1273 = vmatprep.subr.bf16.mxu0 %v1146
    %1274 = vmatpush1.bf16.msra.mxu0 %v1145
    %1275 = vmatprep.subr.bf16.mxu0 %v1148
    %1276 = vmatpush1.bf16.msra.mxu0 %v1147
    %1277 = vmatprep.subr.bf16.mxu0 %v1150
    %1278 = vmatpush1.bf16.msra.mxu0 %v1149
    %1279 = vmatprep.subr.bf16.mxu0 %v1152
    %1280 = vmatpush1.bf16.msra.mxu0 %v1151
    %1281 = vmatprep.mubr.bf16.mxu0 %v790
    %1282 = vmatmul.mubr.bf16.gmra.mrb[0].mxu0 %v789
    %v1283 = vpop.f32.mrb[0].mxu0
    %v1284 = vadd.f32 %v922, %v1283
    %v1285 = vpop.f32.mrb[0].mxu0
    %v1286 = vadd.f32 %v926, %v1285
    %v1287 = vpop.f32.mrb[0].mxu0
    %v1288 = vadd.f32 %v922, %v1287
    %v1289 = vpop.f32.mrb[0].mxu0
    %v1290 = vadd.f32 %v926, %v1289
    %1291 = vmatprep.mubr.bf16.mxu0 %v794
    %1292 = vmatmul.mubr.bf16.gmra.mrb[0].mxu0 %v793
    %v1293 = vpop.f32.mrb[0].mxu0
    %v1294 = vadd.f32 %v922, %v1293
    %v1295 = vpop.f32.mrb[0].mxu0
    %v1296 = vadd.f32 %v926, %v1295
    %v1297 = vpop.f32.mrb[0].mxu0
    %v1298 = vadd.f32 %v922, %v1297
    %v1299 = vpop.f32.mrb[0].mxu0
    %v1300 = vadd.f32 %v926, %v1299
    %1301 = vmatprep.mubr.bf16.mxu0 %v798
    %1302 = vmatmul.mubr.bf16.gmra.mrb[0].mxu0 %v797
    %v1303 = vpop.f32.mrb[0].mxu0
    %v1304 = vadd.f32 %v922, %v1303
    %v1305 = vpop.f32.mrb[0].mxu0
    %v1306 = vadd.f32 %v926, %v1305
    %v1307 = vpop.f32.mrb[0].mxu0
    %v1308 = vadd.f32 %v922, %v1307
    %v1309 = vpop.f32.mrb[0].mxu0
    %v1310 = vadd.f32 %v926, %v1309
    %1311 = vmatprep.mubr.bf16.mxu0 %v802
    %1312 = vmatmul.mubr.bf16.gmra.mrb[0].mxu0 %v801
    %v1313 = vpop.f32.mrb[0].mxu0
    %v1314 = vadd.f32 %v922, %v1313
    %v1315 = vpop.f32.mrb[0].mxu0
    %v1316 = vadd.f32 %v926, %v1315
    %v1317 = vpop.f32.mrb[0].mxu0
    %v1318 = vadd.f32 %v922, %v1317
    %v1319 = vpop.f32.mrb[0].mxu0
    %v1320 = vadd.f32 %v926, %v1319
    %1321 = vmatprep.mubr.bf16.mxu0 %v806
    %1322 = vmatmul.mubr.bf16.gmra.mrb[0].mxu0 %v805
    %v1323 = vpop.f32.mrb[0].mxu0
    %v1324 = vadd.f32 %v922, %v1323
    %v1325 = vpop.f32.mrb[0].mxu0
    %v1326 = vadd.f32 %v926, %v1325
    %v1327 = vpop.f32.mrb[0].mxu0
    %v1328 = vadd.f32 %v922, %v1327
    %v1329 = vpop.f32.mrb[0].mxu0
    %v1330 = vadd.f32 %v926, %v1329
    %1331 = vmatprep.mubr.bf16.mxu0 %v810
    %1332 = vmatmul.mubr.bf16.gmra.mrb[0].mxu0 %v809
    %v1333 = vpop.f32.mrb[0].mxu0
    %v1334 = vadd.f32 %v922, %v1333
    %v1335 = vpop.f32.mrb[0].mxu0
    %v1336 = vadd.f32 %v926, %v1335
    %v1337 = vpop.f32.mrb[0].mxu0
    %v1338 = vadd.f32 %v922, %v1337
    %v1339 = vpop.f32.mrb[0].mxu0
    %v1340 = vadd.f32 %v926, %v1339
    %1341 = vmatprep.mubr.bf16.mxu0 %v814
    %1342 = vmatmul.mubr.bf16.gmra.mrb[0].mxu0 %v813
    %v1343 = vpop.f32.mrb[0].mxu0
    %v1344 = vadd.f32 %v922, %v1343
    %v1345 = vpop.f32.mrb[0].mxu0
    %v1346 = vadd.f32 %v926, %v1345
    %v1347 = vpop.f32.mrb[0].mxu0
    %v1348 = vadd.f32 %v922, %v1347
    %v1349 = vpop.f32.mrb[0].mxu0
    %v1350 = vadd.f32 %v926, %v1349
    %1351 = vmatprep.mubr.bf16.mxu0 %v818
    %1352 = vmatmul.mubr.bf16.gmra.mrb[0].mxu0 %v817
    %v1353 = vpop.f32.mrb[0].mxu0
    %v1354 = vadd.f32 %v922, %v1353
    %v1355 = vpop.f32.mrb[0].mxu0
    %v1356 = vadd.f32 %v926, %v1355
    %v1357 = vpop.f32.mrb[0].mxu0
    %v1358 = vadd.f32 %v922, %v1357
    %v1359 = vpop.f32.mrb[0].mxu0
    %v1360 = vadd.f32 %v926, %v1359
    %1361 = vmatprep.mubr.bf16.mxu0 %v822
    %1362 = vmatmul.mubr.bf16.gmra.mrb[0].mxu0 %v821
    %v1363 = vpop.f32.mrb[0].mxu0
    %v1364 = vadd.f32 %v922, %v1363
    %v1365 = vpop.f32.mrb[0].mxu0
    %v1366 = vadd.f32 %v926, %v1365
    %v1367 = vpop.f32.mrb[0].mxu0
    %v1368 = vadd.f32 %v922, %v1367
    %v1369 = vpop.f32.mrb[0].mxu0
    %v1370 = vadd.f32 %v926, %v1369
    %1371 = vmatprep.mubr.bf16.mxu0 %v826
    %1372 = vmatmul.mubr.bf16.gmra.mrb[0].mxu0 %v825
    %v1373 = vpop.f32.mrb[0].mxu0
    %v1374 = vadd.f32 %v922, %v1373
    %v1375 = vpop.f32.mrb[0].mxu0
    %v1376 = vadd.f32 %v926, %v1375
    %v1377 = vpop.f32.mrb[0].mxu0
    %v1378 = vadd.f32 %v922, %v1377
    %v1379 = vpop.f32.mrb[0].mxu0
    %v1380 = vadd.f32 %v926, %v1379
    %1381 = vmatprep.mubr.bf16.mxu0 %v830
    %1382 = vmatmul.mubr.bf16.gmra.mrb[0].mxu0 %v829
    %v1383 = vpop.f32.mrb[0].mxu0
    %v1384 = vadd.f32 %v922, %v1383
    %v1385 = vpop.f32.mrb[0].mxu0
    %v1386 = vadd.f32 %v926, %v1385
    %v1387 = vpop.f32.mrb[0].mxu0
    %v1388 = vadd.f32 %v922, %v1387
    %v1389 = vpop.f32.mrb[0].mxu0
    %v1390 = vadd.f32 %v926, %v1389
    %1391 = vmatprep.mubr.bf16.mxu0 %v834
    %1392 = vmatmul.mubr.bf16.gmra.mrb[0].mxu0 %v833
    %v1393 = vpop.f32.mrb[0].mxu0
    %v1394 = vadd.f32 %v922, %v1393
    %v1395 = vpop.f32.mrb[0].mxu0
    %v1396 = vadd.f32 %v926, %v1395
    %v1397 = vpop.f32.mrb[0].mxu0
    %v1398 = vadd.f32 %v922, %v1397
    %v1399 = vpop.f32.mrb[0].mxu0
    %v1400 = vadd.f32 %v926, %v1399
    %1401 = vmatprep.mubr.bf16.mxu0 %v838
    %1402 = vmatmul.mubr.bf16.gmra.mrb[0].mxu0 %v837
    %v1403 = vpop.f32.mrb[0].mxu0
    %v1404 = vadd.f32 %v922, %v1403
    %v1405 = vpop.f32.mrb[0].mxu0
    %v1406 = vadd.f32 %v926, %v1405
    %v1407 = vpop.f32.mrb[0].mxu0
    %v1408 = vadd.f32 %v922, %v1407
    %v1409 = vpop.f32.mrb[0].mxu0
    %v1410 = vadd.f32 %v926, %v1409
    %1411 = vmatprep.mubr.bf16.mxu0 %v842
    %1412 = vmatmul.mubr.bf16.gmra.mrb[0].mxu0 %v841
    %v1413 = vpop.f32.mrb[0].mxu0
    %v1414 = vadd.f32 %v922, %v1413
    %v1415 = vpop.f32.mrb[0].mxu0
    %v1416 = vadd.f32 %v926, %v1415
    %v1417 = vpop.f32.mrb[0].mxu0
    %v1418 = vadd.f32 %v922, %v1417
    %v1419 = vpop.f32.mrb[0].mxu0
    %v1420 = vadd.f32 %v926, %v1419
    %1421 = vmatprep.mubr.bf16.mxu0 %v846
    %1422 = vmatmul.mubr.bf16.gmra.mrb[0].mxu0 %v845
    %v1423 = vpop.f32.mrb[0].mxu0
    %v1424 = vadd.f32 %v922, %v1423
    %v1425 = vpop.f32.mrb[0].mxu0
    %v1426 = vadd.f32 %v926, %v1425
    %v1427 = vpop.f32.mrb[0].mxu0
    %v1428 = vadd.f32 %v922, %v1427
    %v1429 = vpop.f32.mrb[0].mxu0
    %v1430 = vadd.f32 %v926, %v1429
    %1431 = vmatprep.mubr.bf16.mxu0 %v850
    %1432 = vmatmul.mubr.bf16.gmra.mrb[0].mxu0 %v849
    %v1433 = vpop.f32.mrb[0].mxu0
    %v1434 = vadd.f32 %v922, %v1433
    %v1435 = vpop.f32.mrb[0].mxu0
    %v1436 = vadd.f32 %v926, %v1435
    %v1437 = vpop.f32.mrb[0].mxu0
    %v1438 = vadd.f32 %v922, %v1437
    %v1439 = vpop.f32.mrb[0].mxu0
    %v1440 = vadd.f32 %v926, %v1439
    %1441 = vdwg.mxu0
    %1442 = vmatprep.subr.bf16.mxu0 %v1154
    %1443 = vmatpush1.bf16.msra.mxu0 %v1153
    %1444 = vmatprep.subr.bf16.mxu0 %v1156
    %1445 = vmatpush1.bf16.msra.mxu0 %v1155
    %1446 = vmatprep.subr.bf16.mxu0 %v1158
    %1447 = vmatpush1.bf16.msra.mxu0 %v1157
    %1448 = vmatprep.subr.bf16.mxu0 %v1160
    %1449 = vmatpush1.bf16.msra.mxu0 %v1159
    %1450 = vmatprep.subr.bf16.mxu0 %v1162
    %1451 = vmatpush1.bf16.msra.mxu0 %v1161
    %1452 = vmatprep.subr.bf16.mxu0 %v1164
    %1453 = vmatpush1.bf16.msra.mxu0 %v1163
    %1454 = vmatprep.subr.bf16.mxu0 %v1166
    %1455 = vmatpush1.bf16.msra.mxu0 %v1165
    %1456 = vmatprep.subr.bf16.mxu0 %v1168
    %1457 = vmatpush1.bf16.msra.mxu0 %v1167
    %1458 = vmatprep.subr.bf16.mxu0 %v1170
    %1459 = vmatpush1.bf16.msra.mxu0 %v1169
    %1460 = vmatprep.subr.bf16.mxu0 %v1172
    %1461 = vmatpush1.bf16.msra.mxu0 %v1171
    %1462 = vmatprep.subr.bf16.mxu0 %v1174
    %1463 = vmatpush1.bf16.msra.mxu0 %v1173
    %1464 = vmatprep.subr.bf16.mxu0 %v1176
    %1465 = vmatpush1.bf16.msra.mxu0 %v1175
    %1466 = vmatprep.subr.bf16.mxu0 %v1178
    %1467 = vmatpush1.bf16.msra.mxu0 %v1177
    %1468 = vmatprep.subr.bf16.mxu0 %v1180
    %1469 = vmatpush1.bf16.msra.mxu0 %v1179
    %1470 = vmatprep.subr.bf16.mxu0 %v1182
    %1471 = vmatpush1.bf16.msra.mxu0 %v1181
    %1472 = vmatprep.subr.bf16.mxu0 %v1184
    %1473 = vmatpush1.bf16.msra.mxu0 %v1183
    %1474 = vmatprep.mubr.bf16.mxu0 %v792
    %1475 = vmatmul.mubr.bf16.gmra.mrb[0].mxu0 %v791
    %v1476 = vpop.f32.mrb[0].mxu0
    %v1477 = vadd.f32 %v1284, %v1476
    %v1478 = vpop.f32.mrb[0].mxu0
    %v1479 = vadd.f32 %v1286, %v1478
    %v1480 = vpop.f32.mrb[0].mxu0
    %v1481 = vadd.f32 %v1288, %v1480
    %v1482 = vpop.f32.mrb[0].mxu0
    %v1483 = vadd.f32 %v1290, %v1482
    %1484 = vmatprep.mubr.bf16.mxu0 %v796
    %1485 = vmatmul.mubr.bf16.gmra.mrb[0].mxu0 %v795
    %v1486 = vpop.f32.mrb[0].mxu0
    %v1487 = vadd.f32 %v1294, %v1486
    %v1488 = vpop.f32.mrb[0].mxu0
    %v1489 = vadd.f32 %v1296, %v1488
    %v1490 = vpop.f32.mrb[0].mxu0
    %v1491 = vadd.f32 %v1298, %v1490
    %v1492 = vpop.f32.mrb[0].mxu0
    %v1493 = vadd.f32 %v1300, %v1492
    %1494 = vmatprep.mubr.bf16.mxu0 %v800
    %1495 = vmatmul.mubr.bf16.gmra.mrb[0].mxu0 %v799
    %v1496 = vpop.f32.mrb[0].mxu0
    %v1497 = vadd.f32 %v1304, %v1496
    %v1498 = vpop.f32.mrb[0].mxu0
    %v1499 = vadd.f32 %v1306, %v1498
    %v1500 = vpop.f32.mrb[0].mxu0
    %v1501 = vadd.f32 %v1308, %v1500
    %v1502 = vpop.f32.mrb[0].mxu0
    %v1503 = vadd.f32 %v1310, %v1502
    %1504 = vmatprep.mubr.bf16.mxu0 %v804
    %1505 = vmatmul.mubr.bf16.gmra.mrb[0].mxu0 %v803
    %v1506 = vpop.f32.mrb[0].mxu0
    %v1507 = vadd.f32 %v1314, %v1506
    %v1508 = vpop.f32.mrb[0].mxu0
    %v1509 = vadd.f32 %v1316, %v1508
    %v1510 = vpop.f32.mrb[0].mxu0
    %v1511 = vadd.f32 %v1318, %v1510
    %v1512 = vpop.f32.mrb[0].mxu0
    %v1513 = vadd.f32 %v1320, %v1512
    %1514 = vmatprep.mubr.bf16.mxu0 %v808
    %1515 = vmatmul.mubr.bf16.gmra.mrb[0].mxu0 %v807
    %v1516 = vpop.f32.mrb[0].mxu0
    %v1517 = vadd.f32 %v1324, %v1516
    %v1518 = vpop.f32.mrb[0].mxu0
    %v1519 = vadd.f32 %v1326, %v1518
    %v1520 = vpop.f32.mrb[0].mxu0
    %v1521 = vadd.f32 %v1328, %v1520
    %v1522 = vpop.f32.mrb[0].mxu0
    %v1523 = vadd.f32 %v1330, %v1522
    %1524 = vmatprep.mubr.bf16.mxu0 %v812
    %1525 = vmatmul.mubr.bf16.gmra.mrb[0].mxu0 %v811
    %v1526 = vpop.f32.mrb[0].mxu0
    %v1527 = vadd.f32 %v1334, %v1526
    %v1528 = vpop.f32.mrb[0].mxu0
    %v1529 = vadd.f32 %v1336, %v1528
    %v1530 = vpop.f32.mrb[0].mxu0
    %v1531 = vadd.f32 %v1338, %v1530
    %v1532 = vpop.f32.mrb[0].mxu0
    %v1533 = vadd.f32 %v1340, %v1532
    %1534 = vmatprep.mubr.bf16.mxu0 %v816
    %1535 = vmatmul.mubr.bf16.gmra.mrb[0].mxu0 %v815
    %v1536 = vpop.f32.mrb[0].mxu0
    %v1537 = vadd.f32 %v1344, %v1536
    %v1538 = vpop.f32.mrb[0].mxu0
    %v1539 = vadd.f32 %v1346, %v1538
    %v1540 = vpop.f32.mrb[0].mxu0
    %v1541 = vadd.f32 %v1348, %v1540
    %v1542 = vpop.f32.mrb[0].mxu0
    %v1543 = vadd.f32 %v1350, %v1542
    %1544 = vmatprep.mubr.bf16.mxu0 %v820
    %1545 = vmatmul.mubr.bf16.gmra.mrb[0].mxu0 %v819
    %v1546 = vpop.f32.mrb[0].mxu0
    %v1547 = vadd.f32 %v1354, %v1546
    %v1548 = vpop.f32.mrb[0].mxu0
    %v1549 = vadd.f32 %v1356, %v1548
    %v1550 = vpop.f32.mrb[0].mxu0
    %v1551 = vadd.f32 %v1358, %v1550
    %v1552 = vpop.f32.mrb[0].mxu0
    %v1553 = vadd.f32 %v1360, %v1552
    %1554 = vmatprep.mubr.bf16.mxu0 %v824
    %1555 = vmatmul.mubr.bf16.gmra.mrb[0].mxu0 %v823
    %v1556 = vpop.f32.mrb[0].mxu0
    %v1557 = vadd.f32 %v1364, %v1556
    %v1558 = vpop.f32.mrb[0].mxu0
    %v1559 = vadd.f32 %v1366, %v1558
    %v1560 = vpop.f32.mrb[0].mxu0
    %v1561 = vadd.f32 %v1368, %v1560
    %v1562 = vpop.f32.mrb[0].mxu0
    %v1563 = vadd.f32 %v1370, %v1562
    %1564 = vmatprep.mubr.bf16.mxu0 %v828
    %1565 = vmatmul.mubr.bf16.gmra.mrb[0].mxu0 %v827
    %v1566 = vpop.f32.mrb[0].mxu0
    %v1567 = vadd.f32 %v1374, %v1566
    %v1568 = vpop.f32.mrb[0].mxu0
    %v1569 = vadd.f32 %v1376, %v1568
    %v1570 = vpop.f32.mrb[0].mxu0
    %v1571 = vadd.f32 %v1378, %v1570
    %v1572 = vpop.f32.mrb[0].mxu0
    %v1573 = vadd.f32 %v1380, %v1572
    %1574 = vmatprep.mubr.bf16.mxu0 %v832
    %1575 = vmatmul.mubr.bf16.gmra.mrb[0].mxu0 %v831
    %v1576 = vpop.f32.mrb[0].mxu0
    %v1577 = vadd.f32 %v1384, %v1576
    %v1578 = vpop.f32.mrb[0].mxu0
    %v1579 = vadd.f32 %v1386, %v1578
    %v1580 = vpop.f32.mrb[0].mxu0
    %v1581 = vadd.f32 %v1388, %v1580
    %v1582 = vpop.f32.mrb[0].mxu0
    %v1583 = vadd.f32 %v1390, %v1582
    %1584 = vmatprep.mubr.bf16.mxu0 %v836
    %1585 = vmatmul.mubr.bf16.gmra.mrb[0].mxu0 %v835
    %v1586 = vpop.f32.mrb[0].mxu0
    %v1587 = vadd.f32 %v1394, %v1586
    %v1588 = vpop.f32.mrb[0].mxu0
    %v1589 = vadd.f32 %v1396, %v1588
    %v1590 = vpop.f32.mrb[0].mxu0
    %v1591 = vadd.f32 %v1398, %v1590
    %v1592 = vpop.f32.mrb[0].mxu0
    %v1593 = vadd.f32 %v1400, %v1592
    %1594 = vmatprep.mubr.bf16.mxu0 %v840
    %1595 = vmatmul.mubr.bf16.gmra.mrb[0].mxu0 %v839
    %v1596 = vpop.f32.mrb[0].mxu0
    %v1597 = vadd.f32 %v1404, %v1596
    %v1598 = vpop.f32.mrb[0].mxu0
    %v1599 = vadd.f32 %v1406, %v1598
    %v1600 = vpop.f32.mrb[0].mxu0
    %v1601 = vadd.f32 %v1408, %v1600
    %v1602 = vpop.f32.mrb[0].mxu0
    %v1603 = vadd.f32 %v1410, %v1602
    %1604 = vmatprep.mubr.bf16.mxu0 %v844
    %1605 = vmatmul.mubr.bf16.gmra.mrb[0].mxu0 %v843
    %v1606 = vpop.f32.mrb[0].mxu0
    %v1607 = vadd.f32 %v1414, %v1606
    %v1608 = vpop.f32.mrb[0].mxu0
    %v1609 = vadd.f32 %v1416, %v1608
    %v1610 = vpop.f32.mrb[0].mxu0
    %v1611 = vadd.f32 %v1418, %v1610
    %v1612 = vpop.f32.mrb[0].mxu0
    %v1613 = vadd.f32 %v1420, %v1612
    %1614 = vmatprep.mubr.bf16.mxu0 %v848
    %1615 = vmatmul.mubr.bf16.gmra.mrb[0].mxu0 %v847
    %v1616 = vpop.f32.mrb[0].mxu0
    %v1617 = vadd.f32 %v1424, %v1616
    %v1618 = vpop.f32.mrb[0].mxu0
    %v1619 = vadd.f32 %v1426, %v1618
    %v1620 = vpop.f32.mrb[0].mxu0
    %v1621 = vadd.f32 %v1428, %v1620
    %v1622 = vpop.f32.mrb[0].mxu0
    %v1623 = vadd.f32 %v1430, %v1622
    %1624 = vmatprep.mubr.bf16.mxu0 %v852
    %1625 = vmatmul.mubr.bf16.gmra.mrb[0].mxu0 %v851
    %v1626 = vpop.f32.mrb[0].mxu0
    %v1627 = vadd.f32 %v1434, %v1626
    %v1628 = vpop.f32.mrb[0].mxu0
    %v1629 = vadd.f32 %v1436, %v1628
    %v1630 = vpop.f32.mrb[0].mxu0
    %v1631 = vadd.f32 %v1438, %v1630
    %v1632 = vpop.f32.mrb[0].mxu0
    %v1633 = vadd.f32 %v1440, %v1632
    %1634 = vdwg.mxu0
    %v1635 = vmax.f32 %v1477, 0.0
    %v1636 = vmax.f32 %v1479, 0.0
    %v1637 = vmax.f32 %v1481, 0.0
    %v1638 = vmax.f32 %v1483, 0.0
    %v1639 = vmax.f32 %v1487, 0.0
    %v1640 = vmax.f32 %v1489, 0.0
    %v1641 = vmax.f32 %v1491, 0.0
    %v1642 = vmax.f32 %v1493, 0.0
    %v1643 = vmax.f32 %v1497, 0.0
    %v1644 = vmax.f32 %v1499, 0.0
    %v1645 = vmax.f32 %v1501, 0.0
    %v1646 = vmax.f32 %v1503, 0.0
    %v1647 = vmax.f32 %v1507, 0.0
    %v1648 = vmax.f32 %v1509, 0.0
    %v1649 = vmax.f32 %v1511, 0.0
    %v1650 = vmax.f32 %v1513, 0.0
    %v1651 = vmax.f32 %v1517, 0.0
    %v1652 = vmax.f32 %v1519, 0.0
    %v1653 = vmax.f32 %v1521, 0.0
    %v1654 = vmax.f32 %v1523, 0.0
    %v1655 = vmax.f32 %v1527, 0.0
    %v1656 = vmax.f32 %v1529, 0.0
    %v1657 = vmax.f32 %v1531, 0.0
    %v1658 = vmax.f32 %v1533, 0.0
    %v1659 = vmax.f32 %v1537, 0.0
    %v1660 = vmax.f32 %v1539, 0.0
    %v1661 = vmax.f32 %v1541, 0.0
    %v1662 = vmax.f32 %v1543, 0.0
    %v1663 = vmax.f32 %v1547, 0.0
    %v1664 = vmax.f32 %v1549, 0.0
    %v1665 = vmax.f32 %v1551, 0.0
    %v1666 = vmax.f32 %v1553, 0.0
    %v1667 = vmax.f32 %v1557, 0.0
    %v1668 = vmax.f32 %v1559, 0.0
    %v1669 = vmax.f32 %v1561, 0.0
    %v1670 = vmax.f32 %v1563, 0.0
    %v1671 = vmax.f32 %v1567, 0.0
    %v1672 = vmax.f32 %v1569, 0.0
    %v1673 = vmax.f32 %v1571, 0.0
    %v1674 = vmax.f32 %v1573, 0.0
    %v1675 = vmax.f32 %v1577, 0.0
    %v1676 = vmax.f32 %v1579, 0.0
    %v1677 = vmax.f32 %v1581, 0.0
    %v1678 = vmax.f32 %v1583, 0.0
    %v1679 = vmax.f32 %v1587, 0.0
    %v1680 = vmax.f32 %v1589, 0.0
    %v1681 = vmax.f32 %v1591, 0.0
    %v1682 = vmax.f32 %v1593, 0.0
    %v1683 = vmax.f32 %v1597, 0.0
    %v1684 = vmax.f32 %v1599, 0.0
    %v1685 = vmax.f32 %v1601, 0.0
    %v1686 = vmax.f32 %v1603, 0.0
    %v1687 = vmax.f32 %v1607, 0.0
    %v1688 = vmax.f32 %v1609, 0.0
    %v1689 = vmax.f32 %v1611, 0.0
    %v1690 = vmax.f32 %v1613, 0.0
    %v1691 = vmax.f32 %v1617, 0.0
    %v1692 = vmax.f32 %v1619, 0.0
    %v1693 = vmax.f32 %v1621, 0.0
    %v1694 = vmax.f32 %v1623, 0.0
    %v1695 = vmax.f32 %v1627, 0.0
    %v1696 = vmax.f32 %v1629, 0.0
    %v1697 = vmax.f32 %v1631, 0.0
    %v1698 = vmax.f32 %v1633, 0.0
    %v1699 = vld [vmem:[%s5] sm:$0x3]
    %v1701 = vlaneseq
    %v1702 = vshrl.u32 %v1701, 7
    %v1703 = vsub.s32 0, %v1702
    %v1704 = vrot.slane %v1699, %v1703
    %v1705 = vlaneseq
    %v1706 = vshrl.u32 %v1705, 7
    %v1707 = vsub.s32 1, %v1706
    %v1708 = vrot.slane %v1699, %v1707
    %v1711 = vmul.f32 %v1635, %v1704
    %v1712 = vmul.f32 %v1636, %v1708
    %v1713 = vmul.f32 %v1637, %v1704
    %v1714 = vmul.f32 %v1638, %v1708
    %v1715 = vmul.f32 %v1639, %v1704
    %v1716 = vmul.f32 %v1640, %v1708
    %v1717 = vmul.f32 %v1641, %v1704
    %v1718 = vmul.f32 %v1642, %v1708
    %v1719 = vmul.f32 %v1643, %v1704
    %v1720 = vmul.f32 %v1644, %v1708
    %v1721 = vmul.f32 %v1645, %v1704
    %v1722 = vmul.f32 %v1646, %v1708
    %v1723 = vmul.f32 %v1647, %v1704
    %v1724 = vmul.f32 %v1648, %v1708
    %v1725 = vmul.f32 %v1649, %v1704
    %v1726 = vmul.f32 %v1650, %v1708
    %v1727 = vmul.f32 %v1651, %v1704
    %v1728 = vmul.f32 %v1652, %v1708
    %v1729 = vmul.f32 %v1653, %v1704
    %v1730 = vmul.f32 %v1654, %v1708
    %v1731 = vmul.f32 %v1655, %v1704
    %v1732 = vmul.f32 %v1656, %v1708
    %v1733 = vmul.f32 %v1657, %v1704
    %v1734 = vmul.f32 %v1658, %v1708
    %v1735 = vmul.f32 %v1659, %v1704
    %v1736 = vmul.f32 %v1660, %v1708
    %v1737 = vmul.f32 %v1661, %v1704
    %v1738 = vmul.f32 %v1662, %v1708
    %v1739 = vmul.f32 %v1663, %v1704
    %v1740 = vmul.f32 %v1664, %v1708
    %v1741 = vmul.f32 %v1665, %v1704
    %v1742 = vmul.f32 %v1666, %v1708
    %v1743 = vmul.f32 %v1667, %v1704
    %v1744 = vmul.f32 %v1668, %v1708
    %v1745 = vmul.f32 %v1669, %v1704
    %v1746 = vmul.f32 %v1670, %v1708
    %v1747 = vmul.f32 %v1671, %v1704
    %v1748 = vmul.f32 %v1672, %v1708
    %v1749 = vmul.f32 %v1673, %v1704
    %v1750 = vmul.f32 %v1674, %v1708
    %v1751 = vmul.f32 %v1675, %v1704
    %v1752 = vmul.f32 %v1676, %v1708
    %v1753 = vmul.f32 %v1677, %v1704
    %v1754 = vmul.f32 %v1678, %v1708
    %v1755 = vmul.f32 %v1679, %v1704
    %v1756 = vmul.f32 %v1680, %v1708
    %v1757 = vmul.f32 %v1681, %v1704
    %v1758 = vmul.f32 %v1682, %v1708
    %v1759 = vmul.f32 %v1683, %v1704
    %v1760 = vmul.f32 %v1684, %v1708
    %v1761 = vmul.f32 %v1685, %v1704
    %v1762 = vmul.f32 %v1686, %v1708
    %v1763 = vmul.f32 %v1687, %v1704
    %v1764 = vmul.f32 %v1688, %v1708
    %v1765 = vmul.f32 %v1689, %v1704
    %v1766 = vmul.f32 %v1690, %v1708
    %v1767 = vmul.f32 %v1691, %v1704
    %v1768 = vmul.f32 %v1692, %v1708
    %v1769 = vmul.f32 %v1693, %v1704
    %v1770 = vmul.f32 %v1694, %v1708
    %v1771 = vmul.f32 %v1695, %v1704
    %v1772 = vmul.f32 %v1696, %v1708
    %v1773 = vmul.f32 %v1697, %v1704
    %v1774 = vmul.f32 %v1698, %v1708
    %v1775 = vadd.f32 %v1711, %v1712
    %1776 = vadd.xlane.f32.xlu0 %v1775
    %v1777 = vpop.xlane.xlu0 %1776
    %v1778 = vadd.f32 %v1713, %v1714
    %1779 = vadd.xlane.f32.xlu0 %v1778
    %v1780 = vpop.xlane.xlu0 %1779
    %v1781 = vadd.f32 %v1715, %v1716
    %1782 = vadd.xlane.f32.xlu0 %v1781
    %v1783 = vpop.xlane.xlu0 %1782
    %v1784 = vadd.f32 %v1717, %v1718
    %1785 = vadd.xlane.f32.xlu0 %v1784
    %v1786 = vpop.xlane.xlu0 %1785
    %v1787 = vadd.f32 %v1719, %v1720
    %1788 = vadd.xlane.f32.xlu0 %v1787
    %v1789 = vpop.xlane.xlu0 %1788
    %v1790 = vadd.f32 %v1721, %v1722
    %1791 = vadd.xlane.f32.xlu0 %v1790
    %v1792 = vpop.xlane.xlu0 %1791
    %v1793 = vadd.f32 %v1723, %v1724
    %1794 = vadd.xlane.f32.xlu0 %v1793
    %v1795 = vpop.xlane.xlu0 %1794
    %v1796 = vadd.f32 %v1725, %v1726
    %1797 = vadd.xlane.f32.xlu0 %v1796
    %v1798 = vpop.xlane.xlu0 %1797
    %v1799 = vadd.f32 %v1727, %v1728
    %1800 = vadd.xlane.f32.xlu0 %v1799
    %v1801 = vpop.xlane.xlu0 %1800
    %v1802 = vadd.f32 %v1729, %v1730
    %1803 = vadd.xlane.f32.xlu0 %v1802
    %v1804 = vpop.xlane.xlu0 %1803
    %v1805 = vadd.f32 %v1731, %v1732
    %1806 = vadd.xlane.f32.xlu0 %v1805
    %v1807 = vpop.xlane.xlu0 %1806
    %v1808 = vadd.f32 %v1733, %v1734
    %1809 = vadd.xlane.f32.xlu0 %v1808
    %v1810 = vpop.xlane.xlu0 %1809
    %v1811 = vadd.f32 %v1735, %v1736
    %1812 = vadd.xlane.f32.xlu0 %v1811
    %v1813 = vpop.xlane.xlu0 %1812
    %v1814 = vadd.f32 %v1737, %v1738
    %1815 = vadd.xlane.f32.xlu0 %v1814
    %v1816 = vpop.xlane.xlu0 %1815
    %v1817 = vadd.f32 %v1739, %v1740
    %1818 = vadd.xlane.f32.xlu0 %v1817
    %v1819 = vpop.xlane.xlu0 %1818
    %v1820 = vadd.f32 %v1741, %v1742
    %1821 = vadd.xlane.f32.xlu0 %v1820
    %v1822 = vpop.xlane.xlu0 %1821
    %v1823 = vadd.f32 %v1743, %v1744
    %1824 = vadd.xlane.f32.xlu0 %v1823
    %v1825 = vpop.xlane.xlu0 %1824
    %v1826 = vadd.f32 %v1745, %v1746
    %1827 = vadd.xlane.f32.xlu0 %v1826
    %v1828 = vpop.xlane.xlu0 %1827
    %v1829 = vadd.f32 %v1747, %v1748
    %1830 = vadd.xlane.f32.xlu0 %v1829
    %v1831 = vpop.xlane.xlu0 %1830
    %v1832 = vadd.f32 %v1749, %v1750
    %1833 = vadd.xlane.f32.xlu0 %v1832
    %v1834 = vpop.xlane.xlu0 %1833
    %v1835 = vadd.f32 %v1751, %v1752
    %1836 = vadd.xlane.f32.xlu0 %v1835
    %v1837 = vpop.xlane.xlu0 %1836
    %v1838 = vadd.f32 %v1753, %v1754
    %1839 = vadd.xlane.f32.xlu0 %v1838
    %v1840 = vpop.xlane.xlu0 %1839
    %v1841 = vadd.f32 %v1755, %v1756
    %1842 = vadd.xlane.f32.xlu0 %v1841
    %v1843 = vpop.xlane.xlu0 %1842
    %v1844 = vadd.f32 %v1757, %v1758
    %1845 = vadd.xlane.f32.xlu0 %v1844
    %v1846 = vpop.xlane.xlu0 %1845
    %v1847 = vadd.f32 %v1759, %v1760
    %1848 = vadd.xlane.f32.xlu0 %v1847
    %v1849 = vpop.xlane.xlu0 %1848
    %v1850 = vadd.f32 %v1761, %v1762
    %1851 = vadd.xlane.f32.xlu0 %v1850
    %v1852 = vpop.xlane.xlu0 %1851
    %v1853 = vadd.f32 %v1763, %v1764
    %1854 = vadd.xlane.f32.xlu0 %v1853
    %v1855 = vpop.xlane.xlu0 %1854
    %v1856 = vadd.f32 %v1765, %v1766
    %1857 = vadd.xlane.f32.xlu0 %v1856
    %v1858 = vpop.xlane.xlu0 %1857
    %v1859 = vadd.f32 %v1767, %v1768
    %1860 = vadd.xlane.f32.xlu0 %v1859
    %v1861 = vpop.xlane.xlu0 %1860
    %v1862 = vadd.f32 %v1769, %v1770
    %1863 = vadd.xlane.f32.xlu0 %v1862
    %v1864 = vpop.xlane.xlu0 %1863
    %v1865 = vadd.f32 %v1771, %v1772
    %1866 = vadd.xlane.f32.xlu0 %v1865
    %v1867 = vpop.xlane.xlu0 %1866
    %v1868 = vadd.f32 %v1773, %v1774
    %1869 = vadd.xlane.f32.xlu0 %v1868
    %v1870 = vpop.xlane.xlu0 %1869
    %v1871 = vld [vmem:[#allocation2] sm:$0x1]
    %1873 = vset.pattern.permute.xlu0 0
    %1874 = vperm.xlu0 %1873, %v1871
    %v1875 = vpop.permute.xlu0 %1874
    %v1877 = vlaneseq
    %v1878 = vshrl.u32 %v1877, 7
    %v1879 = vsub.s32 0, %v1878
    %v1880 = vrot.slane %v1875, %v1879
    %v1881 = vadd.f32 %v1777, %v1880
    %v1882 = vadd.f32 %v1780, %v1880
    %v1883 = vadd.f32 %v1783, %v1880
    %v1884 = vadd.f32 %v1786, %v1880
    %v1885 = vadd.f32 %v1789, %v1880
    %v1886 = vadd.f32 %v1792, %v1880
    %v1887 = vadd.f32 %v1795, %v1880
    %v1888 = vadd.f32 %v1798, %v1880
    %v1889 = vadd.f32 %v1801, %v1880
    %v1890 = vadd.f32 %v1804, %v1880
    %v1891 = vadd.f32 %v1807, %v1880
    %v1892 = vadd.f32 %v1810, %v1880
    %v1893 = vadd.f32 %v1813, %v1880
    %v1894 = vadd.f32 %v1816, %v1880
    %v1895 = vadd.f32 %v1819, %v1880
    %v1896 = vadd.f32 %v1822, %v1880
    %v1897 = vadd.f32 %v1825, %v1880
    %v1898 = vadd.f32 %v1828, %v1880
    %v1899 = vadd.f32 %v1831, %v1880
    %v1900 = vadd.f32 %v1834, %v1880
    %v1901 = vadd.f32 %v1837, %v1880
    %v1902 = vadd.f32 %v1840, %v1880
    %v1903 = vadd.f32 %v1843, %v1880
    %v1904 = vadd.f32 %v1846, %v1880
    %v1905 = vadd.f32 %v1849, %v1880
    %v1906 = vadd.f32 %v1852, %v1880
    %v1907 = vadd.f32 %v1855, %v1880
    %v1908 = vadd.f32 %v1858, %v1880
    %v1909 = vadd.f32 %v1861, %v1880
    %v1910 = vadd.f32 %v1864, %v1880
    %v1911 = vadd.f32 %v1867, %v1880
    %v1912 = vadd.f32 %v1870, %v1880
    %v1913 = vsub.f32 0.0, %v1881
    %v1914 = vsub.f32 0.0, %v1882
    %v1915 = vsub.f32 0.0, %v1883
    %v1916 = vsub.f32 0.0, %v1884
    %v1917 = vsub.f32 0.0, %v1885
    %v1918 = vsub.f32 0.0, %v1886
    %v1919 = vsub.f32 0.0, %v1887
    %v1920 = vsub.f32 0.0, %v1888
    %v1921 = vsub.f32 0.0, %v1889
    %v1922 = vsub.f32 0.0, %v1890
    %v1923 = vsub.f32 0.0, %v1891
    %v1924 = vsub.f32 0.0, %v1892
    %v1925 = vsub.f32 0.0, %v1893
    %v1926 = vsub.f32 0.0, %v1894
    %v1927 = vsub.f32 0.0, %v1895
    %v1928 = vsub.f32 0.0, %v1896
    %v1929 = vsub.f32 0.0, %v1897
    %v1930 = vsub.f32 0.0, %v1898
    %v1931 = vsub.f32 0.0, %v1899
    %v1932 = vsub.f32 0.0, %v1900
    %v1933 = vsub.f32 0.0, %v1901
    %v1934 = vsub.f32 0.0, %v1902
    %v1935 = vsub.f32 0.0, %v1903
    %v1936 = vsub.f32 0.0, %v1904
    %v1937 = vsub.f32 0.0, %v1905
    %v1938 = vsub.f32 0.0, %v1906
    %v1939 = vsub.f32 0.0, %v1907
    %v1940 = vsub.f32 0.0, %v1908
    %v1941 = vsub.f32 0.0, %v1909
    %v1942 = vsub.f32 0.0, %v1910
    %v1943 = vsub.f32 0.0, %v1911
    %v1944 = vsub.f32 0.0, %v1912
    %v1945 = vmul.f32 %v1913, 1.442695
    %v1946 = vpow.pop %v1945
    %v1947 = vmul.f32 %v1914, 1.442695
    %v1948 = vpow.pop %v1947
    %v1949 = vmul.f32 %v1915, 1.442695
    %v1950 = vpow.pop %v1949
    %v1951 = vmul.f32 %v1916, 1.442695
    %v1952 = vpow.pop %v1951
    %v1953 = vmul.f32 %v1917, 1.442695
    %v1954 = vpow.pop %v1953
    %v1955 = vmul.f32 %v1918, 1.442695
    %v1956 = vpow.pop %v1955
    %v1957 = vmul.f32 %v1919, 1.442695
    %v1958 = vpow.pop %v1957
    %v1959 = vmul.f32 %v1920, 1.442695
    %v1960 = vpow.pop %v1959
    %v1961 = vmul.f32 %v1921, 1.442695
    %v1962 = vpow.pop %v1961
    %v1963 = vmul.f32 %v1922, 1.442695
    %v1964 = vpow.pop %v1963
    %v1965 = vmul.f32 %v1923, 1.442695
    %v1966 = vpow.pop %v1965
    %v1967 = vmul.f32 %v1924, 1.442695
    %v1968 = vpow.pop %v1967
    %v1969 = vmul.f32 %v1925, 1.442695
    %v1970 = vpow.pop %v1969
    %v1971 = vmul.f32 %v1926, 1.442695
    %v1972 = vpow.pop %v1971
    %v1973 = vmul.f32 %v1927, 1.442695
    %v1974 = vpow.pop %v1973
    %v1975 = vmul.f32 %v1928, 1.442695
    %v1976 = vpow.pop %v1975
    %v1977 = vmul.f32 %v1929, 1.442695
    %v1978 = vpow.pop %v1977
    %v1979 = vmul.f32 %v1930, 1.442695
    %v1980 = vpow.pop %v1979
    %v1981 = vmul.f32 %v1931, 1.442695
    %v1982 = vpow.pop %v1981
    %v1983 = vmul.f32 %v1932, 1.442695
    %v1984 = vpow.pop %v1983
    %v1985 = vmul.f32 %v1933, 1.442695
    %v1986 = vpow.pop %v1985
    %v1987 = vmul.f32 %v1934, 1.442695
    %v1988 = vpow.pop %v1987
    %v1989 = vmul.f32 %v1935, 1.442695
    %v1990 = vpow.pop %v1989
    %v1991 = vmul.f32 %v1936, 1.442695
    %v1992 = vpow.pop %v1991
    %v1993 = vmul.f32 %v1937, 1.442695
    %v1994 = vpow.pop %v1993
    %v1995 = vmul.f32 %v1938, 1.442695
    %v1996 = vpow.pop %v1995
    %v1997 = vmul.f32 %v1939, 1.442695
    %v1998 = vpow.pop %v1997
    %v1999 = vmul.f32 %v1940, 1.442695
    %v2000 = vpow.pop %v1999
    %v2001 = vmul.f32 %v1941, 1.442695
    %v2002 = vpow.pop %v2001
    %v2003 = vmul.f32 %v1942, 1.442695
    %v2004 = vpow.pop %v2003
    %v2005 = vmul.f32 %v1943, 1.442695
    %v2006 = vpow.pop %v2005
    %v2007 = vmul.f32 %v1944, 1.442695
    %v2008 = vpow.pop %v2007
    %v2009 = vadd.f32 %v1946, 1.0
    %v2010 = vadd.f32 %v1948, 1.0
    %v2011 = vadd.f32 %v1950, 1.0
    %v2012 = vadd.f32 %v1952, 1.0
    %v2013 = vadd.f32 %v1954, 1.0
    %v2014 = vadd.f32 %v1956, 1.0
    %v2015 = vadd.f32 %v1958, 1.0
    %v2016 = vadd.f32 %v1960, 1.0
    %v2017 = vadd.f32 %v1962, 1.0
    %v2018 = vadd.f32 %v1964, 1.0
    %v2019 = vadd.f32 %v1966, 1.0
    %v2020 = vadd.f32 %v1968, 1.0
    %v2021 = vadd.f32 %v1970, 1.0
    %v2022 = vadd.f32 %v1972, 1.0
    %v2023 = vadd.f32 %v1974, 1.0
    %v2024 = vadd.f32 %v1976, 1.0
    %v2025 = vadd.f32 %v1978, 1.0
    %v2026 = vadd.f32 %v1980, 1.0
    %v2027 = vadd.f32 %v1982, 1.0
    %v2028 = vadd.f32 %v1984, 1.0
    %v2029 = vadd.f32 %v1986, 1.0
    %v2030 = vadd.f32 %v1988, 1.0
    %v2031 = vadd.f32 %v1990, 1.0
    %v2032 = vadd.f32 %v1992, 1.0
    %v2033 = vadd.f32 %v1994, 1.0
    %v2034 = vadd.f32 %v1996, 1.0
    %v2035 = vadd.f32 %v1998, 1.0
    %v2036 = vadd.f32 %v2000, 1.0
    %v2037 = vadd.f32 %v2002, 1.0
    %v2038 = vadd.f32 %v2004, 1.0
    %v2039 = vadd.f32 %v2006, 1.0
    %v2040 = vadd.f32 %v2008, 1.0
    %v2041 = vrcp.pop %v2009
    %v2042 = vrcp.pop %v2010
    %v2043 = vrcp.pop %v2011
    %v2044 = vrcp.pop %v2012
    %v2045 = vrcp.pop %v2013
    %v2046 = vrcp.pop %v2014
    %v2047 = vrcp.pop %v2015
    %v2048 = vrcp.pop %v2016
    %v2049 = vrcp.pop %v2017
    %v2050 = vrcp.pop %v2018
    %v2051 = vrcp.pop %v2019
    %v2052 = vrcp.pop %v2020
    %v2053 = vrcp.pop %v2021
    %v2054 = vrcp.pop %v2022
    %v2055 = vrcp.pop %v2023
    %v2056 = vrcp.pop %v2024
    %v2057 = vrcp.pop %v2025
    %v2058 = vrcp.pop %v2026
    %v2059 = vrcp.pop %v2027
    %v2060 = vrcp.pop %v2028
    %v2061 = vrcp.pop %v2029
    %v2062 = vrcp.pop %v2030
    %v2063 = vrcp.pop %v2031
    %v2064 = vrcp.pop %v2032
    %v2065 = vrcp.pop %v2033
    %v2066 = vrcp.pop %v2034
    %v2067 = vrcp.pop %v2035
    %v2068 = vrcp.pop %v2036
    %v2069 = vrcp.pop %v2037
    %v2070 = vrcp.pop %v2038
    %v2071 = vrcp.pop %v2039
    %v2072 = vrcp.pop %v2040
    %v2105 = vlaneseq
    %v2106 = vshrl.u32 %v2105, 7
    %v2107 = vsub.s32 0, %v2106
    %v2108 = vrot.slane %v2041, %v2107
    %v2109 = vlaneseq
    %v2110 = vshrl.u32 %v2109, 7
    %v2111 = vsub.s32 1, %v2110
    %v2112 = vrot.slane %v2041, %v2111
    %v2113 = vlaneseq
    %v2114 = vshrl.u32 %v2113, 7
    %v2115 = vsub.s32 2, %v2114
    %v2116 = vrot.slane %v2041, %v2115
    %v2117 = vlaneseq
    %v2118 = vshrl.u32 %v2117, 7
    %v2119 = vsub.s32 3, %v2118
    %v2120 = vrot.slane %v2041, %v2119
    %v2121 = vlaneseq
    %v2122 = vshrl.u32 %v2121, 7
    %v2123 = vsub.s32 4, %v2122
    %v2124 = vrot.slane %v2041, %v2123
    %v2125 = vlaneseq
    %v2126 = vshrl.u32 %v2125, 7
    %v2127 = vsub.s32 5, %v2126
    %v2128 = vrot.slane %v2041, %v2127
    %v2129 = vlaneseq
    %v2130 = vshrl.u32 %v2129, 7
    %v2131 = vsub.s32 6, %v2130
    %v2132 = vrot.slane %v2041, %v2131
    %v2133 = vlaneseq
    %v2134 = vshrl.u32 %v2133, 7
    %v2135 = vsub.s32 7, %v2134
    %v2136 = vrot.slane %v2041, %v2135
    %v2137 = vlaneseq
    %v2138 = vshrl.u32 %v2137, 7
    %v2139 = vsub.s32 0, %v2138
    %v2140 = vrot.slane %v2042, %v2139
    %v2141 = vlaneseq
    %v2142 = vshrl.u32 %v2141, 7
    %v2143 = vsub.s32 1, %v2142
    %v2144 = vrot.slane %v2042, %v2143
    %v2145 = vlaneseq
    %v2146 = vshrl.u32 %v2145, 7
    %v2147 = vsub.s32 2, %v2146
    %v2148 = vrot.slane %v2042, %v2147
    %v2149 = vlaneseq
    %v2150 = vshrl.u32 %v2149, 7
    %v2151 = vsub.s32 3, %v2150
    %v2152 = vrot.slane %v2042, %v2151
    %v2153 = vlaneseq
    %v2154 = vshrl.u32 %v2153, 7
    %v2155 = vsub.s32 4, %v2154
    %v2156 = vrot.slane %v2042, %v2155
    %v2157 = vlaneseq
    %v2158 = vshrl.u32 %v2157, 7
    %v2159 = vsub.s32 5, %v2158
    %v2160 = vrot.slane %v2042, %v2159
    %v2161 = vlaneseq
    %v2162 = vshrl.u32 %v2161, 7
    %v2163 = vsub.s32 6, %v2162
    %v2164 = vrot.slane %v2042, %v2163
    %v2165 = vlaneseq
    %v2166 = vshrl.u32 %v2165, 7
    %v2167 = vsub.s32 7, %v2166
    %v2168 = vrot.slane %v2042, %v2167
    %v2169 = vlaneseq
    %v2170 = vshrl.u32 %v2169, 7
    %v2171 = vsub.s32 0, %v2170
    %v2172 = vrot.slane %v2043, %v2171
    %v2173 = vlaneseq
    %v2174 = vshrl.u32 %v2173, 7
    %v2175 = vsub.s32 1, %v2174
    %v2176 = vrot.slane %v2043, %v2175
    %v2177 = vlaneseq
    %v2178 = vshrl.u32 %v2177, 7
    %v2179 = vsub.s32 2, %v2178
    %v2180 = vrot.slane %v2043, %v2179
    %v2181 = vlaneseq
    %v2182 = vshrl.u32 %v2181, 7
    %v2183 = vsub.s32 3, %v2182
    %v2184 = vrot.slane %v2043, %v2183
    %v2185 = vlaneseq
    %v2186 = vshrl.u32 %v2185, 7
    %v2187 = vsub.s32 4, %v2186
    %v2188 = vrot.slane %v2043, %v2187
    %v2189 = vlaneseq
    %v2190 = vshrl.u32 %v2189, 7
    %v2191 = vsub.s32 5, %v2190
    %v2192 = vrot.slane %v2043, %v2191
    %v2193 = vlaneseq
    %v2194 = vshrl.u32 %v2193, 7
    %v2195 = vsub.s32 6, %v2194
    %v2196 = vrot.slane %v2043, %v2195
    %v2197 = vlaneseq
    %v2198 = vshrl.u32 %v2197, 7
    %v2199 = vsub.s32 7, %v2198
    %v2200 = vrot.slane %v2043, %v2199
    %v2201 = vlaneseq
    %v2202 = vshrl.u32 %v2201, 7
    %v2203 = vsub.s32 0, %v2202
    %v2204 = vrot.slane %v2044, %v2203
    %v2205 = vlaneseq
    %v2206 = vshrl.u32 %v2205, 7
    %v2207 = vsub.s32 1, %v2206
    %v2208 = vrot.slane %v2044, %v2207
    %v2209 = vlaneseq
    %v2210 = vshrl.u32 %v2209, 7
    %v2211 = vsub.s32 2, %v2210
    %v2212 = vrot.slane %v2044, %v2211
    %v2213 = vlaneseq
    %v2214 = vshrl.u32 %v2213, 7
    %v2215 = vsub.s32 3, %v2214
    %v2216 = vrot.slane %v2044, %v2215
    %v2217 = vlaneseq
    %v2218 = vshrl.u32 %v2217, 7
    %v2219 = vsub.s32 4, %v2218
    %v2220 = vrot.slane %v2044, %v2219
    %v2221 = vlaneseq
    %v2222 = vshrl.u32 %v2221, 7
    %v2223 = vsub.s32 5, %v2222
    %v2224 = vrot.slane %v2044, %v2223
    %v2225 = vlaneseq
    %v2226 = vshrl.u32 %v2225, 7
    %v2227 = vsub.s32 6, %v2226
    %v2228 = vrot.slane %v2044, %v2227
    %v2229 = vlaneseq
    %v2230 = vshrl.u32 %v2229, 7
    %v2231 = vsub.s32 7, %v2230
    %v2232 = vrot.slane %v2044, %v2231
    %v2233 = vlaneseq
    %v2234 = vshrl.u32 %v2233, 7
    %v2235 = vsub.s32 0, %v2234
    %v2236 = vrot.slane %v2045, %v2235
    %v2237 = vlaneseq
    %v2238 = vshrl.u32 %v2237, 7
    %v2239 = vsub.s32 1, %v2238
    %v2240 = vrot.slane %v2045, %v2239
    %v2241 = vlaneseq
    %v2242 = vshrl.u32 %v2241, 7
    %v2243 = vsub.s32 2, %v2242
    %v2244 = vrot.slane %v2045, %v2243
    %v2245 = vlaneseq
    %v2246 = vshrl.u32 %v2245, 7
    %v2247 = vsub.s32 3, %v2246
    %v2248 = vrot.slane %v2045, %v2247
    %v2249 = vlaneseq
    %v2250 = vshrl.u32 %v2249, 7
    %v2251 = vsub.s32 4, %v2250
    %v2252 = vrot.slane %v2045, %v2251
    %v2253 = vlaneseq
    %v2254 = vshrl.u32 %v2253, 7
    %v2255 = vsub.s32 5, %v2254
    %v2256 = vrot.slane %v2045, %v2255
    %v2257 = vlaneseq
    %v2258 = vshrl.u32 %v2257, 7
    %v2259 = vsub.s32 6, %v2258
    %v2260 = vrot.slane %v2045, %v2259
    %v2261 = vlaneseq
    %v2262 = vshrl.u32 %v2261, 7
    %v2263 = vsub.s32 7, %v2262
    %v2264 = vrot.slane %v2045, %v2263
    %v2265 = vlaneseq
    %v2266 = vshrl.u32 %v2265, 7
    %v2267 = vsub.s32 0, %v2266
    %v2268 = vrot.slane %v2046, %v2267
    %v2269 = vlaneseq
    %v2270 = vshrl.u32 %v2269, 7
    %v2271 = vsub.s32 1, %v2270
    %v2272 = vrot.slane %v2046, %v2271
    %v2273 = vlaneseq
    %v2274 = vshrl.u32 %v2273, 7
    %v2275 = vsub.s32 2, %v2274
    %v2276 = vrot.slane %v2046, %v2275
    %v2277 = vlaneseq
    %v2278 = vshrl.u32 %v2277, 7
    %v2279 = vsub.s32 3, %v2278
    %v2280 = vrot.slane %v2046, %v2279
    %v2281 = vlaneseq
    %v2282 = vshrl.u32 %v2281, 7
    %v2283 = vsub.s32 4, %v2282
    %v2284 = vrot.slane %v2046, %v2283
    %v2285 = vlaneseq
    %v2286 = vshrl.u32 %v2285, 7
    %v2287 = vsub.s32 5, %v2286
    %v2288 = vrot.slane %v2046, %v2287
    %v2289 = vlaneseq
    %v2290 = vshrl.u32 %v2289, 7
    %v2291 = vsub.s32 6, %v2290
    %v2292 = vrot.slane %v2046, %v2291
    %v2293 = vlaneseq
    %v2294 = vshrl.u32 %v2293, 7
    %v2295 = vsub.s32 7, %v2294
    %v2296 = vrot.slane %v2046, %v2295
    %v2297 = vlaneseq
    %v2298 = vshrl.u32 %v2297, 7
    %v2299 = vsub.s32 0, %v2298
    %v2300 = vrot.slane %v2047, %v2299
    %v2301 = vlaneseq
    %v2302 = vshrl.u32 %v2301, 7
    %v2303 = vsub.s32 1, %v2302
    %v2304 = vrot.slane %v2047, %v2303
    %v2305 = vlaneseq
    %v2306 = vshrl.u32 %v2305, 7
    %v2307 = vsub.s32 2, %v2306
    %v2308 = vrot.slane %v2047, %v2307
    %v2309 = vlaneseq
    %v2310 = vshrl.u32 %v2309, 7
    %v2311 = vsub.s32 3, %v2310
    %v2312 = vrot.slane %v2047, %v2311
    %v2313 = vlaneseq
    %v2314 = vshrl.u32 %v2313, 7
    %v2315 = vsub.s32 4, %v2314
    %v2316 = vrot.slane %v2047, %v2315
    %v2317 = vlaneseq
    %v2318 = vshrl.u32 %v2317, 7
    %v2319 = vsub.s32 5, %v2318
    %v2320 = vrot.slane %v2047, %v2319
    %v2321 = vlaneseq
    %v2322 = vshrl.u32 %v2321, 7
    %v2323 = vsub.s32 6, %v2322
    %v2324 = vrot.slane %v2047, %v2323
    %v2325 = vlaneseq
    %v2326 = vshrl.u32 %v2325, 7
    %v2327 = vsub.s32 7, %v2326
    %v2328 = vrot.slane %v2047, %v2327
    %v2329 = vlaneseq
    %v2330 = vshrl.u32 %v2329, 7
    %v2331 = vsub.s32 0, %v2330
    %v2332 = vrot.slane %v2048, %v2331
    %v2333 = vlaneseq
    %v2334 = vshrl.u32 %v2333, 7
    %v2335 = vsub.s32 1, %v2334
    %v2336 = vrot.slane %v2048, %v2335
    %v2337 = vlaneseq
    %v2338 = vshrl.u32 %v2337, 7
    %v2339 = vsub.s32 2, %v2338
    %v2340 = vrot.slane %v2048, %v2339
    %v2341 = vlaneseq
    %v2342 = vshrl.u32 %v2341, 7
    %v2343 = vsub.s32 3, %v2342
    %v2344 = vrot.slane %v2048, %v2343
    %v2345 = vlaneseq
    %v2346 = vshrl.u32 %v2345, 7
    %v2347 = vsub.s32 4, %v2346
    %v2348 = vrot.slane %v2048, %v2347
    %v2349 = vlaneseq
    %v2350 = vshrl.u32 %v2349, 7
    %v2351 = vsub.s32 5, %v2350
    %v2352 = vrot.slane %v2048, %v2351
    %v2353 = vlaneseq
    %v2354 = vshrl.u32 %v2353, 7
    %v2355 = vsub.s32 6, %v2354
    %v2356 = vrot.slane %v2048, %v2355
    %v2357 = vlaneseq
    %v2358 = vshrl.u32 %v2357, 7
    %v2359 = vsub.s32 7, %v2358
    %v2360 = vrot.slane %v2048, %v2359
    %v2361 = vlaneseq
    %v2362 = vshrl.u32 %v2361, 7
    %v2363 = vsub.s32 0, %v2362
    %v2364 = vrot.slane %v2049, %v2363
    %v2365 = vlaneseq
    %v2366 = vshrl.u32 %v2365, 7
    %v2367 = vsub.s32 1, %v2366
    %v2368 = vrot.slane %v2049, %v2367
    %v2369 = vlaneseq
    %v2370 = vshrl.u32 %v2369, 7
    %v2371 = vsub.s32 2, %v2370
    %v2372 = vrot.slane %v2049, %v2371
    %v2373 = vlaneseq
    %v2374 = vshrl.u32 %v2373, 7
    %v2375 = vsub.s32 3, %v2374
    %v2376 = vrot.slane %v2049, %v2375
    %v2377 = vlaneseq
    %v2378 = vshrl.u32 %v2377, 7
    %v2379 = vsub.s32 4, %v2378
    %v2380 = vrot.slane %v2049, %v2379
    %v2381 = vlaneseq
    %v2382 = vshrl.u32 %v2381, 7
    %v2383 = vsub.s32 5, %v2382
    %v2384 = vrot.slane %v2049, %v2383
    %v2385 = vlaneseq
    %v2386 = vshrl.u32 %v2385, 7
    %v2387 = vsub.s32 6, %v2386
    %v2388 = vrot.slane %v2049, %v2387
    %v2389 = vlaneseq
    %v2390 = vshrl.u32 %v2389, 7
    %v2391 = vsub.s32 7, %v2390
    %v2392 = vrot.slane %v2049, %v2391
    %v2393 = vlaneseq
    %v2394 = vshrl.u32 %v2393, 7
    %v2395 = vsub.s32 0, %v2394
    %v2396 = vrot.slane %v2050, %v2395
    %v2397 = vlaneseq
    %v2398 = vshrl.u32 %v2397, 7
    %v2399 = vsub.s32 1, %v2398
    %v2400 = vrot.slane %v2050, %v2399
    %v2401 = vlaneseq
    %v2402 = vshrl.u32 %v2401, 7
    %v2403 = vsub.s32 2, %v2402
    %v2404 = vrot.slane %v2050, %v2403
    %v2405 = vlaneseq
    %v2406 = vshrl.u32 %v2405, 7
    %v2407 = vsub.s32 3, %v2406
    %v2408 = vrot.slane %v2050, %v2407
    %v2409 = vlaneseq
    %v2410 = vshrl.u32 %v2409, 7
    %v2411 = vsub.s32 4, %v2410
    %v2412 = vrot.slane %v2050, %v2411
    %v2413 = vlaneseq
    %v2414 = vshrl.u32 %v2413, 7
    %v2415 = vsub.s32 5, %v2414
    %v2416 = vrot.slane %v2050, %v2415
    %v2417 = vlaneseq
    %v2418 = vshrl.u32 %v2417, 7
    %v2419 = vsub.s32 6, %v2418
    %v2420 = vrot.slane %v2050, %v2419
    %v2421 = vlaneseq
    %v2422 = vshrl.u32 %v2421, 7
    %v2423 = vsub.s32 7, %v2422
    %v2424 = vrot.slane %v2050, %v2423
    %v2425 = vlaneseq
    %v2426 = vshrl.u32 %v2425, 7
    %v2427 = vsub.s32 0, %v2426
    %v2428 = vrot.slane %v2051, %v2427
    %v2429 = vlaneseq
    %v2430 = vshrl.u32 %v2429, 7
    %v2431 = vsub.s32 1, %v2430
    %v2432 = vrot.slane %v2051, %v2431
    %v2433 = vlaneseq
    %v2434 = vshrl.u32 %v2433, 7
    %v2435 = vsub.s32 2, %v2434
    %v2436 = vrot.slane %v2051, %v2435
    %v2437 = vlaneseq
    %v2438 = vshrl.u32 %v2437, 7
    %v2439 = vsub.s32 3, %v2438
    %v2440 = vrot.slane %v2051, %v2439
    %v2441 = vlaneseq
    %v2442 = vshrl.u32 %v2441, 7
    %v2443 = vsub.s32 4, %v2442
    %v2444 = vrot.slane %v2051, %v2443
    %v2445 = vlaneseq
    %v2446 = vshrl.u32 %v2445, 7
    %v2447 = vsub.s32 5, %v2446
    %v2448 = vrot.slane %v2051, %v2447
    %v2449 = vlaneseq
    %v2450 = vshrl.u32 %v2449, 7
    %v2451 = vsub.s32 6, %v2450
    %v2452 = vrot.slane %v2051, %v2451
    %v2453 = vlaneseq
    %v2454 = vshrl.u32 %v2453, 7
    %v2455 = vsub.s32 7, %v2454
    %v2456 = vrot.slane %v2051, %v2455
    %v2457 = vlaneseq
    %v2458 = vshrl.u32 %v2457, 7
    %v2459 = vsub.s32 0, %v2458
    %v2460 = vrot.slane %v2052, %v2459
    %v2461 = vlaneseq
    %v2462 = vshrl.u32 %v2461, 7
    %v2463 = vsub.s32 1, %v2462
    %v2464 = vrot.slane %v2052, %v2463
    %v2465 = vlaneseq
    %v2466 = vshrl.u32 %v2465, 7
    %v2467 = vsub.s32 2, %v2466
    %v2468 = vrot.slane %v2052, %v2467
    %v2469 = vlaneseq
    %v2470 = vshrl.u32 %v2469, 7
    %v2471 = vsub.s32 3, %v2470
    %v2472 = vrot.slane %v2052, %v2471
    %v2473 = vlaneseq
    %v2474 = vshrl.u32 %v2473, 7
    %v2475 = vsub.s32 4, %v2474
    %v2476 = vrot.slane %v2052, %v2475
    %v2477 = vlaneseq
    %v2478 = vshrl.u32 %v2477, 7
    %v2479 = vsub.s32 5, %v2478
    %v2480 = vrot.slane %v2052, %v2479
    %v2481 = vlaneseq
    %v2482 = vshrl.u32 %v2481, 7
    %v2483 = vsub.s32 6, %v2482
    %v2484 = vrot.slane %v2052, %v2483
    %v2485 = vlaneseq
    %v2486 = vshrl.u32 %v2485, 7
    %v2487 = vsub.s32 7, %v2486
    %v2488 = vrot.slane %v2052, %v2487
    %v2489 = vlaneseq
    %v2490 = vshrl.u32 %v2489, 7
    %v2491 = vsub.s32 0, %v2490
    %v2492 = vrot.slane %v2053, %v2491
    %v2493 = vlaneseq
    %v2494 = vshrl.u32 %v2493, 7
    %v2495 = vsub.s32 1, %v2494
    %v2496 = vrot.slane %v2053, %v2495
    %v2497 = vlaneseq
    %v2498 = vshrl.u32 %v2497, 7
    %v2499 = vsub.s32 2, %v2498
    %v2500 = vrot.slane %v2053, %v2499
    %v2501 = vlaneseq
    %v2502 = vshrl.u32 %v2501, 7
    %v2503 = vsub.s32 3, %v2502
    %v2504 = vrot.slane %v2053, %v2503
    %v2505 = vlaneseq
    %v2506 = vshrl.u32 %v2505, 7
    %v2507 = vsub.s32 4, %v2506
    %v2508 = vrot.slane %v2053, %v2507
    %v2509 = vlaneseq
    %v2510 = vshrl.u32 %v2509, 7
    %v2511 = vsub.s32 5, %v2510
    %v2512 = vrot.slane %v2053, %v2511
    %v2513 = vlaneseq
    %v2514 = vshrl.u32 %v2513, 7
    %v2515 = vsub.s32 6, %v2514
    %v2516 = vrot.slane %v2053, %v2515
    %v2517 = vlaneseq
    %v2518 = vshrl.u32 %v2517, 7
    %v2519 = vsub.s32 7, %v2518
    %v2520 = vrot.slane %v2053, %v2519
    %v2521 = vlaneseq
    %v2522 = vshrl.u32 %v2521, 7
    %v2523 = vsub.s32 0, %v2522
    %v2524 = vrot.slane %v2054, %v2523
    %v2525 = vlaneseq
    %v2526 = vshrl.u32 %v2525, 7
    %v2527 = vsub.s32 1, %v2526
    %v2528 = vrot.slane %v2054, %v2527
    %v2529 = vlaneseq
    %v2530 = vshrl.u32 %v2529, 7
    %v2531 = vsub.s32 2, %v2530
    %v2532 = vrot.slane %v2054, %v2531
    %v2533 = vlaneseq
    %v2534 = vshrl.u32 %v2533, 7
    %v2535 = vsub.s32 3, %v2534
    %v2536 = vrot.slane %v2054, %v2535
    %v2537 = vlaneseq
    %v2538 = vshrl.u32 %v2537, 7
    %v2539 = vsub.s32 4, %v2538
    %v2540 = vrot.slane %v2054, %v2539
    %v2541 = vlaneseq
    %v2542 = vshrl.u32 %v2541, 7
    %v2543 = vsub.s32 5, %v2542
    %v2544 = vrot.slane %v2054, %v2543
    %v2545 = vlaneseq
    %v2546 = vshrl.u32 %v2545, 7
    %v2547 = vsub.s32 6, %v2546
    %v2548 = vrot.slane %v2054, %v2547
    %v2549 = vlaneseq
    %v2550 = vshrl.u32 %v2549, 7
    %v2551 = vsub.s32 7, %v2550
    %v2552 = vrot.slane %v2054, %v2551
    %v2553 = vlaneseq
    %v2554 = vshrl.u32 %v2553, 7
    %v2555 = vsub.s32 0, %v2554
    %v2556 = vrot.slane %v2055, %v2555
    %v2557 = vlaneseq
    %v2558 = vshrl.u32 %v2557, 7
    %v2559 = vsub.s32 1, %v2558
    %v2560 = vrot.slane %v2055, %v2559
    %v2561 = vlaneseq
    %v2562 = vshrl.u32 %v2561, 7
    %v2563 = vsub.s32 2, %v2562
    %v2564 = vrot.slane %v2055, %v2563
    %v2565 = vlaneseq
    %v2566 = vshrl.u32 %v2565, 7
    %v2567 = vsub.s32 3, %v2566
    %v2568 = vrot.slane %v2055, %v2567
    %v2569 = vlaneseq
    %v2570 = vshrl.u32 %v2569, 7
    %v2571 = vsub.s32 4, %v2570
    %v2572 = vrot.slane %v2055, %v2571
    %v2573 = vlaneseq
    %v2574 = vshrl.u32 %v2573, 7
    %v2575 = vsub.s32 5, %v2574
    %v2576 = vrot.slane %v2055, %v2575
    %v2577 = vlaneseq
    %v2578 = vshrl.u32 %v2577, 7
    %v2579 = vsub.s32 6, %v2578
    %v2580 = vrot.slane %v2055, %v2579
    %v2581 = vlaneseq
    %v2582 = vshrl.u32 %v2581, 7
    %v2583 = vsub.s32 7, %v2582
    %v2584 = vrot.slane %v2055, %v2583
    %v2585 = vlaneseq
    %v2586 = vshrl.u32 %v2585, 7
    %v2587 = vsub.s32 0, %v2586
    %v2588 = vrot.slane %v2056, %v2587
    %v2589 = vlaneseq
    %v2590 = vshrl.u32 %v2589, 7
    %v2591 = vsub.s32 1, %v2590
    %v2592 = vrot.slane %v2056, %v2591
    %v2593 = vlaneseq
    %v2594 = vshrl.u32 %v2593, 7
    %v2595 = vsub.s32 2, %v2594
    %v2596 = vrot.slane %v2056, %v2595
    %v2597 = vlaneseq
    %v2598 = vshrl.u32 %v2597, 7
    %v2599 = vsub.s32 3, %v2598
    %v2600 = vrot.slane %v2056, %v2599
    %v2601 = vlaneseq
    %v2602 = vshrl.u32 %v2601, 7
    %v2603 = vsub.s32 4, %v2602
    %v2604 = vrot.slane %v2056, %v2603
    %v2605 = vlaneseq
    %v2606 = vshrl.u32 %v2605, 7
    %v2607 = vsub.s32 5, %v2606
    %v2608 = vrot.slane %v2056, %v2607
    %v2609 = vlaneseq
    %v2610 = vshrl.u32 %v2609, 7
    %v2611 = vsub.s32 6, %v2610
    %v2612 = vrot.slane %v2056, %v2611
    %v2613 = vlaneseq
    %v2614 = vshrl.u32 %v2613, 7
    %v2615 = vsub.s32 7, %v2614
    %v2616 = vrot.slane %v2056, %v2615
    %v2617 = vlaneseq
    %v2618 = vshrl.u32 %v2617, 7
    %v2619 = vsub.s32 0, %v2618
    %v2620 = vrot.slane %v2057, %v2619
    %v2621 = vlaneseq
    %v2622 = vshrl.u32 %v2621, 7
    %v2623 = vsub.s32 1, %v2622
    %v2624 = vrot.slane %v2057, %v2623
    %v2625 = vlaneseq
    %v2626 = vshrl.u32 %v2625, 7
    %v2627 = vsub.s32 2, %v2626
    %v2628 = vrot.slane %v2057, %v2627
    %v2629 = vlaneseq
    %v2630 = vshrl.u32 %v2629, 7
    %v2631 = vsub.s32 3, %v2630
    %v2632 = vrot.slane %v2057, %v2631
    %v2633 = vlaneseq
    %v2634 = vshrl.u32 %v2633, 7
    %v2635 = vsub.s32 4, %v2634
    %v2636 = vrot.slane %v2057, %v2635
    %v2637 = vlaneseq
    %v2638 = vshrl.u32 %v2637, 7
    %v2639 = vsub.s32 5, %v2638
    %v2640 = vrot.slane %v2057, %v2639
    %v2641 = vlaneseq
    %v2642 = vshrl.u32 %v2641, 7
    %v2643 = vsub.s32 6, %v2642
    %v2644 = vrot.slane %v2057, %v2643
    %v2645 = vlaneseq
    %v2646 = vshrl.u32 %v2645, 7
    %v2647 = vsub.s32 7, %v2646
    %v2648 = vrot.slane %v2057, %v2647
    %v2649 = vlaneseq
    %v2650 = vshrl.u32 %v2649, 7
    %v2651 = vsub.s32 0, %v2650
    %v2652 = vrot.slane %v2058, %v2651
    %v2653 = vlaneseq
    %v2654 = vshrl.u32 %v2653, 7
    %v2655 = vsub.s32 1, %v2654
    %v2656 = vrot.slane %v2058, %v2655
    %v2657 = vlaneseq
    %v2658 = vshrl.u32 %v2657, 7
    %v2659 = vsub.s32 2, %v2658
    %v2660 = vrot.slane %v2058, %v2659
    %v2661 = vlaneseq
    %v2662 = vshrl.u32 %v2661, 7
    %v2663 = vsub.s32 3, %v2662
    %v2664 = vrot.slane %v2058, %v2663
    %v2665 = vlaneseq
    %v2666 = vshrl.u32 %v2665, 7
    %v2667 = vsub.s32 4, %v2666
    %v2668 = vrot.slane %v2058, %v2667
    %v2669 = vlaneseq
    %v2670 = vshrl.u32 %v2669, 7
    %v2671 = vsub.s32 5, %v2670
    %v2672 = vrot.slane %v2058, %v2671
    %v2673 = vlaneseq
    %v2674 = vshrl.u32 %v2673, 7
    %v2675 = vsub.s32 6, %v2674
    %v2676 = vrot.slane %v2058, %v2675
    %v2677 = vlaneseq
    %v2678 = vshrl.u32 %v2677, 7
    %v2679 = vsub.s32 7, %v2678
    %v2680 = vrot.slane %v2058, %v2679
    %v2681 = vlaneseq
    %v2682 = vshrl.u32 %v2681, 7
    %v2683 = vsub.s32 0, %v2682
    %v2684 = vrot.slane %v2059, %v2683
    %v2685 = vlaneseq
    %v2686 = vshrl.u32 %v2685, 7
    %v2687 = vsub.s32 1, %v2686
    %v2688 = vrot.slane %v2059, %v2687
    %v2689 = vlaneseq
    %v2690 = vshrl.u32 %v2689, 7
    %v2691 = vsub.s32 2, %v2690
    %v2692 = vrot.slane %v2059, %v2691
    %v2693 = vlaneseq
    %v2694 = vshrl.u32 %v2693, 7
    %v2695 = vsub.s32 3, %v2694
    %v2696 = vrot.slane %v2059, %v2695
    %v2697 = vlaneseq
    %v2698 = vshrl.u32 %v2697, 7
    %v2699 = vsub.s32 4, %v2698
    %v2700 = vrot.slane %v2059, %v2699
    %v2701 = vlaneseq
    %v2702 = vshrl.u32 %v2701, 7
    %v2703 = vsub.s32 5, %v2702
    %v2704 = vrot.slane %v2059, %v2703
    %v2705 = vlaneseq
    %v2706 = vshrl.u32 %v2705, 7
    %v2707 = vsub.s32 6, %v2706
    %v2708 = vrot.slane %v2059, %v2707
    %v2709 = vlaneseq
    %v2710 = vshrl.u32 %v2709, 7
    %v2711 = vsub.s32 7, %v2710
    %v2712 = vrot.slane %v2059, %v2711
    %v2713 = vlaneseq
    %v2714 = vshrl.u32 %v2713, 7
    %v2715 = vsub.s32 0, %v2714
    %v2716 = vrot.slane %v2060, %v2715
    %v2717 = vlaneseq
    %v2718 = vshrl.u32 %v2717, 7
    %v2719 = vsub.s32 1, %v2718
    %v2720 = vrot.slane %v2060, %v2719
    %v2721 = vlaneseq
    %v2722 = vshrl.u32 %v2721, 7
    %v2723 = vsub.s32 2, %v2722
    %v2724 = vrot.slane %v2060, %v2723
    %v2725 = vlaneseq
    %v2726 = vshrl.u32 %v2725, 7
    %v2727 = vsub.s32 3, %v2726
    %v2728 = vrot.slane %v2060, %v2727
    %v2729 = vlaneseq
    %v2730 = vshrl.u32 %v2729, 7
    %v2731 = vsub.s32 4, %v2730
    %v2732 = vrot.slane %v2060, %v2731
    %v2733 = vlaneseq
    %v2734 = vshrl.u32 %v2733, 7
    %v2735 = vsub.s32 5, %v2734
    %v2736 = vrot.slane %v2060, %v2735
    %v2737 = vlaneseq
    %v2738 = vshrl.u32 %v2737, 7
    %v2739 = vsub.s32 6, %v2738
    %v2740 = vrot.slane %v2060, %v2739
    %v2741 = vlaneseq
    %v2742 = vshrl.u32 %v2741, 7
    %v2743 = vsub.s32 7, %v2742
    %v2744 = vrot.slane %v2060, %v2743
    %v2745 = vlaneseq
    %v2746 = vshrl.u32 %v2745, 7
    %v2747 = vsub.s32 0, %v2746
    %v2748 = vrot.slane %v2061, %v2747
    %v2749 = vlaneseq
    %v2750 = vshrl.u32 %v2749, 7
    %v2751 = vsub.s32 1, %v2750
    %v2752 = vrot.slane %v2061, %v2751
    %v2753 = vlaneseq
    %v2754 = vshrl.u32 %v2753, 7
    %v2755 = vsub.s32 2, %v2754
    %v2756 = vrot.slane %v2061, %v2755
    %v2757 = vlaneseq
    %v2758 = vshrl.u32 %v2757, 7
    %v2759 = vsub.s32 3, %v2758
    %v2760 = vrot.slane %v2061, %v2759
    %v2761 = vlaneseq
    %v2762 = vshrl.u32 %v2761, 7
    %v2763 = vsub.s32 4, %v2762
    %v2764 = vrot.slane %v2061, %v2763
    %v2765 = vlaneseq
    %v2766 = vshrl.u32 %v2765, 7
    %v2767 = vsub.s32 5, %v2766
    %v2768 = vrot.slane %v2061, %v2767
    %v2769 = vlaneseq
    %v2770 = vshrl.u32 %v2769, 7
    %v2771 = vsub.s32 6, %v2770
    %v2772 = vrot.slane %v2061, %v2771
    %v2773 = vlaneseq
    %v2774 = vshrl.u32 %v2773, 7
    %v2775 = vsub.s32 7, %v2774
    %v2776 = vrot.slane %v2061, %v2775
    %v2777 = vlaneseq
    %v2778 = vshrl.u32 %v2777, 7
    %v2779 = vsub.s32 0, %v2778
    %v2780 = vrot.slane %v2062, %v2779
    %v2781 = vlaneseq
    %v2782 = vshrl.u32 %v2781, 7
    %v2783 = vsub.s32 1, %v2782
    %v2784 = vrot.slane %v2062, %v2783
    %v2785 = vlaneseq
    %v2786 = vshrl.u32 %v2785, 7
    %v2787 = vsub.s32 2, %v2786
    %v2788 = vrot.slane %v2062, %v2787
    %v2789 = vlaneseq
    %v2790 = vshrl.u32 %v2789, 7
    %v2791 = vsub.s32 3, %v2790
    %v2792 = vrot.slane %v2062, %v2791
    %v2793 = vlaneseq
    %v2794 = vshrl.u32 %v2793, 7
    %v2795 = vsub.s32 4, %v2794
    %v2796 = vrot.slane %v2062, %v2795
    %v2797 = vlaneseq
    %v2798 = vshrl.u32 %v2797, 7
    %v2799 = vsub.s32 5, %v2798
    %v2800 = vrot.slane %v2062, %v2799
    %v2801 = vlaneseq
    %v2802 = vshrl.u32 %v2801, 7
    %v2803 = vsub.s32 6, %v2802
    %v2804 = vrot.slane %v2062, %v2803
    %v2805 = vlaneseq
    %v2806 = vshrl.u32 %v2805, 7
    %v2807 = vsub.s32 7, %v2806
    %v2808 = vrot.slane %v2062, %v2807
    %v2809 = vlaneseq
    %v2810 = vshrl.u32 %v2809, 7
    %v2811 = vsub.s32 0, %v2810
    %v2812 = vrot.slane %v2063, %v2811
    %v2813 = vlaneseq
    %v2814 = vshrl.u32 %v2813, 7
    %v2815 = vsub.s32 1, %v2814
    %v2816 = vrot.slane %v2063, %v2815
    %v2817 = vlaneseq
    %v2818 = vshrl.u32 %v2817, 7
    %v2819 = vsub.s32 2, %v2818
    %v2820 = vrot.slane %v2063, %v2819
    %v2821 = vlaneseq
    %v2822 = vshrl.u32 %v2821, 7
    %v2823 = vsub.s32 3, %v2822
    %v2824 = vrot.slane %v2063, %v2823
    %v2825 = vlaneseq
    %v2826 = vshrl.u32 %v2825, 7
    %v2827 = vsub.s32 4, %v2826
    %v2828 = vrot.slane %v2063, %v2827
    %v2829 = vlaneseq
    %v2830 = vshrl.u32 %v2829, 7
    %v2831 = vsub.s32 5, %v2830
    %v2832 = vrot.slane %v2063, %v2831
    %v2833 = vlaneseq
    %v2834 = vshrl.u32 %v2833, 7
    %v2835 = vsub.s32 6, %v2834
    %v2836 = vrot.slane %v2063, %v2835
    %v2837 = vlaneseq
    %v2838 = vshrl.u32 %v2837, 7
    %v2839 = vsub.s32 7, %v2838
    %v2840 = vrot.slane %v2063, %v2839
    %v2841 = vlaneseq
    %v2842 = vshrl.u32 %v2841, 7
    %v2843 = vsub.s32 0, %v2842
    %v2844 = vrot.slane %v2064, %v2843
    %v2845 = vlaneseq
    %v2846 = vshrl.u32 %v2845, 7
    %v2847 = vsub.s32 1, %v2846
    %v2848 = vrot.slane %v2064, %v2847
    %v2849 = vlaneseq
    %v2850 = vshrl.u32 %v2849, 7
    %v2851 = vsub.s32 2, %v2850
    %v2852 = vrot.slane %v2064, %v2851
    %v2853 = vlaneseq
    %v2854 = vshrl.u32 %v2853, 7
    %v2855 = vsub.s32 3, %v2854
    %v2856 = vrot.slane %v2064, %v2855
    %v2857 = vlaneseq
    %v2858 = vshrl.u32 %v2857, 7
    %v2859 = vsub.s32 4, %v2858
    %v2860 = vrot.slane %v2064, %v2859
    %v2861 = vlaneseq
    %v2862 = vshrl.u32 %v2861, 7
    %v2863 = vsub.s32 5, %v2862
    %v2864 = vrot.slane %v2064, %v2863
    %v2865 = vlaneseq
    %v2866 = vshrl.u32 %v2865, 7
    %v2867 = vsub.s32 6, %v2866
    %v2868 = vrot.slane %v2064, %v2867
    %v2869 = vlaneseq
    %v2870 = vshrl.u32 %v2869, 7
    %v2871 = vsub.s32 7, %v2870
    %v2872 = vrot.slane %v2064, %v2871
    %v2873 = vlaneseq
    %v2874 = vshrl.u32 %v2873, 7
    %v2875 = vsub.s32 0, %v2874
    %v2876 = vrot.slane %v2065, %v2875
    %v2877 = vlaneseq
    %v2878 = vshrl.u32 %v2877, 7
    %v2879 = vsub.s32 1, %v2878
    %v2880 = vrot.slane %v2065, %v2879
    %v2881 = vlaneseq
    %v2882 = vshrl.u32 %v2881, 7
    %v2883 = vsub.s32 2, %v2882
    %v2884 = vrot.slane %v2065, %v2883
    %v2885 = vlaneseq
    %v2886 = vshrl.u32 %v2885, 7
    %v2887 = vsub.s32 3, %v2886
    %v2888 = vrot.slane %v2065, %v2887
    %v2889 = vlaneseq
    %v2890 = vshrl.u32 %v2889, 7
    %v2891 = vsub.s32 4, %v2890
    %v2892 = vrot.slane %v2065, %v2891
    %v2893 = vlaneseq
    %v2894 = vshrl.u32 %v2893, 7
    %v2895 = vsub.s32 5, %v2894
    %v2896 = vrot.slane %v2065, %v2895
    %v2897 = vlaneseq
    %v2898 = vshrl.u32 %v2897, 7
    %v2899 = vsub.s32 6, %v2898
    %v2900 = vrot.slane %v2065, %v2899
    %v2901 = vlaneseq
    %v2902 = vshrl.u32 %v2901, 7
    %v2903 = vsub.s32 7, %v2902
    %v2904 = vrot.slane %v2065, %v2903
    %v2905 = vlaneseq
    %v2906 = vshrl.u32 %v2905, 7
    %v2907 = vsub.s32 0, %v2906
    %v2908 = vrot.slane %v2066, %v2907
    %v2909 = vlaneseq
    %v2910 = vshrl.u32 %v2909, 7
    %v2911 = vsub.s32 1, %v2910
    %v2912 = vrot.slane %v2066, %v2911
    %v2913 = vlaneseq
    %v2914 = vshrl.u32 %v2913, 7
    %v2915 = vsub.s32 2, %v2914
    %v2916 = vrot.slane %v2066, %v2915
    %v2917 = vlaneseq
    %v2918 = vshrl.u32 %v2917, 7
    %v2919 = vsub.s32 3, %v2918
    %v2920 = vrot.slane %v2066, %v2919
    %v2921 = vlaneseq
    %v2922 = vshrl.u32 %v2921, 7
    %v2923 = vsub.s32 4, %v2922
    %v2924 = vrot.slane %v2066, %v2923
    %v2925 = vlaneseq
    %v2926 = vshrl.u32 %v2925, 7
    %v2927 = vsub.s32 5, %v2926
    %v2928 = vrot.slane %v2066, %v2927
    %v2929 = vlaneseq
    %v2930 = vshrl.u32 %v2929, 7
    %v2931 = vsub.s32 6, %v2930
    %v2932 = vrot.slane %v2066, %v2931
    %v2933 = vlaneseq
    %v2934 = vshrl.u32 %v2933, 7
    %v2935 = vsub.s32 7, %v2934
    %v2936 = vrot.slane %v2066, %v2935
    %v2937 = vlaneseq
    %v2938 = vshrl.u32 %v2937, 7
    %v2939 = vsub.s32 0, %v2938
    %v2940 = vrot.slane %v2067, %v2939
    %v2941 = vlaneseq
    %v2942 = vshrl.u32 %v2941, 7
    %v2943 = vsub.s32 1, %v2942
    %v2944 = vrot.slane %v2067, %v2943
    %v2945 = vlaneseq
    %v2946 = vshrl.u32 %v2945, 7
    %v2947 = vsub.s32 2, %v2946
    %v2948 = vrot.slane %v2067, %v2947
    %v2949 = vlaneseq
    %v2950 = vshrl.u32 %v2949, 7
    %v2951 = vsub.s32 3, %v2950
    %v2952 = vrot.slane %v2067, %v2951
    %v2953 = vlaneseq
    %v2954 = vshrl.u32 %v2953, 7
    %v2955 = vsub.s32 4, %v2954
    %v2956 = vrot.slane %v2067, %v2955
    %v2957 = vlaneseq
    %v2958 = vshrl.u32 %v2957, 7
    %v2959 = vsub.s32 5, %v2958
    %v2960 = vrot.slane %v2067, %v2959
    %v2961 = vlaneseq
    %v2962 = vshrl.u32 %v2961, 7
    %v2963 = vsub.s32 6, %v2962
    %v2964 = vrot.slane %v2067, %v2963
    %v2965 = vlaneseq
    %v2966 = vshrl.u32 %v2965, 7
    %v2967 = vsub.s32 7, %v2966
    %v2968 = vrot.slane %v2067, %v2967
    %v2969 = vlaneseq
    %v2970 = vshrl.u32 %v2969, 7
    %v2971 = vsub.s32 0, %v2970
    %v2972 = vrot.slane %v2068, %v2971
    %v2973 = vlaneseq
    %v2974 = vshrl.u32 %v2973, 7
    %v2975 = vsub.s32 1, %v2974
    %v2976 = vrot.slane %v2068, %v2975
    %v2977 = vlaneseq
    %v2978 = vshrl.u32 %v2977, 7
    %v2979 = vsub.s32 2, %v2978
    %v2980 = vrot.slane %v2068, %v2979
    %v2981 = vlaneseq
    %v2982 = vshrl.u32 %v2981, 7
    %v2983 = vsub.s32 3, %v2982
    %v2984 = vrot.slane %v2068, %v2983
    %v2985 = vlaneseq
    %v2986 = vshrl.u32 %v2985, 7
    %v2987 = vsub.s32 4, %v2986
    %v2988 = vrot.slane %v2068, %v2987
    %v2989 = vlaneseq
    %v2990 = vshrl.u32 %v2989, 7
    %v2991 = vsub.s32 5, %v2990
    %v2992 = vrot.slane %v2068, %v2991
    %v2993 = vlaneseq
    %v2994 = vshrl.u32 %v2993, 7
    %v2995 = vsub.s32 6, %v2994
    %v2996 = vrot.slane %v2068, %v2995
    %v2997 = vlaneseq
    %v2998 = vshrl.u32 %v2997, 7
    %v2999 = vsub.s32 7, %v2998
    %v3000 = vrot.slane %v2068, %v2999
    %v3001 = vlaneseq
    %v3002 = vshrl.u32 %v3001, 7
    %v3003 = vsub.s32 0, %v3002
    %v3004 = vrot.slane %v2069, %v3003
    %v3005 = vlaneseq
    %v3006 = vshrl.u32 %v3005, 7
    %v3007 = vsub.s32 1, %v3006
    %v3008 = vrot.slane %v2069, %v3007
    %v3009 = vlaneseq
    %v3010 = vshrl.u32 %v3009, 7
    %v3011 = vsub.s32 2, %v3010
    %v3012 = vrot.slane %v2069, %v3011
    %v3013 = vlaneseq
    %v3014 = vshrl.u32 %v3013, 7
    %v3015 = vsub.s32 3, %v3014
    %v3016 = vrot.slane %v2069, %v3015
    %v3017 = vlaneseq
    %v3018 = vshrl.u32 %v3017, 7
    %v3019 = vsub.s32 4, %v3018
    %v3020 = vrot.slane %v2069, %v3019
    %v3021 = vlaneseq
    %v3022 = vshrl.u32 %v3021, 7
    %v3023 = vsub.s32 5, %v3022
    %v3024 = vrot.slane %v2069, %v3023
    %v3025 = vlaneseq
    %v3026 = vshrl.u32 %v3025, 7
    %v3027 = vsub.s32 6, %v3026
    %v3028 = vrot.slane %v2069, %v3027
    %v3029 = vlaneseq
    %v3030 = vshrl.u32 %v3029, 7
    %v3031 = vsub.s32 7, %v3030
    %v3032 = vrot.slane %v2069, %v3031
    %v3033 = vlaneseq
    %v3034 = vshrl.u32 %v3033, 7
    %v3035 = vsub.s32 0, %v3034
    %v3036 = vrot.slane %v2070, %v3035
    %v3037 = vlaneseq
    %v3038 = vshrl.u32 %v3037, 7
    %v3039 = vsub.s32 1, %v3038
    %v3040 = vrot.slane %v2070, %v3039
    %v3041 = vlaneseq
    %v3042 = vshrl.u32 %v3041, 7
    %v3043 = vsub.s32 2, %v3042
    %v3044 = vrot.slane %v2070, %v3043
    %v3045 = vlaneseq
    %v3046 = vshrl.u32 %v3045, 7
    %v3047 = vsub.s32 3, %v3046
    %v3048 = vrot.slane %v2070, %v3047
    %v3049 = vlaneseq
    %v3050 = vshrl.u32 %v3049, 7
    %v3051 = vsub.s32 4, %v3050
    %v3052 = vrot.slane %v2070, %v3051
    %v3053 = vlaneseq
    %v3054 = vshrl.u32 %v3053, 7
    %v3055 = vsub.s32 5, %v3054
    %v3056 = vrot.slane %v2070, %v3055
    %v3057 = vlaneseq
    %v3058 = vshrl.u32 %v3057, 7
    %v3059 = vsub.s32 6, %v3058
    %v3060 = vrot.slane %v2070, %v3059
    %v3061 = vlaneseq
    %v3062 = vshrl.u32 %v3061, 7
    %v3063 = vsub.s32 7, %v3062
    %v3064 = vrot.slane %v2070, %v3063
    %v3065 = vlaneseq
    %v3066 = vshrl.u32 %v3065, 7
    %v3067 = vsub.s32 0, %v3066
    %v3068 = vrot.slane %v2071, %v3067
    %v3069 = vlaneseq
    %v3070 = vshrl.u32 %v3069, 7
    %v3071 = vsub.s32 1, %v3070
    %v3072 = vrot.slane %v2071, %v3071
    %v3073 = vlaneseq
    %v3074 = vshrl.u32 %v3073, 7
    %v3075 = vsub.s32 2, %v3074
    %v3076 = vrot.slane %v2071, %v3075
    %v3077 = vlaneseq
    %v3078 = vshrl.u32 %v3077, 7
    %v3079 = vsub.s32 3, %v3078
    %v3080 = vrot.slane %v2071, %v3079
    %v3081 = vlaneseq
    %v3082 = vshrl.u32 %v3081, 7
    %v3083 = vsub.s32 4, %v3082
    %v3084 = vrot.slane %v2071, %v3083
    %v3085 = vlaneseq
    %v3086 = vshrl.u32 %v3085, 7
    %v3087 = vsub.s32 5, %v3086
    %v3088 = vrot.slane %v2071, %v3087
    %v3089 = vlaneseq
    %v3090 = vshrl.u32 %v3089, 7
    %v3091 = vsub.s32 6, %v3090
    %v3092 = vrot.slane %v2071, %v3091
    %v3093 = vlaneseq
    %v3094 = vshrl.u32 %v3093, 7
    %v3095 = vsub.s32 7, %v3094
    %v3096 = vrot.slane %v2071, %v3095
    %v3097 = vlaneseq
    %v3098 = vshrl.u32 %v3097, 7
    %v3099 = vsub.s32 0, %v3098
    %v3100 = vrot.slane %v2072, %v3099
    %v3101 = vlaneseq
    %v3102 = vshrl.u32 %v3101, 7
    %v3103 = vsub.s32 1, %v3102
    %v3104 = vrot.slane %v2072, %v3103
    %v3105 = vlaneseq
    %v3106 = vshrl.u32 %v3105, 7
    %v3107 = vsub.s32 2, %v3106
    %v3108 = vrot.slane %v2072, %v3107
    %v3109 = vlaneseq
    %v3110 = vshrl.u32 %v3109, 7
    %v3111 = vsub.s32 3, %v3110
    %v3112 = vrot.slane %v2072, %v3111
    %v3113 = vlaneseq
    %v3114 = vshrl.u32 %v3113, 7
    %v3115 = vsub.s32 4, %v3114
    %v3116 = vrot.slane %v2072, %v3115
    %v3117 = vlaneseq
    %v3118 = vshrl.u32 %v3117, 7
    %v3119 = vsub.s32 5, %v3118
    %v3120 = vrot.slane %v2072, %v3119
    %v3121 = vlaneseq
    %v3122 = vshrl.u32 %v3121, 7
    %v3123 = vsub.s32 6, %v3122
    %v3124 = vrot.slane %v2072, %v3123
    %v3125 = vlaneseq
    %v3126 = vshrl.u32 %v3125, 7
    %v3127 = vsub.s32 7, %v3126
    %v3128 = vrot.slane %v2072, %v3127
    %v3129 = vcombine.low %v2108, %v2112
    %v3130 = vcombine.low %v2116, %v2120
    %v3131 = vcombine.low %v2124, %v2128
    %v3132 = vcombine.low %v2132, %v2136
    %v3134 = vunpack.c.l.s4 1966171168
    %v3135 = vunpack.c.0.s8 %v3134
    %v3136 = vlaneseq
    %v3137 = vshrl.u32 %v3136, 7
    %v3138 = vsub.s32 %v3135, %v3137
    %v3139 = vrot.slane %v3129, %v3138
    %v3141 = vunpack.c.l.s4 1966171168
    %v3142 = vunpack.c.0.s8 %v3141
    %v3143 = vlaneseq
    %v3144 = vshrl.u32 %v3143, 7
    %v3145 = vsub.s32 %v3142, %v3144
    %v3146 = vrot.slane %v3130, %v3145
    %v3148 = vunpack.c.l.s4 1966171168
    %v3149 = vunpack.c.0.s8 %v3148
    %v3150 = vlaneseq
    %v3151 = vshrl.u32 %v3150, 7
    %v3152 = vsub.s32 %v3149, %v3151
    %v3153 = vrot.slane %v3131, %v3152
    %v3155 = vunpack.c.l.s4 1966171168
    %v3156 = vunpack.c.0.s8 %v3155
    %v3157 = vlaneseq
    %v3158 = vshrl.u32 %v3157, 7
    %v3159 = vsub.s32 %v3156, %v3158
    %v3160 = vrot.slane %v3132, %v3159
    %v3161 = vcombine.low %v3139, %v3146
    %v3162 = vcombine.low %v3153, %v3160
    %v3164 = vunpack.c.l.s4 1966171168
    %v3165 = vunpack.c.0.s8 %v3164
    %v3166 = vlaneseq
    %v3167 = vshrl.u32 %v3166, 7
    %v3168 = vsub.s32 %v3165, %v3167
    %v3169 = vrot.slane %v3161, %v3168
    %v3171 = vunpack.c.l.s4 1966171168
    %v3172 = vunpack.c.0.s8 %v3171
    %v3173 = vlaneseq
    %v3174 = vshrl.u32 %v3173, 7
    %v3175 = vsub.s32 %v3172, %v3174
    %v3176 = vrot.slane %v3162, %v3175
    %v3177 = vcombine.low %v3169, %v3176
    %v3178 = vcombine.low %v2140, %v2144
    %v3179 = vcombine.low %v2148, %v2152
    %v3180 = vcombine.low %v2156, %v2160
    %v3181 = vcombine.low %v2164, %v2168
    %v3183 = vunpack.c.l.s4 1966171168
    %v3184 = vunpack.c.0.s8 %v3183
    %v3185 = vlaneseq
    %v3186 = vshrl.u32 %v3185, 7
    %v3187 = vsub.s32 %v3184, %v3186
    %v3188 = vrot.slane %v3178, %v3187
    %v3190 = vunpack.c.l.s4 1966171168
    %v3191 = vunpack.c.0.s8 %v3190
    %v3192 = vlaneseq
    %v3193 = vshrl.u32 %v3192, 7
    %v3194 = vsub.s32 %v3191, %v3193
    %v3195 = vrot.slane %v3179, %v3194
    %v3197 = vunpack.c.l.s4 1966171168
    %v3198 = vunpack.c.0.s8 %v3197
    %v3199 = vlaneseq
    %v3200 = vshrl.u32 %v3199, 7
    %v3201 = vsub.s32 %v3198, %v3200
    %v3202 = vrot.slane %v3180, %v3201
    %v3204 = vunpack.c.l.s4 1966171168
    %v3205 = vunpack.c.0.s8 %v3204
    %v3206 = vlaneseq
    %v3207 = vshrl.u32 %v3206, 7
    %v3208 = vsub.s32 %v3205, %v3207
    %v3209 = vrot.slane %v3181, %v3208
    %v3210 = vcombine.low %v3188, %v3195
    %v3211 = vcombine.low %v3202, %v3209
    %v3213 = vunpack.c.l.s4 1966171168
    %v3214 = vunpack.c.0.s8 %v3213
    %v3215 = vlaneseq
    %v3216 = vshrl.u32 %v3215, 7
    %v3217 = vsub.s32 %v3214, %v3216
    %v3218 = vrot.slane %v3210, %v3217
    %v3220 = vunpack.c.l.s4 1966171168
    %v3221 = vunpack.c.0.s8 %v3220
    %v3222 = vlaneseq
    %v3223 = vshrl.u32 %v3222, 7
    %v3224 = vsub.s32 %v3221, %v3223
    %v3225 = vrot.slane %v3211, %v3224
    %v3226 = vcombine.low %v3218, %v3225
    %v3227 = vcombine.low %v2172, %v2176
    %v3228 = vcombine.low %v2180, %v2184
    %v3229 = vcombine.low %v2188, %v2192
    %v3230 = vcombine.low %v2196, %v2200
    %v3232 = vunpack.c.l.s4 1966171168
    %v3233 = vunpack.c.0.s8 %v3232
    %v3234 = vlaneseq
    %v3235 = vshrl.u32 %v3234, 7
    %v3236 = vsub.s32 %v3233, %v3235
    %v3237 = vrot.slane %v3227, %v3236
    %v3239 = vunpack.c.l.s4 1966171168
    %v3240 = vunpack.c.0.s8 %v3239
    %v3241 = vlaneseq
    %v3242 = vshrl.u32 %v3241, 7
    %v3243 = vsub.s32 %v3240, %v3242
    %v3244 = vrot.slane %v3228, %v3243
    %v3246 = vunpack.c.l.s4 1966171168
    %v3247 = vunpack.c.0.s8 %v3246
    %v3248 = vlaneseq
    %v3249 = vshrl.u32 %v3248, 7
    %v3250 = vsub.s32 %v3247, %v3249
    %v3251 = vrot.slane %v3229, %v3250
    %v3253 = vunpack.c.l.s4 1966171168
    %v3254 = vunpack.c.0.s8 %v3253
    %v3255 = vlaneseq
    %v3256 = vshrl.u32 %v3255, 7
    %v3257 = vsub.s32 %v3254, %v3256
    %v3258 = vrot.slane %v3230, %v3257
    %v3259 = vcombine.low %v3237, %v3244
    %v3260 = vcombine.low %v3251, %v3258
    %v3262 = vunpack.c.l.s4 1966171168
    %v3263 = vunpack.c.0.s8 %v3262
    %v3264 = vlaneseq
    %v3265 = vshrl.u32 %v3264, 7
    %v3266 = vsub.s32 %v3263, %v3265
    %v3267 = vrot.slane %v3259, %v3266
    %v3269 = vunpack.c.l.s4 1966171168
    %v3270 = vunpack.c.0.s8 %v3269
    %v3271 = vlaneseq
    %v3272 = vshrl.u32 %v3271, 7
    %v3273 = vsub.s32 %v3270, %v3272
    %v3274 = vrot.slane %v3260, %v3273
    %v3275 = vcombine.low %v3267, %v3274
    %v3276 = vcombine.low %v2204, %v2208
    %v3277 = vcombine.low %v2212, %v2216
    %v3278 = vcombine.low %v2220, %v2224
    %v3279 = vcombine.low %v2228, %v2232
    %v3281 = vunpack.c.l.s4 1966171168
    %v3282 = vunpack.c.0.s8 %v3281
    %v3283 = vlaneseq
    %v3284 = vshrl.u32 %v3283, 7
    %v3285 = vsub.s32 %v3282, %v3284
    %v3286 = vrot.slane %v3276, %v3285
    %v3288 = vunpack.c.l.s4 1966171168
    %v3289 = vunpack.c.0.s8 %v3288
    %v3290 = vlaneseq
    %v3291 = vshrl.u32 %v3290, 7
    %v3292 = vsub.s32 %v3289, %v3291
    %v3293 = vrot.slane %v3277, %v3292
    %v3295 = vunpack.c.l.s4 1966171168
    %v3296 = vunpack.c.0.s8 %v3295
    %v3297 = vlaneseq
    %v3298 = vshrl.u32 %v3297, 7
    %v3299 = vsub.s32 %v3296, %v3298
    %v3300 = vrot.slane %v3278, %v3299
    %v3302 = vunpack.c.l.s4 1966171168
    %v3303 = vunpack.c.0.s8 %v3302
    %v3304 = vlaneseq
    %v3305 = vshrl.u32 %v3304, 7
    %v3306 = vsub.s32 %v3303, %v3305
    %v3307 = vrot.slane %v3279, %v3306
    %v3308 = vcombine.low %v3286, %v3293
    %v3309 = vcombine.low %v3300, %v3307
    %v3311 = vunpack.c.l.s4 1966171168
    %v3312 = vunpack.c.0.s8 %v3311
    %v3313 = vlaneseq
    %v3314 = vshrl.u32 %v3313, 7
    %v3315 = vsub.s32 %v3312, %v3314
    %v3316 = vrot.slane %v3308, %v3315
    %v3318 = vunpack.c.l.s4 1966171168
    %v3319 = vunpack.c.0.s8 %v3318
    %v3320 = vlaneseq
    %v3321 = vshrl.u32 %v3320, 7
    %v3322 = vsub.s32 %v3319, %v3321
    %v3323 = vrot.slane %v3309, %v3322
    %v3324 = vcombine.low %v3316, %v3323
    %v3325 = vcombine.low %v2236, %v2240
    %v3326 = vcombine.low %v2244, %v2248
    %v3327 = vcombine.low %v2252, %v2256
    %v3328 = vcombine.low %v2260, %v2264
    %v3330 = vunpack.c.l.s4 1966171168
    %v3331 = vunpack.c.0.s8 %v3330
    %v3332 = vlaneseq
    %v3333 = vshrl.u32 %v3332, 7
    %v3334 = vsub.s32 %v3331, %v3333
    %v3335 = vrot.slane %v3325, %v3334
    %v3337 = vunpack.c.l.s4 1966171168
    %v3338 = vunpack.c.0.s8 %v3337
    %v3339 = vlaneseq
    %v3340 = vshrl.u32 %v3339, 7
    %v3341 = vsub.s32 %v3338, %v3340
    %v3342 = vrot.slane %v3326, %v3341
    %v3344 = vunpack.c.l.s4 1966171168
    %v3345 = vunpack.c.0.s8 %v3344
    %v3346 = vlaneseq
    %v3347 = vshrl.u32 %v3346, 7
    %v3348 = vsub.s32 %v3345, %v3347
    %v3349 = vrot.slane %v3327, %v3348
    %v3351 = vunpack.c.l.s4 1966171168
    %v3352 = vunpack.c.0.s8 %v3351
    %v3353 = vlaneseq
    %v3354 = vshrl.u32 %v3353, 7
    %v3355 = vsub.s32 %v3352, %v3354
    %v3356 = vrot.slane %v3328, %v3355
    %v3357 = vcombine.low %v3335, %v3342
    %v3358 = vcombine.low %v3349, %v3356
    %v3360 = vunpack.c.l.s4 1966171168
    %v3361 = vunpack.c.0.s8 %v3360
    %v3362 = vlaneseq
    %v3363 = vshrl.u32 %v3362, 7
    %v3364 = vsub.s32 %v3361, %v3363
    %v3365 = vrot.slane %v3357, %v3364
    %v3367 = vunpack.c.l.s4 1966171168
    %v3368 = vunpack.c.0.s8 %v3367
    %v3369 = vlaneseq
    %v3370 = vshrl.u32 %v3369, 7
    %v3371 = vsub.s32 %v3368, %v3370
    %v3372 = vrot.slane %v3358, %v3371
    %v3373 = vcombine.low %v3365, %v3372
    %v3374 = vcombine.low %v2268, %v2272
    %v3375 = vcombine.low %v2276, %v2280
    %v3376 = vcombine.low %v2284, %v2288
    %v3377 = vcombine.low %v2292, %v2296
    %v3379 = vunpack.c.l.s4 1966171168
    %v3380 = vunpack.c.0.s8 %v3379
    %v3381 = vlaneseq
    %v3382 = vshrl.u32 %v3381, 7
    %v3383 = vsub.s32 %v3380, %v3382
    %v3384 = vrot.slane %v3374, %v3383
    %v3386 = vunpack.c.l.s4 1966171168
    %v3387 = vunpack.c.0.s8 %v3386
    %v3388 = vlaneseq
    %v3389 = vshrl.u32 %v3388, 7
    %v3390 = vsub.s32 %v3387, %v3389
    %v3391 = vrot.slane %v3375, %v3390
    %v3393 = vunpack.c.l.s4 1966171168
    %v3394 = vunpack.c.0.s8 %v3393
    %v3395 = vlaneseq
    %v3396 = vshrl.u32 %v3395, 7
    %v3397 = vsub.s32 %v3394, %v3396
    %v3398 = vrot.slane %v3376, %v3397
    %v3400 = vunpack.c.l.s4 1966171168
    %v3401 = vunpack.c.0.s8 %v3400
    %v3402 = vlaneseq
    %v3403 = vshrl.u32 %v3402, 7
    %v3404 = vsub.s32 %v3401, %v3403
    %v3405 = vrot.slane %v3377, %v3404
    %v3406 = vcombine.low %v3384, %v3391
    %v3407 = vcombine.low %v3398, %v3405
    %v3409 = vunpack.c.l.s4 1966171168
    %v3410 = vunpack.c.0.s8 %v3409
    %v3411 = vlaneseq
    %v3412 = vshrl.u32 %v3411, 7
    %v3413 = vsub.s32 %v3410, %v3412
    %v3414 = vrot.slane %v3406, %v3413
    %v3416 = vunpack.c.l.s4 1966171168
    %v3417 = vunpack.c.0.s8 %v3416
    %v3418 = vlaneseq
    %v3419 = vshrl.u32 %v3418, 7
    %v3420 = vsub.s32 %v3417, %v3419
    %v3421 = vrot.slane %v3407, %v3420
    %v3422 = vcombine.low %v3414, %v3421
    %v3423 = vcombine.low %v2300, %v2304
    %v3424 = vcombine.low %v2308, %v2312
    %v3425 = vcombine.low %v2316, %v2320
    %v3426 = vcombine.low %v2324, %v2328
    %v3428 = vunpack.c.l.s4 1966171168
    %v3429 = vunpack.c.0.s8 %v3428
    %v3430 = vlaneseq
    %v3431 = vshrl.u32 %v3430, 7
    %v3432 = vsub.s32 %v3429, %v3431
    %v3433 = vrot.slane %v3423, %v3432
    %v3435 = vunpack.c.l.s4 1966171168
    %v3436 = vunpack.c.0.s8 %v3435
    %v3437 = vlaneseq
    %v3438 = vshrl.u32 %v3437, 7
    %v3439 = vsub.s32 %v3436, %v3438
    %v3440 = vrot.slane %v3424, %v3439
    %v3442 = vunpack.c.l.s4 1966171168
    %v3443 = vunpack.c.0.s8 %v3442
    %v3444 = vlaneseq
    %v3445 = vshrl.u32 %v3444, 7
    %v3446 = vsub.s32 %v3443, %v3445
    %v3447 = vrot.slane %v3425, %v3446
    %v3449 = vunpack.c.l.s4 1966171168
    %v3450 = vunpack.c.0.s8 %v3449
    %v3451 = vlaneseq
    %v3452 = vshrl.u32 %v3451, 7
    %v3453 = vsub.s32 %v3450, %v3452
    %v3454 = vrot.slane %v3426, %v3453
    %v3455 = vcombine.low %v3433, %v3440
    %v3456 = vcombine.low %v3447, %v3454
    %v3458 = vunpack.c.l.s4 1966171168
    %v3459 = vunpack.c.0.s8 %v3458
    %v3460 = vlaneseq
    %v3461 = vshrl.u32 %v3460, 7
    %v3462 = vsub.s32 %v3459, %v3461
    %v3463 = vrot.slane %v3455, %v3462
    %v3465 = vunpack.c.l.s4 1966171168
    %v3466 = vunpack.c.0.s8 %v3465
    %v3467 = vlaneseq
    %v3468 = vshrl.u32 %v3467, 7
    %v3469 = vsub.s32 %v3466, %v3468
    %v3470 = vrot.slane %v3456, %v3469
    %v3471 = vcombine.low %v3463, %v3470
    %v3472 = vcombine.low %v2332, %v2336
    %v3473 = vcombine.low %v2340, %v2344
    %v3474 = vcombine.low %v2348, %v2352
    %v3475 = vcombine.low %v2356, %v2360
    %v3477 = vunpack.c.l.s4 1966171168
    %v3478 = vunpack.c.0.s8 %v3477
    %v3479 = vlaneseq
    %v3480 = vshrl.u32 %v3479, 7
    %v3481 = vsub.s32 %v3478, %v3480
    %v3482 = vrot.slane %v3472, %v3481
    %v3484 = vunpack.c.l.s4 1966171168
    %v3485 = vunpack.c.0.s8 %v3484
    %v3486 = vlaneseq
    %v3487 = vshrl.u32 %v3486, 7
    %v3488 = vsub.s32 %v3485, %v3487
    %v3489 = vrot.slane %v3473, %v3488
    %v3491 = vunpack.c.l.s4 1966171168
    %v3492 = vunpack.c.0.s8 %v3491
    %v3493 = vlaneseq
    %v3494 = vshrl.u32 %v3493, 7
    %v3495 = vsub.s32 %v3492, %v3494
    %v3496 = vrot.slane %v3474, %v3495
    %v3498 = vunpack.c.l.s4 1966171168
    %v3499 = vunpack.c.0.s8 %v3498
    %v3500 = vlaneseq
    %v3501 = vshrl.u32 %v3500, 7
    %v3502 = vsub.s32 %v3499, %v3501
    %v3503 = vrot.slane %v3475, %v3502
    %v3504 = vcombine.low %v3482, %v3489
    %v3505 = vcombine.low %v3496, %v3503
    %v3507 = vunpack.c.l.s4 1966171168
    %v3508 = vunpack.c.0.s8 %v3507
    %v3509 = vlaneseq
    %v3510 = vshrl.u32 %v3509, 7
    %v3511 = vsub.s32 %v3508, %v3510
    %v3512 = vrot.slane %v3504, %v3511
    %v3514 = vunpack.c.l.s4 1966171168
    %v3515 = vunpack.c.0.s8 %v3514
    %v3516 = vlaneseq
    %v3517 = vshrl.u32 %v3516, 7
    %v3518 = vsub.s32 %v3515, %v3517
    %v3519 = vrot.slane %v3505, %v3518
    %v3520 = vcombine.low %v3512, %v3519
    %v3521 = vcombine.low %v2364, %v2368
    %v3522 = vcombine.low %v2372, %v2376
    %v3523 = vcombine.low %v2380, %v2384
    %v3524 = vcombine.low %v2388, %v2392
    %v3526 = vunpack.c.l.s4 1966171168
    %v3527 = vunpack.c.0.s8 %v3526
    %v3528 = vlaneseq
    %v3529 = vshrl.u32 %v3528, 7
    %v3530 = vsub.s32 %v3527, %v3529
    %v3531 = vrot.slane %v3521, %v3530
    %v3533 = vunpack.c.l.s4 1966171168
    %v3534 = vunpack.c.0.s8 %v3533
    %v3535 = vlaneseq
    %v3536 = vshrl.u32 %v3535, 7
    %v3537 = vsub.s32 %v3534, %v3536
    %v3538 = vrot.slane %v3522, %v3537
    %v3540 = vunpack.c.l.s4 1966171168
    %v3541 = vunpack.c.0.s8 %v3540
    %v3542 = vlaneseq
    %v3543 = vshrl.u32 %v3542, 7
    %v3544 = vsub.s32 %v3541, %v3543
    %v3545 = vrot.slane %v3523, %v3544
    %v3547 = vunpack.c.l.s4 1966171168
    %v3548 = vunpack.c.0.s8 %v3547
    %v3549 = vlaneseq
    %v3550 = vshrl.u32 %v3549, 7
    %v3551 = vsub.s32 %v3548, %v3550
    %v3552 = vrot.slane %v3524, %v3551
    %v3553 = vcombine.low %v3531, %v3538
    %v3554 = vcombine.low %v3545, %v3552
    %v3556 = vunpack.c.l.s4 1966171168
    %v3557 = vunpack.c.0.s8 %v3556
    %v3558 = vlaneseq
    %v3559 = vshrl.u32 %v3558, 7
    %v3560 = vsub.s32 %v3557, %v3559
    %v3561 = vrot.slane %v3553, %v3560
    %v3563 = vunpack.c.l.s4 1966171168
    %v3564 = vunpack.c.0.s8 %v3563
    %v3565 = vlaneseq
    %v3566 = vshrl.u32 %v3565, 7
    %v3567 = vsub.s32 %v3564, %v3566
    %v3568 = vrot.slane %v3554, %v3567
    %v3569 = vcombine.low %v3561, %v3568
    %v3570 = vcombine.low %v2396, %v2400
    %v3571 = vcombine.low %v2404, %v2408
    %v3572 = vcombine.low %v2412, %v2416
    %v3573 = vcombine.low %v2420, %v2424
    %v3575 = vunpack.c.l.s4 1966171168
    %v3576 = vunpack.c.0.s8 %v3575
    %v3577 = vlaneseq
    %v3578 = vshrl.u32 %v3577, 7
    %v3579 = vsub.s32 %v3576, %v3578
    %v3580 = vrot.slane %v3570, %v3579
    %v3582 = vunpack.c.l.s4 1966171168
    %v3583 = vunpack.c.0.s8 %v3582
    %v3584 = vlaneseq
    %v3585 = vshrl.u32 %v3584, 7
    %v3586 = vsub.s32 %v3583, %v3585
    %v3587 = vrot.slane %v3571, %v3586
    %v3589 = vunpack.c.l.s4 1966171168
    %v3590 = vunpack.c.0.s8 %v3589
    %v3591 = vlaneseq
    %v3592 = vshrl.u32 %v3591, 7
    %v3593 = vsub.s32 %v3590, %v3592
    %v3594 = vrot.slane %v3572, %v3593
    %v3596 = vunpack.c.l.s4 1966171168
    %v3597 = vunpack.c.0.s8 %v3596
    %v3598 = vlaneseq
    %v3599 = vshrl.u32 %v3598, 7
    %v3600 = vsub.s32 %v3597, %v3599
    %v3601 = vrot.slane %v3573, %v3600
    %v3602 = vcombine.low %v3580, %v3587
    %v3603 = vcombine.low %v3594, %v3601
    %v3605 = vunpack.c.l.s4 1966171168
    %v3606 = vunpack.c.0.s8 %v3605
    %v3607 = vlaneseq
    %v3608 = vshrl.u32 %v3607, 7
    %v3609 = vsub.s32 %v3606, %v3608
    %v3610 = vrot.slane %v3602, %v3609
    %v3612 = vunpack.c.l.s4 1966171168
    %v3613 = vunpack.c.0.s8 %v3612
    %v3614 = vlaneseq
    %v3615 = vshrl.u32 %v3614, 7
    %v3616 = vsub.s32 %v3613, %v3615
    %v3617 = vrot.slane %v3603, %v3616
    %v3618 = vcombine.low %v3610, %v3617
    %v3619 = vcombine.low %v2428, %v2432
    %v3620 = vcombine.low %v2436, %v2440
    %v3621 = vcombine.low %v2444, %v2448
    %v3622 = vcombine.low %v2452, %v2456
    %v3624 = vunpack.c.l.s4 1966171168
    %v3625 = vunpack.c.0.s8 %v3624
    %v3626 = vlaneseq
    %v3627 = vshrl.u32 %v3626, 7
    %v3628 = vsub.s32 %v3625, %v3627
    %v3629 = vrot.slane %v3619, %v3628
    %v3631 = vunpack.c.l.s4 1966171168
    %v3632 = vunpack.c.0.s8 %v3631
    %v3633 = vlaneseq
    %v3634 = vshrl.u32 %v3633, 7
    %v3635 = vsub.s32 %v3632, %v3634
    %v3636 = vrot.slane %v3620, %v3635
    %v3638 = vunpack.c.l.s4 1966171168
    %v3639 = vunpack.c.0.s8 %v3638
    %v3640 = vlaneseq
    %v3641 = vshrl.u32 %v3640, 7
    %v3642 = vsub.s32 %v3639, %v3641
    %v3643 = vrot.slane %v3621, %v3642
    %v3645 = vunpack.c.l.s4 1966171168
    %v3646 = vunpack.c.0.s8 %v3645
    %v3647 = vlaneseq
    %v3648 = vshrl.u32 %v3647, 7
    %v3649 = vsub.s32 %v3646, %v3648
    %v3650 = vrot.slane %v3622, %v3649
    %v3651 = vcombine.low %v3629, %v3636
    %v3652 = vcombine.low %v3643, %v3650
    %v3654 = vunpack.c.l.s4 1966171168
    %v3655 = vunpack.c.0.s8 %v3654
    %v3656 = vlaneseq
    %v3657 = vshrl.u32 %v3656, 7
    %v3658 = vsub.s32 %v3655, %v3657
    %v3659 = vrot.slane %v3651, %v3658
    %v3661 = vunpack.c.l.s4 1966171168
    %v3662 = vunpack.c.0.s8 %v3661
    %v3663 = vlaneseq
    %v3664 = vshrl.u32 %v3663, 7
    %v3665 = vsub.s32 %v3662, %v3664
    %v3666 = vrot.slane %v3652, %v3665
    %v3667 = vcombine.low %v3659, %v3666
    %v3668 = vcombine.low %v2460, %v2464
    %v3669 = vcombine.low %v2468, %v2472
    %v3670 = vcombine.low %v2476, %v2480
    %v3671 = vcombine.low %v2484, %v2488
    %v3673 = vunpack.c.l.s4 1966171168
    %v3674 = vunpack.c.0.s8 %v3673
    %v3675 = vlaneseq
    %v3676 = vshrl.u32 %v3675, 7
    %v3677 = vsub.s32 %v3674, %v3676
    %v3678 = vrot.slane %v3668, %v3677
    %v3680 = vunpack.c.l.s4 1966171168
    %v3681 = vunpack.c.0.s8 %v3680
    %v3682 = vlaneseq
    %v3683 = vshrl.u32 %v3682, 7
    %v3684 = vsub.s32 %v3681, %v3683
    %v3685 = vrot.slane %v3669, %v3684
    %v3687 = vunpack.c.l.s4 1966171168
    %v3688 = vunpack.c.0.s8 %v3687
    %v3689 = vlaneseq
    %v3690 = vshrl.u32 %v3689, 7
    %v3691 = vsub.s32 %v3688, %v3690
    %v3692 = vrot.slane %v3670, %v3691
    %v3694 = vunpack.c.l.s4 1966171168
    %v3695 = vunpack.c.0.s8 %v3694
    %v3696 = vlaneseq
    %v3697 = vshrl.u32 %v3696, 7
    %v3698 = vsub.s32 %v3695, %v3697
    %v3699 = vrot.slane %v3671, %v3698
    %v3700 = vcombine.low %v3678, %v3685
    %v3701 = vcombine.low %v3692, %v3699
    %v3703 = vunpack.c.l.s4 1966171168
    %v3704 = vunpack.c.0.s8 %v3703
    %v3705 = vlaneseq
    %v3706 = vshrl.u32 %v3705, 7
    %v3707 = vsub.s32 %v3704, %v3706
    %v3708 = vrot.slane %v3700, %v3707
    %v3710 = vunpack.c.l.s4 1966171168
    %v3711 = vunpack.c.0.s8 %v3710
    %v3712 = vlaneseq
    %v3713 = vshrl.u32 %v3712, 7
    %v3714 = vsub.s32 %v3711, %v3713
    %v3715 = vrot.slane %v3701, %v3714
    %v3716 = vcombine.low %v3708, %v3715
    %v3717 = vcombine.low %v2492, %v2496
    %v3718 = vcombine.low %v2500, %v2504
    %v3719 = vcombine.low %v2508, %v2512
    %v3720 = vcombine.low %v2516, %v2520
    %v3722 = vunpack.c.l.s4 1966171168
    %v3723 = vunpack.c.0.s8 %v3722
    %v3724 = vlaneseq
    %v3725 = vshrl.u32 %v3724, 7
    %v3726 = vsub.s32 %v3723, %v3725
    %v3727 = vrot.slane %v3717, %v3726
    %v3729 = vunpack.c.l.s4 1966171168
    %v3730 = vunpack.c.0.s8 %v3729
    %v3731 = vlaneseq
    %v3732 = vshrl.u32 %v3731, 7
    %v3733 = vsub.s32 %v3730, %v3732
    %v3734 = vrot.slane %v3718, %v3733
    %v3736 = vunpack.c.l.s4 1966171168
    %v3737 = vunpack.c.0.s8 %v3736
    %v3738 = vlaneseq
    %v3739 = vshrl.u32 %v3738, 7
    %v3740 = vsub.s32 %v3737, %v3739
    %v3741 = vrot.slane %v3719, %v3740
    %v3743 = vunpack.c.l.s4 1966171168
    %v3744 = vunpack.c.0.s8 %v3743
    %v3745 = vlaneseq
    %v3746 = vshrl.u32 %v3745, 7
    %v3747 = vsub.s32 %v3744, %v3746
    %v3748 = vrot.slane %v3720, %v3747
    %v3749 = vcombine.low %v3727, %v3734
    %v3750 = vcombine.low %v3741, %v3748
    %v3752 = vunpack.c.l.s4 1966171168
    %v3753 = vunpack.c.0.s8 %v3752
    %v3754 = vlaneseq
    %v3755 = vshrl.u32 %v3754, 7
    %v3756 = vsub.s32 %v3753, %v3755
    %v3757 = vrot.slane %v3749, %v3756
    %v3759 = vunpack.c.l.s4 1966171168
    %v3760 = vunpack.c.0.s8 %v3759
    %v3761 = vlaneseq
    %v3762 = vshrl.u32 %v3761, 7
    %v3763 = vsub.s32 %v3760, %v3762
    %v3764 = vrot.slane %v3750, %v3763
    %v3765 = vcombine.low %v3757, %v3764
    %v3766 = vcombine.low %v2524, %v2528
    %v3767 = vcombine.low %v2532, %v2536
    %v3768 = vcombine.low %v2540, %v2544
    %v3769 = vcombine.low %v2548, %v2552
    %v3771 = vunpack.c.l.s4 1966171168
    %v3772 = vunpack.c.0.s8 %v3771
    %v3773 = vlaneseq
    %v3774 = vshrl.u32 %v3773, 7
    %v3775 = vsub.s32 %v3772, %v3774
    %v3776 = vrot.slane %v3766, %v3775
    %v3778 = vunpack.c.l.s4 1966171168
    %v3779 = vunpack.c.0.s8 %v3778
    %v3780 = vlaneseq
    %v3781 = vshrl.u32 %v3780, 7
    %v3782 = vsub.s32 %v3779, %v3781
    %v3783 = vrot.slane %v3767, %v3782
    %v3785 = vunpack.c.l.s4 1966171168
    %v3786 = vunpack.c.0.s8 %v3785
    %v3787 = vlaneseq
    %v3788 = vshrl.u32 %v3787, 7
    %v3789 = vsub.s32 %v3786, %v3788
    %v3790 = vrot.slane %v3768, %v3789
    %v3792 = vunpack.c.l.s4 1966171168
    %v3793 = vunpack.c.0.s8 %v3792
    %v3794 = vlaneseq
    %v3795 = vshrl.u32 %v3794, 7
    %v3796 = vsub.s32 %v3793, %v3795
    %v3797 = vrot.slane %v3769, %v3796
    %v3798 = vcombine.low %v3776, %v3783
    %v3799 = vcombine.low %v3790, %v3797
    %v3801 = vunpack.c.l.s4 1966171168
    %v3802 = vunpack.c.0.s8 %v3801
    %v3803 = vlaneseq
    %v3804 = vshrl.u32 %v3803, 7
    %v3805 = vsub.s32 %v3802, %v3804
    %v3806 = vrot.slane %v3798, %v3805
    %v3808 = vunpack.c.l.s4 1966171168
    %v3809 = vunpack.c.0.s8 %v3808
    %v3810 = vlaneseq
    %v3811 = vshrl.u32 %v3810, 7
    %v3812 = vsub.s32 %v3809, %v3811
    %v3813 = vrot.slane %v3799, %v3812
    %v3814 = vcombine.low %v3806, %v3813
    %v3815 = vcombine.low %v2556, %v2560
    %v3816 = vcombine.low %v2564, %v2568
    %v3817 = vcombine.low %v2572, %v2576
    %v3818 = vcombine.low %v2580, %v2584
    %v3820 = vunpack.c.l.s4 1966171168
    %v3821 = vunpack.c.0.s8 %v3820
    %v3822 = vlaneseq
    %v3823 = vshrl.u32 %v3822, 7
    %v3824 = vsub.s32 %v3821, %v3823
    %v3825 = vrot.slane %v3815, %v3824
    %v3827 = vunpack.c.l.s4 1966171168
    %v3828 = vunpack.c.0.s8 %v3827
    %v3829 = vlaneseq
    %v3830 = vshrl.u32 %v3829, 7
    %v3831 = vsub.s32 %v3828, %v3830
    %v3832 = vrot.slane %v3816, %v3831
    %v3834 = vunpack.c.l.s4 1966171168
    %v3835 = vunpack.c.0.s8 %v3834
    %v3836 = vlaneseq
    %v3837 = vshrl.u32 %v3836, 7
    %v3838 = vsub.s32 %v3835, %v3837
    %v3839 = vrot.slane %v3817, %v3838
    %v3841 = vunpack.c.l.s4 1966171168
    %v3842 = vunpack.c.0.s8 %v3841
    %v3843 = vlaneseq
    %v3844 = vshrl.u32 %v3843, 7
    %v3845 = vsub.s32 %v3842, %v3844
    %v3846 = vrot.slane %v3818, %v3845
    %v3847 = vcombine.low %v3825, %v3832
    %v3848 = vcombine.low %v3839, %v3846
    %v3850 = vunpack.c.l.s4 1966171168
    %v3851 = vunpack.c.0.s8 %v3850
    %v3852 = vlaneseq
    %v3853 = vshrl.u32 %v3852, 7
    %v3854 = vsub.s32 %v3851, %v3853
    %v3855 = vrot.slane %v3847, %v3854
    %v3857 = vunpack.c.l.s4 1966171168
    %v3858 = vunpack.c.0.s8 %v3857
    %v3859 = vlaneseq
    %v3860 = vshrl.u32 %v3859, 7
    %v3861 = vsub.s32 %v3858, %v3860
    %v3862 = vrot.slane %v3848, %v3861
    %v3863 = vcombine.low %v3855, %v3862
    %v3864 = vcombine.low %v2588, %v2592
    %v3865 = vcombine.low %v2596, %v2600
    %v3866 = vcombine.low %v2604, %v2608
    %v3867 = vcombine.low %v2612, %v2616
    %v3869 = vunpack.c.l.s4 1966171168
    %v3870 = vunpack.c.0.s8 %v3869
    %v3871 = vlaneseq
    %v3872 = vshrl.u32 %v3871, 7
    %v3873 = vsub.s32 %v3870, %v3872
    %v3874 = vrot.slane %v3864, %v3873
    %v3876 = vunpack.c.l.s4 1966171168
    %v3877 = vunpack.c.0.s8 %v3876
    %v3878 = vlaneseq
    %v3879 = vshrl.u32 %v3878, 7
    %v3880 = vsub.s32 %v3877, %v3879
    %v3881 = vrot.slane %v3865, %v3880
    %v3883 = vunpack.c.l.s4 1966171168
    %v3884 = vunpack.c.0.s8 %v3883
    %v3885 = vlaneseq
    %v3886 = vshrl.u32 %v3885, 7
    %v3887 = vsub.s32 %v3884, %v3886
    %v3888 = vrot.slane %v3866, %v3887
    %v3890 = vunpack.c.l.s4 1966171168
    %v3891 = vunpack.c.0.s8 %v3890
    %v3892 = vlaneseq
    %v3893 = vshrl.u32 %v3892, 7
    %v3894 = vsub.s32 %v3891, %v3893
    %v3895 = vrot.slane %v3867, %v3894
    %v3896 = vcombine.low %v3874, %v3881
    %v3897 = vcombine.low %v3888, %v3895
    %v3899 = vunpack.c.l.s4 1966171168
    %v3900 = vunpack.c.0.s8 %v3899
    %v3901 = vlaneseq
    %v3902 = vshrl.u32 %v3901, 7
    %v3903 = vsub.s32 %v3900, %v3902
    %v3904 = vrot.slane %v3896, %v3903
    %v3906 = vunpack.c.l.s4 1966171168
    %v3907 = vunpack.c.0.s8 %v3906
    %v3908 = vlaneseq
    %v3909 = vshrl.u32 %v3908, 7
    %v3910 = vsub.s32 %v3907, %v3909
    %v3911 = vrot.slane %v3897, %v3910
    %v3912 = vcombine.low %v3904, %v3911
    %v3913 = vcombine.low %v2620, %v2624
    %v3914 = vcombine.low %v2628, %v2632
    %v3915 = vcombine.low %v2636, %v2640
    %v3916 = vcombine.low %v2644, %v2648
    %v3918 = vunpack.c.l.s4 1966171168
    %v3919 = vunpack.c.0.s8 %v3918
    %v3920 = vlaneseq
    %v3921 = vshrl.u32 %v3920, 7
    %v3922 = vsub.s32 %v3919, %v3921
    %v3923 = vrot.slane %v3913, %v3922
    %v3925 = vunpack.c.l.s4 1966171168
    %v3926 = vunpack.c.0.s8 %v3925
    %v3927 = vlaneseq
    %v3928 = vshrl.u32 %v3927, 7
    %v3929 = vsub.s32 %v3926, %v3928
    %v3930 = vrot.slane %v3914, %v3929
    %v3932 = vunpack.c.l.s4 1966171168
    %v3933 = vunpack.c.0.s8 %v3932
    %v3934 = vlaneseq
    %v3935 = vshrl.u32 %v3934, 7
    %v3936 = vsub.s32 %v3933, %v3935
    %v3937 = vrot.slane %v3915, %v3936
    %v3939 = vunpack.c.l.s4 1966171168
    %v3940 = vunpack.c.0.s8 %v3939
    %v3941 = vlaneseq
    %v3942 = vshrl.u32 %v3941, 7
    %v3943 = vsub.s32 %v3940, %v3942
    %v3944 = vrot.slane %v3916, %v3943
    %v3945 = vcombine.low %v3923, %v3930
    %v3946 = vcombine.low %v3937, %v3944
    %v3948 = vunpack.c.l.s4 1966171168
    %v3949 = vunpack.c.0.s8 %v3948
    %v3950 = vlaneseq
    %v3951 = vshrl.u32 %v3950, 7
    %v3952 = vsub.s32 %v3949, %v3951
    %v3953 = vrot.slane %v3945, %v3952
    %v3955 = vunpack.c.l.s4 1966171168
    %v3956 = vunpack.c.0.s8 %v3955
    %v3957 = vlaneseq
    %v3958 = vshrl.u32 %v3957, 7
    %v3959 = vsub.s32 %v3956, %v3958
    %v3960 = vrot.slane %v3946, %v3959
    %v3961 = vcombine.low %v3953, %v3960
    %v3962 = vcombine.low %v2652, %v2656
    %v3963 = vcombine.low %v2660, %v2664
    %v3964 = vcombine.low %v2668, %v2672
    %v3965 = vcombine.low %v2676, %v2680
    %v3967 = vunpack.c.l.s4 1966171168
    %v3968 = vunpack.c.0.s8 %v3967
    %v3969 = vlaneseq
    %v3970 = vshrl.u32 %v3969, 7
    %v3971 = vsub.s32 %v3968, %v3970
    %v3972 = vrot.slane %v3962, %v3971
    %v3974 = vunpack.c.l.s4 1966171168
    %v3975 = vunpack.c.0.s8 %v3974
    %v3976 = vlaneseq
    %v3977 = vshrl.u32 %v3976, 7
    %v3978 = vsub.s32 %v3975, %v3977
    %v3979 = vrot.slane %v3963, %v3978
    %v3981 = vunpack.c.l.s4 1966171168
    %v3982 = vunpack.c.0.s8 %v3981
    %v3983 = vlaneseq
    %v3984 = vshrl.u32 %v3983, 7
    %v3985 = vsub.s32 %v3982, %v3984
    %v3986 = vrot.slane %v3964, %v3985
    %v3988 = vunpack.c.l.s4 1966171168
    %v3989 = vunpack.c.0.s8 %v3988
    %v3990 = vlaneseq
    %v3991 = vshrl.u32 %v3990, 7
    %v3992 = vsub.s32 %v3989, %v3991
    %v3993 = vrot.slane %v3965, %v3992
    %v3994 = vcombine.low %v3972, %v3979
    %v3995 = vcombine.low %v3986, %v3993
    %v3997 = vunpack.c.l.s4 1966171168
    %v3998 = vunpack.c.0.s8 %v3997
    %v3999 = vlaneseq
    %v4000 = vshrl.u32 %v3999, 7
    %v4001 = vsub.s32 %v3998, %v4000
    %v4002 = vrot.slane %v3994, %v4001
    %v4004 = vunpack.c.l.s4 1966171168
    %v4005 = vunpack.c.0.s8 %v4004
    %v4006 = vlaneseq
    %v4007 = vshrl.u32 %v4006, 7
    %v4008 = vsub.s32 %v4005, %v4007
    %v4009 = vrot.slane %v3995, %v4008
    %v4010 = vcombine.low %v4002, %v4009
    %v4011 = vcombine.low %v2684, %v2688
    %v4012 = vcombine.low %v2692, %v2696
    %v4013 = vcombine.low %v2700, %v2704
    %v4014 = vcombine.low %v2708, %v2712
    %v4016 = vunpack.c.l.s4 1966171168
    %v4017 = vunpack.c.0.s8 %v4016
    %v4018 = vlaneseq
    %v4019 = vshrl.u32 %v4018, 7
    %v4020 = vsub.s32 %v4017, %v4019
    %v4021 = vrot.slane %v4011, %v4020
    %v4023 = vunpack.c.l.s4 1966171168
    %v4024 = vunpack.c.0.s8 %v4023
    %v4025 = vlaneseq
    %v4026 = vshrl.u32 %v4025, 7
    %v4027 = vsub.s32 %v4024, %v4026
    %v4028 = vrot.slane %v4012, %v4027
    %v4030 = vunpack.c.l.s4 1966171168
    %v4031 = vunpack.c.0.s8 %v4030
    %v4032 = vlaneseq
    %v4033 = vshrl.u32 %v4032, 7
    %v4034 = vsub.s32 %v4031, %v4033
    %v4035 = vrot.slane %v4013, %v4034
    %v4037 = vunpack.c.l.s4 1966171168
    %v4038 = vunpack.c.0.s8 %v4037
    %v4039 = vlaneseq
    %v4040 = vshrl.u32 %v4039, 7
    %v4041 = vsub.s32 %v4038, %v4040
    %v4042 = vrot.slane %v4014, %v4041
    %v4043 = vcombine.low %v4021, %v4028
    %v4044 = vcombine.low %v4035, %v4042
    %v4046 = vunpack.c.l.s4 1966171168
    %v4047 = vunpack.c.0.s8 %v4046
    %v4048 = vlaneseq
    %v4049 = vshrl.u32 %v4048, 7
    %v4050 = vsub.s32 %v4047, %v4049
    %v4051 = vrot.slane %v4043, %v4050
    %v4053 = vunpack.c.l.s4 1966171168
    %v4054 = vunpack.c.0.s8 %v4053
    %v4055 = vlaneseq
    %v4056 = vshrl.u32 %v4055, 7
    %v4057 = vsub.s32 %v4054, %v4056
    %v4058 = vrot.slane %v4044, %v4057
    %v4059 = vcombine.low %v4051, %v4058
    %v4060 = vcombine.low %v2716, %v2720
    %v4061 = vcombine.low %v2724, %v2728
    %v4062 = vcombine.low %v2732, %v2736
    %v4063 = vcombine.low %v2740, %v2744
    %v4065 = vunpack.c.l.s4 1966171168
    %v4066 = vunpack.c.0.s8 %v4065
    %v4067 = vlaneseq
    %v4068 = vshrl.u32 %v4067, 7
    %v4069 = vsub.s32 %v4066, %v4068
    %v4070 = vrot.slane %v4060, %v4069
    %v4072 = vunpack.c.l.s4 1966171168
    %v4073 = vunpack.c.0.s8 %v4072
    %v4074 = vlaneseq
    %v4075 = vshrl.u32 %v4074, 7
    %v4076 = vsub.s32 %v4073, %v4075
    %v4077 = vrot.slane %v4061, %v4076
    %v4079 = vunpack.c.l.s4 1966171168
    %v4080 = vunpack.c.0.s8 %v4079
    %v4081 = vlaneseq
    %v4082 = vshrl.u32 %v4081, 7
    %v4083 = vsub.s32 %v4080, %v4082
    %v4084 = vrot.slane %v4062, %v4083
    %v4086 = vunpack.c.l.s4 1966171168
    %v4087 = vunpack.c.0.s8 %v4086
    %v4088 = vlaneseq
    %v4089 = vshrl.u32 %v4088, 7
    %v4090 = vsub.s32 %v4087, %v4089
    %v4091 = vrot.slane %v4063, %v4090
    %v4092 = vcombine.low %v4070, %v4077
    %v4093 = vcombine.low %v4084, %v4091
    %v4095 = vunpack.c.l.s4 1966171168
    %v4096 = vunpack.c.0.s8 %v4095
    %v4097 = vlaneseq
    %v4098 = vshrl.u32 %v4097, 7
    %v4099 = vsub.s32 %v4096, %v4098
    %v4100 = vrot.slane %v4092, %v4099
    %v4102 = vunpack.c.l.s4 1966171168
    %v4103 = vunpack.c.0.s8 %v4102
    %v4104 = vlaneseq
    %v4105 = vshrl.u32 %v4104, 7
    %v4106 = vsub.s32 %v4103, %v4105
    %v4107 = vrot.slane %v4093, %v4106
    %v4108 = vcombine.low %v4100, %v4107
    %v4109 = vcombine.low %v2748, %v2752
    %v4110 = vcombine.low %v2756, %v2760
    %v4111 = vcombine.low %v2764, %v2768
    %v4112 = vcombine.low %v2772, %v2776
    %v4114 = vunpack.c.l.s4 1966171168
    %v4115 = vunpack.c.0.s8 %v4114
    %v4116 = vlaneseq
    %v4117 = vshrl.u32 %v4116, 7
    %v4118 = vsub.s32 %v4115, %v4117
    %v4119 = vrot.slane %v4109, %v4118
    %v4121 = vunpack.c.l.s4 1966171168
    %v4122 = vunpack.c.0.s8 %v4121
    %v4123 = vlaneseq
    %v4124 = vshrl.u32 %v4123, 7
    %v4125 = vsub.s32 %v4122, %v4124
    %v4126 = vrot.slane %v4110, %v4125
    %v4128 = vunpack.c.l.s4 1966171168
    %v4129 = vunpack.c.0.s8 %v4128
    %v4130 = vlaneseq
    %v4131 = vshrl.u32 %v4130, 7
    %v4132 = vsub.s32 %v4129, %v4131
    %v4133 = vrot.slane %v4111, %v4132
    %v4135 = vunpack.c.l.s4 1966171168
    %v4136 = vunpack.c.0.s8 %v4135
    %v4137 = vlaneseq
    %v4138 = vshrl.u32 %v4137, 7
    %v4139 = vsub.s32 %v4136, %v4138
    %v4140 = vrot.slane %v4112, %v4139
    %v4141 = vcombine.low %v4119, %v4126
    %v4142 = vcombine.low %v4133, %v4140
    %v4144 = vunpack.c.l.s4 1966171168
    %v4145 = vunpack.c.0.s8 %v4144
    %v4146 = vlaneseq
    %v4147 = vshrl.u32 %v4146, 7
    %v4148 = vsub.s32 %v4145, %v4147
    %v4149 = vrot.slane %v4141, %v4148
    %v4151 = vunpack.c.l.s4 1966171168
    %v4152 = vunpack.c.0.s8 %v4151
    %v4153 = vlaneseq
    %v4154 = vshrl.u32 %v4153, 7
    %v4155 = vsub.s32 %v4152, %v4154
    %v4156 = vrot.slane %v4142, %v4155
    %v4157 = vcombine.low %v4149, %v4156
    %v4158 = vcombine.low %v2780, %v2784
    %v4159 = vcombine.low %v2788, %v2792
    %v4160 = vcombine.low %v2796, %v2800
    %v4161 = vcombine.low %v2804, %v2808
    %v4163 = vunpack.c.l.s4 1966171168
    %v4164 = vunpack.c.0.s8 %v4163
    %v4165 = vlaneseq
    %v4166 = vshrl.u32 %v4165, 7
    %v4167 = vsub.s32 %v4164, %v4166
    %v4168 = vrot.slane %v4158, %v4167
    %v4170 = vunpack.c.l.s4 1966171168
    %v4171 = vunpack.c.0.s8 %v4170
    %v4172 = vlaneseq
    %v4173 = vshrl.u32 %v4172, 7
    %v4174 = vsub.s32 %v4171, %v4173
    %v4175 = vrot.slane %v4159, %v4174
    %v4177 = vunpack.c.l.s4 1966171168
    %v4178 = vunpack.c.0.s8 %v4177
    %v4179 = vlaneseq
    %v4180 = vshrl.u32 %v4179, 7
    %v4181 = vsub.s32 %v4178, %v4180
    %v4182 = vrot.slane %v4160, %v4181
    %v4184 = vunpack.c.l.s4 1966171168
    %v4185 = vunpack.c.0.s8 %v4184
    %v4186 = vlaneseq
    %v4187 = vshrl.u32 %v4186, 7
    %v4188 = vsub.s32 %v4185, %v4187
    %v4189 = vrot.slane %v4161, %v4188
    %v4190 = vcombine.low %v4168, %v4175
    %v4191 = vcombine.low %v4182, %v4189
    %v4193 = vunpack.c.l.s4 1966171168
    %v4194 = vunpack.c.0.s8 %v4193
    %v4195 = vlaneseq
    %v4196 = vshrl.u32 %v4195, 7
    %v4197 = vsub.s32 %v4194, %v4196
    %v4198 = vrot.slane %v4190, %v4197
    %v4200 = vunpack.c.l.s4 1966171168
    %v4201 = vunpack.c.0.s8 %v4200
    %v4202 = vlaneseq
    %v4203 = vshrl.u32 %v4202, 7
    %v4204 = vsub.s32 %v4201, %v4203
    %v4205 = vrot.slane %v4191, %v4204
    %v4206 = vcombine.low %v4198, %v4205
    %v4207 = vcombine.low %v2812, %v2816
    %v4208 = vcombine.low %v2820, %v2824
    %v4209 = vcombine.low %v2828, %v2832
    %v4210 = vcombine.low %v2836, %v2840
    %v4212 = vunpack.c.l.s4 1966171168
    %v4213 = vunpack.c.0.s8 %v4212
    %v4214 = vlaneseq
    %v4215 = vshrl.u32 %v4214, 7
    %v4216 = vsub.s32 %v4213, %v4215
    %v4217 = vrot.slane %v4207, %v4216
    %v4219 = vunpack.c.l.s4 1966171168
    %v4220 = vunpack.c.0.s8 %v4219
    %v4221 = vlaneseq
    %v4222 = vshrl.u32 %v4221, 7
    %v4223 = vsub.s32 %v4220, %v4222
    %v4224 = vrot.slane %v4208, %v4223
    %v4226 = vunpack.c.l.s4 1966171168
    %v4227 = vunpack.c.0.s8 %v4226
    %v4228 = vlaneseq
    %v4229 = vshrl.u32 %v4228, 7
    %v4230 = vsub.s32 %v4227, %v4229
    %v4231 = vrot.slane %v4209, %v4230
    %v4233 = vunpack.c.l.s4 1966171168
    %v4234 = vunpack.c.0.s8 %v4233
    %v4235 = vlaneseq
    %v4236 = vshrl.u32 %v4235, 7
    %v4237 = vsub.s32 %v4234, %v4236
    %v4238 = vrot.slane %v4210, %v4237
    %v4239 = vcombine.low %v4217, %v4224
    %v4240 = vcombine.low %v4231, %v4238
    %v4242 = vunpack.c.l.s4 1966171168
    %v4243 = vunpack.c.0.s8 %v4242
    %v4244 = vlaneseq
    %v4245 = vshrl.u32 %v4244, 7
    %v4246 = vsub.s32 %v4243, %v4245
    %v4247 = vrot.slane %v4239, %v4246
    %v4249 = vunpack.c.l.s4 1966171168
    %v4250 = vunpack.c.0.s8 %v4249
    %v4251 = vlaneseq
    %v4252 = vshrl.u32 %v4251, 7
    %v4253 = vsub.s32 %v4250, %v4252
    %v4254 = vrot.slane %v4240, %v4253
    %v4255 = vcombine.low %v4247, %v4254
    %v4256 = vcombine.low %v2844, %v2848
    %v4257 = vcombine.low %v2852, %v2856
    %v4258 = vcombine.low %v2860, %v2864
    %v4259 = vcombine.low %v2868, %v2872
    %v4261 = vunpack.c.l.s4 1966171168
    %v4262 = vunpack.c.0.s8 %v4261
    %v4263 = vlaneseq
    %v4264 = vshrl.u32 %v4263, 7
    %v4265 = vsub.s32 %v4262, %v4264
    %v4266 = vrot.slane %v4256, %v4265
    %v4268 = vunpack.c.l.s4 1966171168
    %v4269 = vunpack.c.0.s8 %v4268
    %v4270 = vlaneseq
    %v4271 = vshrl.u32 %v4270, 7
    %v4272 = vsub.s32 %v4269, %v4271
    %v4273 = vrot.slane %v4257, %v4272
    %v4275 = vunpack.c.l.s4 1966171168
    %v4276 = vunpack.c.0.s8 %v4275
    %v4277 = vlaneseq
    %v4278 = vshrl.u32 %v4277, 7
    %v4279 = vsub.s32 %v4276, %v4278
    %v4280 = vrot.slane %v4258, %v4279
    %v4282 = vunpack.c.l.s4 1966171168
    %v4283 = vunpack.c.0.s8 %v4282
    %v4284 = vlaneseq
    %v4285 = vshrl.u32 %v4284, 7
    %v4286 = vsub.s32 %v4283, %v4285
    %v4287 = vrot.slane %v4259, %v4286
    %v4288 = vcombine.low %v4266, %v4273
    %v4289 = vcombine.low %v4280, %v4287
    %v4291 = vunpack.c.l.s4 1966171168
    %v4292 = vunpack.c.0.s8 %v4291
    %v4293 = vlaneseq
    %v4294 = vshrl.u32 %v4293, 7
    %v4295 = vsub.s32 %v4292, %v4294
    %v4296 = vrot.slane %v4288, %v4295
    %v4298 = vunpack.c.l.s4 1966171168
    %v4299 = vunpack.c.0.s8 %v4298
    %v4300 = vlaneseq
    %v4301 = vshrl.u32 %v4300, 7
    %v4302 = vsub.s32 %v4299, %v4301
    %v4303 = vrot.slane %v4289, %v4302
    %v4304 = vcombine.low %v4296, %v4303
    %v4305 = vcombine.low %v2876, %v2880
    %v4306 = vcombine.low %v2884, %v2888
    %v4307 = vcombine.low %v2892, %v2896
    %v4308 = vcombine.low %v2900, %v2904
    %v4310 = vunpack.c.l.s4 1966171168
    %v4311 = vunpack.c.0.s8 %v4310
    %v4312 = vlaneseq
    %v4313 = vshrl.u32 %v4312, 7
    %v4314 = vsub.s32 %v4311, %v4313
    %v4315 = vrot.slane %v4305, %v4314
    %v4317 = vunpack.c.l.s4 1966171168
    %v4318 = vunpack.c.0.s8 %v4317
    %v4319 = vlaneseq
    %v4320 = vshrl.u32 %v4319, 7
    %v4321 = vsub.s32 %v4318, %v4320
    %v4322 = vrot.slane %v4306, %v4321
    %v4324 = vunpack.c.l.s4 1966171168
    %v4325 = vunpack.c.0.s8 %v4324
    %v4326 = vlaneseq
    %v4327 = vshrl.u32 %v4326, 7
    %v4328 = vsub.s32 %v4325, %v4327
    %v4329 = vrot.slane %v4307, %v4328
    %v4331 = vunpack.c.l.s4 1966171168
    %v4332 = vunpack.c.0.s8 %v4331
    %v4333 = vlaneseq
    %v4334 = vshrl.u32 %v4333, 7
    %v4335 = vsub.s32 %v4332, %v4334
    %v4336 = vrot.slane %v4308, %v4335
    %v4337 = vcombine.low %v4315, %v4322
    %v4338 = vcombine.low %v4329, %v4336
    %v4340 = vunpack.c.l.s4 1966171168
    %v4341 = vunpack.c.0.s8 %v4340
    %v4342 = vlaneseq
    %v4343 = vshrl.u32 %v4342, 7
    %v4344 = vsub.s32 %v4341, %v4343
    %v4345 = vrot.slane %v4337, %v4344
    %v4347 = vunpack.c.l.s4 1966171168
    %v4348 = vunpack.c.0.s8 %v4347
    %v4349 = vlaneseq
    %v4350 = vshrl.u32 %v4349, 7
    %v4351 = vsub.s32 %v4348, %v4350
    %v4352 = vrot.slane %v4338, %v4351
    %v4353 = vcombine.low %v4345, %v4352
    %v4354 = vcombine.low %v2908, %v2912
    %v4355 = vcombine.low %v2916, %v2920
    %v4356 = vcombine.low %v2924, %v2928
    %v4357 = vcombine.low %v2932, %v2936
    %v4359 = vunpack.c.l.s4 1966171168
    %v4360 = vunpack.c.0.s8 %v4359
    %v4361 = vlaneseq
    %v4362 = vshrl.u32 %v4361, 7
    %v4363 = vsub.s32 %v4360, %v4362
    %v4364 = vrot.slane %v4354, %v4363
    %v4366 = vunpack.c.l.s4 1966171168
    %v4367 = vunpack.c.0.s8 %v4366
    %v4368 = vlaneseq
    %v4369 = vshrl.u32 %v4368, 7
    %v4370 = vsub.s32 %v4367, %v4369
    %v4371 = vrot.slane %v4355, %v4370
    %v4373 = vunpack.c.l.s4 1966171168
    %v4374 = vunpack.c.0.s8 %v4373
    %v4375 = vlaneseq
    %v4376 = vshrl.u32 %v4375, 7
    %v4377 = vsub.s32 %v4374, %v4376
    %v4378 = vrot.slane %v4356, %v4377
    %v4380 = vunpack.c.l.s4 1966171168
    %v4381 = vunpack.c.0.s8 %v4380
    %v4382 = vlaneseq
    %v4383 = vshrl.u32 %v4382, 7
    %v4384 = vsub.s32 %v4381, %v4383
    %v4385 = vrot.slane %v4357, %v4384
    %v4386 = vcombine.low %v4364, %v4371
    %v4387 = vcombine.low %v4378, %v4385
    %v4389 = vunpack.c.l.s4 1966171168
    %v4390 = vunpack.c.0.s8 %v4389
    %v4391 = vlaneseq
    %v4392 = vshrl.u32 %v4391, 7
    %v4393 = vsub.s32 %v4390, %v4392
    %v4394 = vrot.slane %v4386, %v4393
    %v4396 = vunpack.c.l.s4 1966171168
    %v4397 = vunpack.c.0.s8 %v4396
    %v4398 = vlaneseq
    %v4399 = vshrl.u32 %v4398, 7
    %v4400 = vsub.s32 %v4397, %v4399
    %v4401 = vrot.slane %v4387, %v4400
    %v4402 = vcombine.low %v4394, %v4401
    %v4403 = vcombine.low %v2940, %v2944
    %v4404 = vcombine.low %v2948, %v2952
    %v4405 = vcombine.low %v2956, %v2960
    %v4406 = vcombine.low %v2964, %v2968
    %v4408 = vunpack.c.l.s4 1966171168
    %v4409 = vunpack.c.0.s8 %v4408
    %v4410 = vlaneseq
    %v4411 = vshrl.u32 %v4410, 7
    %v4412 = vsub.s32 %v4409, %v4411
    %v4413 = vrot.slane %v4403, %v4412
    %v4415 = vunpack.c.l.s4 1966171168
    %v4416 = vunpack.c.0.s8 %v4415
    %v4417 = vlaneseq
    %v4418 = vshrl.u32 %v4417, 7
    %v4419 = vsub.s32 %v4416, %v4418
    %v4420 = vrot.slane %v4404, %v4419
    %v4422 = vunpack.c.l.s4 1966171168
    %v4423 = vunpack.c.0.s8 %v4422
    %v4424 = vlaneseq
    %v4425 = vshrl.u32 %v4424, 7
    %v4426 = vsub.s32 %v4423, %v4425
    %v4427 = vrot.slane %v4405, %v4426
    %v4429 = vunpack.c.l.s4 1966171168
    %v4430 = vunpack.c.0.s8 %v4429
    %v4431 = vlaneseq
    %v4432 = vshrl.u32 %v4431, 7
    %v4433 = vsub.s32 %v4430, %v4432
    %v4434 = vrot.slane %v4406, %v4433
    %v4435 = vcombine.low %v4413, %v4420
    %v4436 = vcombine.low %v4427, %v4434
    %v4438 = vunpack.c.l.s4 1966171168
    %v4439 = vunpack.c.0.s8 %v4438
    %v4440 = vlaneseq
    %v4441 = vshrl.u32 %v4440, 7
    %v4442 = vsub.s32 %v4439, %v4441
    %v4443 = vrot.slane %v4435, %v4442
    %v4445 = vunpack.c.l.s4 1966171168
    %v4446 = vunpack.c.0.s8 %v4445
    %v4447 = vlaneseq
    %v4448 = vshrl.u32 %v4447, 7
    %v4449 = vsub.s32 %v4446, %v4448
    %v4450 = vrot.slane %v4436, %v4449
    %v4451 = vcombine.low %v4443, %v4450
    %v4452 = vcombine.low %v2972, %v2976
    %v4453 = vcombine.low %v2980, %v2984
    %v4454 = vcombine.low %v2988, %v2992
    %v4455 = vcombine.low %v2996, %v3000
    %v4457 = vunpack.c.l.s4 1966171168
    %v4458 = vunpack.c.0.s8 %v4457
    %v4459 = vlaneseq
    %v4460 = vshrl.u32 %v4459, 7
    %v4461 = vsub.s32 %v4458, %v4460
    %v4462 = vrot.slane %v4452, %v4461
    %v4464 = vunpack.c.l.s4 1966171168
    %v4465 = vunpack.c.0.s8 %v4464
    %v4466 = vlaneseq
    %v4467 = vshrl.u32 %v4466, 7
    %v4468 = vsub.s32 %v4465, %v4467
    %v4469 = vrot.slane %v4453, %v4468
    %v4471 = vunpack.c.l.s4 1966171168
    %v4472 = vunpack.c.0.s8 %v4471
    %v4473 = vlaneseq
    %v4474 = vshrl.u32 %v4473, 7
    %v4475 = vsub.s32 %v4472, %v4474
    %v4476 = vrot.slane %v4454, %v4475
    %v4478 = vunpack.c.l.s4 1966171168
    %v4479 = vunpack.c.0.s8 %v4478
    %v4480 = vlaneseq
    %v4481 = vshrl.u32 %v4480, 7
    %v4482 = vsub.s32 %v4479, %v4481
    %v4483 = vrot.slane %v4455, %v4482
    %v4484 = vcombine.low %v4462, %v4469
    %v4485 = vcombine.low %v4476, %v4483
    %v4487 = vunpack.c.l.s4 1966171168
    %v4488 = vunpack.c.0.s8 %v4487
    %v4489 = vlaneseq
    %v4490 = vshrl.u32 %v4489, 7
    %v4491 = vsub.s32 %v4488, %v4490
    %v4492 = vrot.slane %v4484, %v4491
    %v4494 = vunpack.c.l.s4 1966171168
    %v4495 = vunpack.c.0.s8 %v4494
    %v4496 = vlaneseq
    %v4497 = vshrl.u32 %v4496, 7
    %v4498 = vsub.s32 %v4495, %v4497
    %v4499 = vrot.slane %v4485, %v4498
    %v4500 = vcombine.low %v4492, %v4499
    %v4501 = vcombine.low %v3004, %v3008
    %v4502 = vcombine.low %v3012, %v3016
    %v4503 = vcombine.low %v3020, %v3024
    %v4504 = vcombine.low %v3028, %v3032
    %v4506 = vunpack.c.l.s4 1966171168
    %v4507 = vunpack.c.0.s8 %v4506
    %v4508 = vlaneseq
    %v4509 = vshrl.u32 %v4508, 7
    %v4510 = vsub.s32 %v4507, %v4509
    %v4511 = vrot.slane %v4501, %v4510
    %v4513 = vunpack.c.l.s4 1966171168
    %v4514 = vunpack.c.0.s8 %v4513
    %v4515 = vlaneseq
    %v4516 = vshrl.u32 %v4515, 7
    %v4517 = vsub.s32 %v4514, %v4516
    %v4518 = vrot.slane %v4502, %v4517
    %v4520 = vunpack.c.l.s4 1966171168
    %v4521 = vunpack.c.0.s8 %v4520
    %v4522 = vlaneseq
    %v4523 = vshrl.u32 %v4522, 7
    %v4524 = vsub.s32 %v4521, %v4523
    %v4525 = vrot.slane %v4503, %v4524
    %v4527 = vunpack.c.l.s4 1966171168
    %v4528 = vunpack.c.0.s8 %v4527
    %v4529 = vlaneseq
    %v4530 = vshrl.u32 %v4529, 7
    %v4531 = vsub.s32 %v4528, %v4530
    %v4532 = vrot.slane %v4504, %v4531
    %v4533 = vcombine.low %v4511, %v4518
    %v4534 = vcombine.low %v4525, %v4532
    %v4536 = vunpack.c.l.s4 1966171168
    %v4537 = vunpack.c.0.s8 %v4536
    %v4538 = vlaneseq
    %v4539 = vshrl.u32 %v4538, 7
    %v4540 = vsub.s32 %v4537, %v4539
    %v4541 = vrot.slane %v4533, %v4540
    %v4543 = vunpack.c.l.s4 1966171168
    %v4544 = vunpack.c.0.s8 %v4543
    %v4545 = vlaneseq
    %v4546 = vshrl.u32 %v4545, 7
    %v4547 = vsub.s32 %v4544, %v4546
    %v4548 = vrot.slane %v4534, %v4547
    %v4549 = vcombine.low %v4541, %v4548
    %v4550 = vcombine.low %v3036, %v3040
    %v4551 = vcombine.low %v3044, %v3048
    %v4552 = vcombine.low %v3052, %v3056
    %v4553 = vcombine.low %v3060, %v3064
    %v4555 = vunpack.c.l.s4 1966171168
    %v4556 = vunpack.c.0.s8 %v4555
    %v4557 = vlaneseq
    %v4558 = vshrl.u32 %v4557, 7
    %v4559 = vsub.s32 %v4556, %v4558
    %v4560 = vrot.slane %v4550, %v4559
    %v4562 = vunpack.c.l.s4 1966171168
    %v4563 = vunpack.c.0.s8 %v4562
    %v4564 = vlaneseq
    %v4565 = vshrl.u32 %v4564, 7
    %v4566 = vsub.s32 %v4563, %v4565
    %v4567 = vrot.slane %v4551, %v4566
    %v4569 = vunpack.c.l.s4 1966171168
    %v4570 = vunpack.c.0.s8 %v4569
    %v4571 = vlaneseq
    %v4572 = vshrl.u32 %v4571, 7
    %v4573 = vsub.s32 %v4570, %v4572
    %v4574 = vrot.slane %v4552, %v4573
    %v4576 = vunpack.c.l.s4 1966171168
    %v4577 = vunpack.c.0.s8 %v4576
    %v4578 = vlaneseq
    %v4579 = vshrl.u32 %v4578, 7
    %v4580 = vsub.s32 %v4577, %v4579
    %v4581 = vrot.slane %v4553, %v4580
    %v4582 = vcombine.low %v4560, %v4567
    %v4583 = vcombine.low %v4574, %v4581
    %v4585 = vunpack.c.l.s4 1966171168
    %v4586 = vunpack.c.0.s8 %v4585
    %v4587 = vlaneseq
    %v4588 = vshrl.u32 %v4587, 7
    %v4589 = vsub.s32 %v4586, %v4588
    %v4590 = vrot.slane %v4582, %v4589
    %v4592 = vunpack.c.l.s4 1966171168
    %v4593 = vunpack.c.0.s8 %v4592
    %v4594 = vlaneseq
    %v4595 = vshrl.u32 %v4594, 7
    %v4596 = vsub.s32 %v4593, %v4595
    %v4597 = vrot.slane %v4583, %v4596
    %v4598 = vcombine.low %v4590, %v4597
    %v4599 = vcombine.low %v3068, %v3072
    %v4600 = vcombine.low %v3076, %v3080
    %v4601 = vcombine.low %v3084, %v3088
    %v4602 = vcombine.low %v3092, %v3096
    %v4604 = vunpack.c.l.s4 1966171168
    %v4605 = vunpack.c.0.s8 %v4604
    %v4606 = vlaneseq
    %v4607 = vshrl.u32 %v4606, 7
    %v4608 = vsub.s32 %v4605, %v4607
    %v4609 = vrot.slane %v4599, %v4608
    %v4611 = vunpack.c.l.s4 1966171168
    %v4612 = vunpack.c.0.s8 %v4611
    %v4613 = vlaneseq
    %v4614 = vshrl.u32 %v4613, 7
    %v4615 = vsub.s32 %v4612, %v4614
    %v4616 = vrot.slane %v4600, %v4615
    %v4618 = vunpack.c.l.s4 1966171168
    %v4619 = vunpack.c.0.s8 %v4618
    %v4620 = vlaneseq
    %v4621 = vshrl.u32 %v4620, 7
    %v4622 = vsub.s32 %v4619, %v4621
    %v4623 = vrot.slane %v4601, %v4622
    %v4625 = vunpack.c.l.s4 1966171168
    %v4626 = vunpack.c.0.s8 %v4625
    %v4627 = vlaneseq
    %v4628 = vshrl.u32 %v4627, 7
    %v4629 = vsub.s32 %v4626, %v4628
    %v4630 = vrot.slane %v4602, %v4629
    %v4631 = vcombine.low %v4609, %v4616
    %v4632 = vcombine.low %v4623, %v4630
    %v4634 = vunpack.c.l.s4 1966171168
    %v4635 = vunpack.c.0.s8 %v4634
    %v4636 = vlaneseq
    %v4637 = vshrl.u32 %v4636, 7
    %v4638 = vsub.s32 %v4635, %v4637
    %v4639 = vrot.slane %v4631, %v4638
    %v4641 = vunpack.c.l.s4 1966171168
    %v4642 = vunpack.c.0.s8 %v4641
    %v4643 = vlaneseq
    %v4644 = vshrl.u32 %v4643, 7
    %v4645 = vsub.s32 %v4642, %v4644
    %v4646 = vrot.slane %v4632, %v4645
    %v4647 = vcombine.low %v4639, %v4646
    %v4648 = vcombine.low %v3100, %v3104
    %v4649 = vcombine.low %v3108, %v3112
    %v4650 = vcombine.low %v3116, %v3120
    %v4651 = vcombine.low %v3124, %v3128
    %v4653 = vunpack.c.l.s4 1966171168
    %v4654 = vunpack.c.0.s8 %v4653
    %v4655 = vlaneseq
    %v4656 = vshrl.u32 %v4655, 7
    %v4657 = vsub.s32 %v4654, %v4656
    %v4658 = vrot.slane %v4648, %v4657
    %v4660 = vunpack.c.l.s4 1966171168
    %v4661 = vunpack.c.0.s8 %v4660
    %v4662 = vlaneseq
    %v4663 = vshrl.u32 %v4662, 7
    %v4664 = vsub.s32 %v4661, %v4663
    %v4665 = vrot.slane %v4649, %v4664
    %v4667 = vunpack.c.l.s4 1966171168
    %v4668 = vunpack.c.0.s8 %v4667
    %v4669 = vlaneseq
    %v4670 = vshrl.u32 %v4669, 7
    %v4671 = vsub.s32 %v4668, %v4670
    %v4672 = vrot.slane %v4650, %v4671
    %v4674 = vunpack.c.l.s4 1966171168
    %v4675 = vunpack.c.0.s8 %v4674
    %v4676 = vlaneseq
    %v4677 = vshrl.u32 %v4676, 7
    %v4678 = vsub.s32 %v4675, %v4677
    %v4679 = vrot.slane %v4651, %v4678
    %v4680 = vcombine.low %v4658, %v4665
    %v4681 = vcombine.low %v4672, %v4679
    %v4683 = vunpack.c.l.s4 1966171168
    %v4684 = vunpack.c.0.s8 %v4683
    %v4685 = vlaneseq
    %v4686 = vshrl.u32 %v4685, 7
    %v4687 = vsub.s32 %v4684, %v4686
    %v4688 = vrot.slane %v4680, %v4687
    %v4690 = vunpack.c.l.s4 1966171168
    %v4691 = vunpack.c.0.s8 %v4690
    %v4692 = vlaneseq
    %v4693 = vshrl.u32 %v4692, 7
    %v4694 = vsub.s32 %v4691, %v4693
    %v4695 = vrot.slane %v4681, %v4694
    %v4696 = vcombine.low %v4688, %v4695
    %4697 = vset.pattern.permute.xlu0 0
    %4698 = vperm.xlu0 %4697, %v3177
    %v4699 = vpop.permute.xlu0 %4698
    %4700 = vset.pattern.permute.xlu0 0
    %4701 = vperm.xlu0 %4700, %v3226
    %v4702 = vpop.permute.xlu0 %4701
    %4703 = vset.pattern.permute.xlu0 0
    %4704 = vperm.xlu0 %4703, %v3275
    %v4705 = vpop.permute.xlu0 %4704
    %4706 = vset.pattern.permute.xlu0 0
    %4707 = vperm.xlu0 %4706, %v3324
    %v4708 = vpop.permute.xlu0 %4707
    %4709 = vset.pattern.permute.xlu0 0
    %4710 = vperm.xlu0 %4709, %v3373
    %v4711 = vpop.permute.xlu0 %4710
    %4712 = vset.pattern.permute.xlu0 0
    %4713 = vperm.xlu0 %4712, %v3422
    %v4714 = vpop.permute.xlu0 %4713
    %4715 = vset.pattern.permute.xlu0 0
    %4716 = vperm.xlu0 %4715, %v3471
    %v4717 = vpop.permute.xlu0 %4716
    %4718 = vset.pattern.permute.xlu0 0
    %4719 = vperm.xlu0 %4718, %v3520
    %v4720 = vpop.permute.xlu0 %4719
    %4721 = vset.pattern.permute.xlu0 0
    %4722 = vperm.xlu0 %4721, %v3569
    %v4723 = vpop.permute.xlu0 %4722
    %4724 = vset.pattern.permute.xlu0 0
    %4725 = vperm.xlu0 %4724, %v3618
    %v4726 = vpop.permute.xlu0 %4725
    %4727 = vset.pattern.permute.xlu0 0
    %4728 = vperm.xlu0 %4727, %v3667
    %v4729 = vpop.permute.xlu0 %4728
    %4730 = vset.pattern.permute.xlu0 0
    %4731 = vperm.xlu0 %4730, %v3716
    %v4732 = vpop.permute.xlu0 %4731
    %4733 = vset.pattern.permute.xlu0 0
    %4734 = vperm.xlu0 %4733, %v3765
    %v4735 = vpop.permute.xlu0 %4734
    %4736 = vset.pattern.permute.xlu0 0
    %4737 = vperm.xlu0 %4736, %v3814
    %v4738 = vpop.permute.xlu0 %4737
    %4739 = vset.pattern.permute.xlu0 0
    %4740 = vperm.xlu0 %4739, %v3863
    %v4741 = vpop.permute.xlu0 %4740
    %4742 = vset.pattern.permute.xlu0 0
    %4743 = vperm.xlu0 %4742, %v3912
    %v4744 = vpop.permute.xlu0 %4743
    %4745 = vset.pattern.permute.xlu0 0
    %4746 = vperm.xlu0 %4745, %v3961
    %v4747 = vpop.permute.xlu0 %4746
    %4748 = vset.pattern.permute.xlu0 0
    %4749 = vperm.xlu0 %4748, %v4010
    %v4750 = vpop.permute.xlu0 %4749
    %4751 = vset.pattern.permute.xlu0 0
    %4752 = vperm.xlu0 %4751, %v4059
    %v4753 = vpop.permute.xlu0 %4752
    %4754 = vset.pattern.permute.xlu0 0
    %4755 = vperm.xlu0 %4754, %v4108
    %v4756 = vpop.permute.xlu0 %4755
    %4757 = vset.pattern.permute.xlu0 0
    %4758 = vperm.xlu0 %4757, %v4157
    %v4759 = vpop.permute.xlu0 %4758
    %4760 = vset.pattern.permute.xlu0 0
    %4761 = vperm.xlu0 %4760, %v4206
    %v4762 = vpop.permute.xlu0 %4761
    %4763 = vset.pattern.permute.xlu0 0
    %4764 = vperm.xlu0 %4763, %v4255
    %v4765 = vpop.permute.xlu0 %4764
    %4766 = vset.pattern.permute.xlu0 0
    %4767 = vperm.xlu0 %4766, %v4304
    %v4768 = vpop.permute.xlu0 %4767
    %4769 = vset.pattern.permute.xlu0 0
    %4770 = vperm.xlu0 %4769, %v4353
    %v4771 = vpop.permute.xlu0 %4770
    %4772 = vset.pattern.permute.xlu0 0
    %4773 = vperm.xlu0 %4772, %v4402
    %v4774 = vpop.permute.xlu0 %4773
    %4775 = vset.pattern.permute.xlu0 0
    %4776 = vperm.xlu0 %4775, %v4451
    %v4777 = vpop.permute.xlu0 %4776
    %4778 = vset.pattern.permute.xlu0 0
    %4779 = vperm.xlu0 %4778, %v4500
    %v4780 = vpop.permute.xlu0 %4779
    %4781 = vset.pattern.permute.xlu0 0
    %4782 = vperm.xlu0 %4781, %v4549
    %v4783 = vpop.permute.xlu0 %4782
    %4784 = vset.pattern.permute.xlu0 0
    %4785 = vperm.xlu0 %4784, %v4598
    %v4786 = vpop.permute.xlu0 %4785
    %4787 = vset.pattern.permute.xlu0 0
    %4788 = vperm.xlu0 %4787, %v4647
    %v4789 = vpop.permute.xlu0 %4788
    %4790 = vset.pattern.permute.xlu0 0
    %4791 = vperm.xlu0 %4790, %v4696
    %v4792 = vpop.permute.xlu0 %4791
    %v4793 = vlaneseq
    %v4794 = vand.u32 %v4793, 127
    %v4795 = vlaneseq
    %v4796 = vshrl.u32 %v4795, 7
    %v4797 = vsub.s32 %v4794, %v4796
    %v4798 = vrot.slane %v4699, %v4797
    %v4799 = vadd.s32 %v4794, 4294967288
    %v4800 = vlaneseq
    %v4801 = vshrl.u32 %v4800, 7
    %v4802 = vsub.s32 %v4799, %v4801
    %v4803 = vrot.slane %v4702, %v4802
    %vm4804 = vcmask 130112
    %v4805 = vsel %vm4804, %v4803, %v4798
    %v4806 = vadd.s32 %v4794, 4294967280
    %v4807 = vlaneseq
    %v4808 = vshrl.u32 %v4807, 7
    %v4809 = vsub.s32 %v4806, %v4808
    %v4810 = vrot.slane %v4705, %v4809
    %vm4811 = vcmask 195712
    %v4812 = vsel %vm4811, %v4810, %v4805
    %v4813 = vadd.s32 %v4794, 4294967272
    %v4814 = vlaneseq
    %v4815 = vshrl.u32 %v4814, 7
    %v4816 = vsub.s32 %v4813, %v4815
    %v4817 = vrot.slane %v4708, %v4816
    %vm4818 = vcmask 261312
    %v4819 = vsel %vm4818, %v4817, %v4812
    %v4820 = vadd.s32 %v4794, 4294967264
    %v4821 = vlaneseq
    %v4822 = vshrl.u32 %v4821, 7
    %v4823 = vsub.s32 %v4820, %v4822
    %v4824 = vrot.slane %v4711, %v4823
    %vm4825 = vcmask 326912
    %v4826 = vsel %vm4825, %v4824, %v4819
    %v4827 = vadd.s32 %v4794, 4294967256
    %v4828 = vlaneseq
    %v4829 = vshrl.u32 %v4828, 7
    %v4830 = vsub.s32 %v4827, %v4829
    %v4831 = vrot.slane %v4714, %v4830
    %vm4832 = vcmask 392512
    %v4833 = vsel %vm4832, %v4831, %v4826
    %v4834 = vadd.s32 %v4794, 4294967248
    %v4835 = vlaneseq
    %v4836 = vshrl.u32 %v4835, 7
    %v4837 = vsub.s32 %v4834, %v4836
    %v4838 = vrot.slane %v4717, %v4837
    %vm4839 = vcmask 458112
    %v4840 = vsel %vm4839, %v4838, %v4833
    %v4841 = vadd.s32 %v4794, 4294967240
    %v4842 = vlaneseq
    %v4843 = vshrl.u32 %v4842, 7
    %v4844 = vsub.s32 %v4841, %v4843
    %v4845 = vrot.slane %v4720, %v4844
    %vm4846 = vcmask 523712
    %v4847 = vsel %vm4846, %v4845, %v4840
    %v4848 = vadd.s32 %v4794, 4294967232
    %v4849 = vlaneseq
    %v4850 = vshrl.u32 %v4849, 7
    %v4851 = vsub.s32 %v4848, %v4850
    %v4852 = vrot.slane %v4723, %v4851
    %vm4853 = vcmask 589312
    %v4854 = vsel %vm4853, %v4852, %v4847
    %v4855 = vadd.s32 %v4794, 4294967224
    %v4856 = vlaneseq
    %v4857 = vshrl.u32 %v4856, 7
    %v4858 = vsub.s32 %v4855, %v4857
    %v4859 = vrot.slane %v4726, %v4858
    %vm4860 = vcmask 654912
    %v4861 = vsel %vm4860, %v4859, %v4854
    %v4862 = vadd.s32 %v4794, 4294967216
    %v4863 = vlaneseq
    %v4864 = vshrl.u32 %v4863, 7
    %v4865 = vsub.s32 %v4862, %v4864
    %v4866 = vrot.slane %v4729, %v4865
    %vm4867 = vcmask 720512
    %v4868 = vsel %vm4867, %v4866, %v4861
    %v4869 = vadd.s32 %v4794, 4294967208
    %v4870 = vlaneseq
    %v4871 = vshrl.u32 %v4870, 7
    %v4872 = vsub.s32 %v4869, %v4871
    %v4873 = vrot.slane %v4732, %v4872
    %vm4874 = vcmask 786112
    %v4875 = vsel %vm4874, %v4873, %v4868
    %v4876 = vadd.s32 %v4794, 4294967200
    %v4877 = vlaneseq
    %v4878 = vshrl.u32 %v4877, 7
    %v4879 = vsub.s32 %v4876, %v4878
    %v4880 = vrot.slane %v4735, %v4879
    %vm4881 = vcmask 851712
    %v4882 = vsel %vm4881, %v4880, %v4875
    %v4883 = vadd.s32 %v4794, 4294967192
    %v4884 = vlaneseq
    %v4885 = vshrl.u32 %v4884, 7
    %v4886 = vsub.s32 %v4883, %v4885
    %v4887 = vrot.slane %v4738, %v4886
    %vm4888 = vcmask 917312
    %v4889 = vsel %vm4888, %v4887, %v4882
    %v4890 = vadd.s32 %v4794, 4294967184
    %v4891 = vlaneseq
    %v4892 = vshrl.u32 %v4891, 7
    %v4893 = vsub.s32 %v4890, %v4892
    %v4894 = vrot.slane %v4741, %v4893
    %vm4895 = vcmask 982912
    %v4896 = vsel %vm4895, %v4894, %v4889
    %v4897 = vadd.s32 %v4794, 4294967176
    %v4898 = vlaneseq
    %v4899 = vshrl.u32 %v4898, 7
    %v4900 = vsub.s32 %v4897, %v4899
    %v4901 = vrot.slane %v4744, %v4900
    %vm4902 = vcmask 1048512
    %v4903 = vsel %vm4902, %v4901, %v4896
    %v4904 = vlaneseq
    %v4905 = vshrl.u32 %v4904, 7
    %v4906 = vsub.s32 %v4794, %v4905
    %v4907 = vrot.slane %v4747, %v4906
    %v4908 = vlaneseq
    %v4909 = vshrl.u32 %v4908, 7
    %v4910 = vsub.s32 %v4799, %v4909
    %v4911 = vrot.slane %v4750, %v4910
    %v4912 = vsel %vm4804, %v4911, %v4907
    %v4913 = vlaneseq
    %v4914 = vshrl.u32 %v4913, 7
    %v4915 = vsub.s32 %v4806, %v4914
    %v4916 = vrot.slane %v4753, %v4915
    %v4917 = vsel %vm4811, %v4916, %v4912
    %v4918 = vlaneseq
    %v4919 = vshrl.u32 %v4918, 7
    %v4920 = vsub.s32 %v4813, %v4919
    %v4921 = vrot.slane %v4756, %v4920
    %v4922 = vsel %vm4818, %v4921, %v4917
    %v4923 = vlaneseq
    %v4924 = vshrl.u32 %v4923, 7
    %v4925 = vsub.s32 %v4820, %v4924
    %v4926 = vrot.slane %v4759, %v4925
    %v4927 = vsel %vm4825, %v4926, %v4922
    %v4928 = vlaneseq
    %v4929 = vshrl.u32 %v4928, 7
    %v4930 = vsub.s32 %v4827, %v4929
    %v4931 = vrot.slane %v4762, %v4930
    %v4932 = vsel %vm4832, %v4931, %v4927
    %v4933 = vlaneseq
    %v4934 = vshrl.u32 %v4933, 7
    %v4935 = vsub.s32 %v4834, %v4934
    %v4936 = vrot.slane %v4765, %v4935
    %v4937 = vsel %vm4839, %v4936, %v4932
    %v4938 = vlaneseq
    %v4939 = vshrl.u32 %v4938, 7
    %v4940 = vsub.s32 %v4841, %v4939
    %v4941 = vrot.slane %v4768, %v4940
    %v4942 = vsel %vm4846, %v4941, %v4937
    %v4943 = vlaneseq
    %v4944 = vshrl.u32 %v4943, 7
    %v4945 = vsub.s32 %v4848, %v4944
    %v4946 = vrot.slane %v4771, %v4945
    %v4947 = vsel %vm4853, %v4946, %v4942
    %v4948 = vlaneseq
    %v4949 = vshrl.u32 %v4948, 7
    %v4950 = vsub.s32 %v4855, %v4949
    %v4951 = vrot.slane %v4774, %v4950
    %v4952 = vsel %vm4860, %v4951, %v4947
    %v4953 = vlaneseq
    %v4954 = vshrl.u32 %v4953, 7
    %v4955 = vsub.s32 %v4862, %v4954
    %v4956 = vrot.slane %v4777, %v4955
    %v4957 = vsel %vm4867, %v4956, %v4952
    %v4958 = vlaneseq
    %v4959 = vshrl.u32 %v4958, 7
    %v4960 = vsub.s32 %v4869, %v4959
    %v4961 = vrot.slane %v4780, %v4960
    %v4962 = vsel %vm4874, %v4961, %v4957
    %v4963 = vlaneseq
    %v4964 = vshrl.u32 %v4963, 7
    %v4965 = vsub.s32 %v4876, %v4964
    %v4966 = vrot.slane %v4783, %v4965
    %v4967 = vsel %vm4881, %v4966, %v4962
    %v4968 = vlaneseq
    %v4969 = vshrl.u32 %v4968, 7
    %v4970 = vsub.s32 %v4883, %v4969
    %v4971 = vrot.slane %v4786, %v4970
    %v4972 = vsel %vm4888, %v4971, %v4967
    %v4973 = vlaneseq
    %v4974 = vshrl.u32 %v4973, 7
    %v4975 = vsub.s32 %v4890, %v4974
    %v4976 = vrot.slane %v4789, %v4975
    %v4977 = vsel %vm4895, %v4976, %v4972
    %v4978 = vlaneseq
    %v4979 = vshrl.u32 %v4978, 7
    %v4980 = vsub.s32 %v4897, %v4979
    %v4981 = vrot.slane %v4792, %v4980
    %v4982 = vsel %vm4902, %v4981, %v4977
    %v4983 = vcombine.low %v4903, %v4982
    %v4985 = vunpack.c.l.s4 1966171168
    %v4986 = vunpack.c.0.s8 %v4985
    %v4987 = vlaneseq
    %v4988 = vshrl.u32 %v4987, 7
    %v4989 = vsub.s32 %v4986, %v4988
    %v4990 = vrot.slane %v4983, %v4989
    %v4992 = vunpack.c.l.s4 1966171168
    %v4993 = vunpack.c.0.s8 %v4992
    %v4994 = vlaneseq
    %v4995 = vshrl.u32 %v4994, 7
    %v4996 = vsub.s32 %v4993, %v4995
    %v4997 = vrot.slane %v4990, %v4996
    %v4999 = vlaneseq
    %vm5000 = vcmp.ge.s32.totalorder %v4999, 0
    %vm5001 = vcmp.lt.s32.totalorder %v4999, 256
    %vm5002 = vmand %vm5000, %vm5001
    %5003 = vst.msk [vmem:[#allocation6] sm:$0x3] %vm5002, %v4997
    // Predicated region
    $region34: #{tpu_custom_call.1} parent=1 // pred_check
      _
    $region35: #{tpu_custom_call.1} parent=1 // pred_check_branch
      %5005 = sbr.rel (0) target = $region37
    $region36: #{tpu_custom_call.1} parent=1 // pred_region
      %s5007 = ssub.s32 32, 32
      %5008 = vsyncadd [#allocation5], %s5007
      %s5010 = sshll.u32 [#allocation6], 4
      %s5011 = int_to_ptr.vmem [resolvable:$true] %s5010
      %5013 = dma.vmem_to_hbm [thread:$0]  %s5011, 32, %s7, [#allocation5]
    $region37: #{tpu_custom_call.1} parent=1 // pred_fallthru
      _
    // Predicated region
    $region38: #{tpu_custom_call.1} parent=1 // pred_check
      _
    $region39: #{tpu_custom_call.1} parent=1 // pred_check_branch
      %5015 = sbr.rel (0) target = $region41
    $region40: #{tpu_custom_call.1} parent=1 // pred_region
      %5016 = dma.done [#allocation5], 32
    $region41: #{tpu_custom_call.1} parent=1 // pred_fallthru
      _
    %5017 = vsyncpa [#allocation4], 1
    %5018 = vsyncpa [#allocation5], 1

</llo_original>
